<compile_context>
chip_gen: v7x
topology: tpu7x:2x2x1
jax: 0.10.0
libtpu: 0.0.40
codegen_flags: <defaults>
</compile_context>

<pallas_src>
import functools

import jax
import jax.numpy as jnp
from jax.experimental import pallas as pl
from jax.experimental.pallas import tpu as pltpu


def _attention_kernel(x_ref, wq_ref, wk_ref, wv_ref, bq_ref, bk_ref, bv_ref,
                      wproj_ref, bproj_ref, o_ref,
                      q_sc, k_sc, v_sc, wa2_sc,
                      *, n_heads, head_dim, tq, n_valid, n_pad, scale, exp_dtype):
    """One grid step = (batch sample b, query tile qi).

    x_ref        : (N_pad, D)      full sample (batch dim squeezed), compute dtype
    wq/wk/wv     : (D, D)          projection weight column blocks, compute dtype
    bq/bk/bv     : (1, D)          f32 biases
    wproj_ref    : (D, D)          output projection, compute dtype
    bproj_ref    : (1, D)          f32
    o_ref        : (TQ, D)         output tile (original dtype)
    q/k/v_sc     : (H, N_pad, Hd)  per-sample Q (pre-scaled) / K / V cache
    wa2_sc       : (TQ, D)         head-merged attention output (f32)
    """
    qi = pl.program_id(1)
    cdt = k_sc.dtype                     # MXU operand dtype (bf16 by default)

    # ---- once per sample: full-width, full-depth QKV projection, then split
    #      heads into (H, N_pad, Hd) scratch (copies only, no shallow matmuls).
    @pl.when(qi == 0)
    def _():
        x_all = x_ref[...]                                        # (N_pad, D)

        def project_and_split(w_ref, b_ref, sc, mul=None):
            y = jnp.dot(x_all, w_ref[...],
                        preferred_element_type=jnp.float32) + b_ref[...]
            if mul is not None:
                y = y * mul
            for h in range(n_heads):                              # head split: copies only
                sc[h] = y[:, h * head_dim:(h + 1) * head_dim].astype(cdt)

        project_and_split(wq_ref, bq_ref, q_sc, mul=scale)        # softmax scale folded in
        project_and_split(wk_ref, bk_ref, k_sc)
        project_and_split(wv_ref, bv_ref, v_sc)

    # ---- per query tile: batched-head attention core ----
    q_start = pl.multiple_of(qi * tq, tq)
    q = q_sc[:, pl.ds(q_start, tq), :]                            # (H, TQ, Hd), pre-scaled

    s = jnp.einsum('hqd,hkd->hqk', q, k_sc[...],
                   preferred_element_type=jnp.float32)            # (H, TQ, N_pad) f32
    if n_valid != n_pad:                                          # mask padded keys
        key_ids = jax.lax.broadcasted_iota(jnp.int32, (1, 1, n_pad), 2)
        s = jnp.where(key_ids < n_valid, s, -1e30)

    s = s - jnp.max(s, axis=-1, keepdims=True)                    # stable softmax
    p = jnp.exp(s.astype(exp_dtype))                              # bf16 EUP on v6e/v7x
    l = jnp.sum(p.astype(jnp.float32), axis=-1, keepdims=True)    # f32 denominator

    # Unnormalized P@V, then normalize the (H,TQ,Hd) result instead of the
    # (H,TQ,N) probabilities (~N/Hd fewer VPU multiplies, one big temp fewer).
    wa = jnp.einsum('hqk,hkd->hqd', p.astype(cdt), v_sc[...],
                    preferred_element_type=jnp.float32)           # (H, TQ, Hd) f32
    wa = wa * pl.reciprocal(l, approx=True)

    # ---- output projection as one full-depth (TQ, D) @ (D, D) matmul ----
    for h in range(n_heads):                                      # head merge: copies only
        wa2_sc[:, h * head_dim:(h + 1) * head_dim] = wa[h]
    out = jnp.dot(wa2_sc[...].astype(cdt), wproj_ref[...],
                  preferred_element_type=jnp.float32)             # (TQ, D) f32
    o_ref[...] = (out + bproj_ref[...]).astype(o_ref.dtype)


def _tpu_defaults():
    """(q_tile, vmem_limit_bytes) tuned per TPU generation."""
    try:
        vmem_cap = pltpu.get_tpu_info().vmem_capacity_bytes
    except Exception:
        vmem_cap = 64 * 1024 * 1024
    if vmem_cap >= 100 * 1024 * 1024:            # v5e / v6e: 128 MiB physical VMEM
        return 256, 64 * 1024 * 1024
    return 128, 40 * 1024 * 1024                 # v7x: 64 MiB physical VMEM


def _default_exp_dtype(compute_dtype):
    """bf16 exp on chips with a bf16 EUP (v6e/v7x); f32 elsewhere."""
    if compute_dtype != jnp.bfloat16:
        return jnp.float32
    try:
        kind = jax.devices()[0].device_kind.lower()
    except Exception:
        kind = ""
    if any(v in kind for v in ("v2", "v3", "v4", "v5")):
        return jnp.float32
    return jnp.bfloat16


def attention(x, w_qkv, b_qkv, w_proj, b_proj, *, n_heads,
              compute_dtype=jnp.bfloat16, q_tile=None, exp_dtype=None,
              vmem_limit_bytes=None):
    """x: (B, N, D); w_qkv: (D, 3D); b_qkv: (1, 3D); w_proj: (D, D); b_proj: (1, D).

    Per-head softmax((x Wq + bq)(x Wk + bk)^T * scale)(x Wv + bv), heads
    concatenated, then Wproj + bproj.  attn_p = proj_p = 0.0 -> dropouts are
    identities.
    """
    B, N, D = x.shape
    assert D % n_heads == 0
    hd = D // n_heads
    scale = hd ** (-0.5)

    cdt = compute_dtype
    if exp_dtype is None:
        exp_dtype = _default_exp_dtype(cdt)

    dq_tile, d_vmem = _tpu_defaults()
    if q_tile is None:
        q_tile = dq_tile
    if vmem_limit_bytes is None:
        vmem_limit_bytes = d_vmem

    # Pad the token axis to a lane-friendly multiple of 128 (padded keys are
    # masked inside the kernel; padded query rows are sliced off below).
    n_pad = pl.cdiv(N, 128) * 128
    tq = q_tile if (n_pad % q_tile == 0) else 128
    nq = n_pad // tq

    x_p = x if n_pad == N else jnp.pad(x, ((0, 0), (0, n_pad - N), (0, 0)))
    x_c = x_p.astype(cdt)

    # HBM-side layout plumbing (cheap, done once): the fused qkv columns are
    # ordered [3, H, Hd] exactly as the PyTorch reshape interprets them, so the
    # q/k/v column blocks are plain slices.
    f32 = jnp.float32
    wq = w_qkv[:, 0 * D:1 * D].astype(cdt)
    wk = w_qkv[:, 1 * D:2 * D].astype(cdt)
    wv = w_qkv[:, 2 * D:3 * D].astype(cdt)
    bq = b_qkv[:, 0 * D:1 * D].astype(f32)
    bk = b_qkv[:, 1 * D:2 * D].astype(f32)
    bv = b_qkv[:, 2 * D:3 * D].astype(f32)
    wp = w_proj.astype(cdt)
    bp = b_proj.reshape(1, D).astype(f32)

    kernel = functools.partial(
        _attention_kernel, n_heads=n_heads, head_dim=hd, tq=tq,
        n_valid=N, n_pad=n_pad, scale=scale, exp_dtype=exp_dtype)

    w2 = lambda b, qi: (0, 0)          # resident weight / bias blocks
    # TODO(synk): on v7x, pipeline_mode=pl.Buffered(1) on these constant-index
    # weight specs would single-buffer them and free ~half their VMEM.

    out = pl.pallas_call(
        kernel,
        out_shape=jax.ShapeDtypeStruct((B, n_pad, D), x.dtype),
        grid_spec=pltpu.PrefetchScalarGridSpec(
            num_scalar_prefetch=0,
            grid=(B, nq),
            in_specs=[
                pl.BlockSpec((None, n_pad, D), lambda b, qi: (b, 0, 0)),  # x (one sample)
                pl.BlockSpec((D, D), w2),                                 # Wq
                pl.BlockSpec((D, D), w2),                                 # Wk
                pl.BlockSpec((D, D), w2),                                 # Wv
                pl.BlockSpec((1, D), w2),                                 # bq
                pl.BlockSpec((1, D), w2),                                 # bk
                pl.BlockSpec((1, D), w2),                                 # bv
                pl.BlockSpec((D, D), w2),                                 # Wproj
                pl.BlockSpec((1, D), w2),                                 # bproj
            ],
            out_specs=pl.BlockSpec((None, tq, D), lambda b, qi: (b, qi, 0)),
            scratch_shapes=[
                pltpu.VMEM((n_heads, n_pad, hd), cdt),     # Q cache (pre-scaled)
                pltpu.VMEM((n_heads, n_pad, hd), cdt),     # K cache
                pltpu.VMEM((n_heads, n_pad, hd), cdt),     # V cache
                pltpu.VMEM((tq, D), jnp.float32),          # head-merged attn output
            ],
        ),
        compiler_params=pltpu.CompilerParams(
            # batch axis -> megacore; the query-tile axis carries the per-sample
            # Q/K/V scratch, so it must stay "arbitrary".
            # TODO(synk): on v7x (2 TCs) hoist the QKV projection out of the
            # qi-carried state so both grid axes can be "parallel".
            dimension_semantics=("parallel", "arbitrary"),
            vmem_limit_bytes=vmem_limit_bytes,
        ),
    )(x_c, wq, wk, wv, bq, bk, bv, wp, bp)

    return out[:, :N, :] if n_pad != N else out


def attention_ref(x, w_qkv, b_qkv, w_proj, b_proj, *, n_heads):
    """Pure-JAX reference (mirrors the PyTorch forward exactly)."""
    B, N, D = x.shape
    hd = D // n_heads
    scale = hd ** (-0.5)
    qkv = x @ w_qkv + b_qkv                                  # (B, N, 3D)
    qkv = qkv.reshape(B, N, 3, n_heads, hd).transpose(2, 0, 3, 1, 4)
    q, k, v = qkv[0], qkv[1], qkv[2]                         # (B, H, N, hd)
    dp = jnp.einsum('bhnd,bhmd->bhnm', q, k) * scale
    attn = jax.nn.softmax(dp, axis=-1)
    wa = jnp.einsum('bhnm,bhmd->bhnd', attn, v)              # (B, H, N, hd)
    wa = wa.transpose(0, 2, 1, 3).reshape(B, N, D)
    return wa @ w_proj + b_proj[0]


if __name__ == "__main__":
    # Small shapes consistent with the module (dim divisible by n_heads).
    B, N, D = 2, 8, 32
    n_heads = 4

    key = jax.random.PRNGKey(0)
    kx, k1, k2, k3, k4 = jax.random.split(key, 5)

    x = jax.random.normal(kx, (B, N, D), dtype=jnp.float32)
    # Deterministic synthetic parameters (stored as (in, out): y = x @ W + b).
    w_qkv = jax.random.normal(k1, (D, 3 * D), dtype=jnp.float32) * 0.05
    b_qkv = jax.random.normal(k2, (1, 3 * D), dtype=jnp.float32) * 0.01
    w_proj = jax.random.normal(k3, (D, D), dtype=jnp.float32) * 0.05
    b_proj = jax.random.normal(k4, (1, D), dtype=jnp.float32) * 0.01

    ref = attention_ref(x, w_qkv, b_qkv, w_proj, b_proj, n_heads=n_heads)

    # 1) f32 MXU operands: tight semantic check of the kernel.
    out_f32 = jax.block_until_ready(
        attention(x, w_qkv, b_qkv, w_proj, b_proj, n_heads=n_heads,
                  compute_dtype=jnp.float32))
    assert out_f32.shape == (B, N, D)
    assert jnp.allclose(out_f32, ref, atol=2e-3, rtol=2e-2), "f32 mismatch vs reference"

    # 2) default performance configuration (bf16 MXU operands / caches).
    out_bf16 = jax.block_until_ready(
        attention(x, w_qkv, b_qkv, w_proj, b_proj, n_heads=n_heads))
    assert out_bf16.shape == (B, N, D)
    assert jnp.allclose(out_bf16, ref, atol=1e-2, rtol=5e-2), "bf16 mismatch vs reference"

    print("KERNEL_OK")
</pallas_src>

<mosaic_0001>
module attributes {stable_mosaic.version = 11 : i64} {
  func.func @_attention_kernel(%arg0: i32, %arg1: i32, %arg2: memref<1x128x32xf32, #tpu.memory_space<vmem>>, %arg3: memref<32x32xf32, #tpu.memory_space<vmem>>, %arg4: memref<32x32xf32, #tpu.memory_space<vmem>>, %arg5: memref<32x32xf32, #tpu.memory_space<vmem>>, %arg6: memref<1x32xf32, #tpu.memory_space<vmem>>, %arg7: memref<1x32xf32, #tpu.memory_space<vmem>>, %arg8: memref<1x32xf32, #tpu.memory_space<vmem>>, %arg9: memref<32x32xf32, #tpu.memory_space<vmem>>, %arg10: memref<1x32xf32, #tpu.memory_space<vmem>>, %arg11: memref<1x128x32xf32, #tpu.memory_space<vmem>>, %arg12: memref<4x128x8xf32, #tpu.memory_space<vmem>>, %arg13: memref<4x128x8xf32, #tpu.memory_space<vmem>>, %arg14: memref<4x128x8xf32, #tpu.memory_space<vmem>>, %arg15: memref<128x32xf32, #tpu.memory_space<vmem>>) attributes {dimension_semantics = [#tpu.dimension_semantics<parallel>, #tpu.dimension_semantics<arbitrary>], iteration_bounds = array<i64: 2, 1>, scalar_prefetch = 0 : i64, scratch_operands = 4 : i64, tpu.core_type = #tpu.core_type<tc>, window_params = [{transform_indices = @transform_0, window_bounds = array<i64: 1, 128, 32>}, {pipeline_mode = #tpu.pipeline_mode<synchronous>, transform_indices = @transform_1, window_bounds = array<i64: 32, 32>}, {pipeline_mode = #tpu.pipeline_mode<synchronous>, transform_indices = @transform_2, window_bounds = array<i64: 32, 32>}, {pipeline_mode = #tpu.pipeline_mode<synchronous>, transform_indices = @transform_3, window_bounds = array<i64: 32, 32>}, {pipeline_mode = #tpu.pipeline_mode<synchronous>, transform_indices = @transform_4, window_bounds = array<i64: 1, 32>}, {pipeline_mode = #tpu.pipeline_mode<synchronous>, transform_indices = @transform_5, window_bounds = array<i64: 1, 32>}, {pipeline_mode = #tpu.pipeline_mode<synchronous>, transform_indices = @transform_6, window_bounds = array<i64: 1, 32>}, {pipeline_mode = #tpu.pipeline_mode<synchronous>, transform_indices = @transform_7, window_bounds = array<i64: 32, 32>}, {pipeline_mode = #tpu.pipeline_mode<synchronous>, transform_indices = @transform_8, window_bounds = array<i64: 1, 32>}, {transform_indices = @transform_9, window_bounds = array<i64: 1, 128, 32>}]} {
    %c0_i32 = arith.constant 0 : i32
    %0 = arith.cmpi eq, %arg1, %c0_i32 : i32
    %1 = arith.extui %0 : i1 to i32
    %c0_i32_0 = arith.constant 0 : i32
    %2 = arith.cmpi ne, %1, %c0_i32_0 : i32
    scf.if %2 {
      %c0_27 = arith.constant 0 : index
      %c0_28 = arith.constant 0 : index
      %c0_29 = arith.constant 0 : index
      %49 = vector.load %arg2[%c0_27, %c0_28, %c0_29] : memref<1x128x32xf32, #tpu.memory_space<vmem>>, vector<1x128x32xf32>
      %50 = vector.shape_cast %49 : vector<1x128x32xf32> to vector<128x32xf32>
      %c0_30 = arith.constant 0 : index
      %c0_31 = arith.constant 0 : index
      %51 = vector.load %arg3[%c0_30, %c0_31] : memref<32x32xf32, #tpu.memory_space<vmem>>, vector<32x32xf32>
      %cst_32 = arith.constant dense<0.000000e+00> : vector<128x32xf32>
      %52 = tpu.matmul %50, %51, %cst_32 {dimension_numbers = #tpu.dot_dimension_numbers<[1], [0], [0], [1], [0, 0, 1, 1], [], []>} : vector<128x32xf32>, vector<32x32xf32>, vector<128x32xf32> -> vector<128x32xf32>
      %c0_33 = arith.constant 0 : index
      %c0_34 = arith.constant 0 : index
      %53 = vector.load %arg6[%c0_33, %c0_34] : memref<1x32xf32, #tpu.memory_space<vmem>>, vector<1x32xf32>
      %54 = vector.broadcast %53 : vector<1x32xf32> to vector<128x32xf32>
      %55 = arith.addf %52, %54 : vector<128x32xf32>
      %cst_35 = arith.constant 0.353553385 : f32
      %56 = vector.broadcast %cst_35 : f32 to vector<128x32xf32>
      %57 = arith.mulf %55, %56 : vector<128x32xf32>
      %58 = vector.extract_strided_slice %57 {offsets = [0, 0], sizes = [128, 8], strides = [1, 1]} : vector<128x32xf32> to vector<128x8xf32>
      %c0_36 = arith.constant 0 : index
      %c0_37 = arith.constant 0 : index
      %c0_38 = arith.constant 0 : index
      %59 = vector.load %arg12[%c0_36, %c0_37, %c0_38] : memref<4x128x8xf32, #tpu.memory_space<vmem>>, vector<1x128x8xf32>
      %60 = vector.shape_cast %59 : vector<1x128x8xf32> to vector<128x8xf32>
      %61 = vector.shape_cast %58 : vector<128x8xf32> to vector<1x128x8xf32>
      tpu.vector_store %arg12[%c0_36, %c0_37, %c0_38], %61 {strides = array<i32>} : memref<4x128x8xf32, #tpu.memory_space<vmem>>, vector<1x128x8xf32>,
      %62 = vector.extract_strided_slice %57 {offsets = [0, 8], sizes = [128, 8], strides = [1, 1]} : vector<128x32xf32> to vector<128x8xf32>
      %c1 = arith.constant 1 : index
      %c0_39 = arith.constant 0 : index
      %c0_40 = arith.constant 0 : index
      %63 = vector.load %arg12[%c1, %c0_39, %c0_40] : memref<4x128x8xf32, #tpu.memory_space<vmem>>, vector<1x128x8xf32>
      %64 = vector.shape_cast %63 : vector<1x128x8xf32> to vector<128x8xf32>
      %65 = vector.shape_cast %62 : vector<128x8xf32> to vector<1x128x8xf32>
      tpu.vector_store %arg12[%c1, %c0_39, %c0_40], %65 {strides = array<i32>} : memref<4x128x8xf32, #tpu.memory_space<vmem>>, vector<1x128x8xf32>,
      %66 = vector.extract_strided_slice %57 {offsets = [0, 16], sizes = [128, 8], strides = [1, 1]} : vector<128x32xf32> to vector<128x8xf32>
      %c2 = arith.constant 2 : index
      %c0_41 = arith.constant 0 : index
      %c0_42 = arith.constant 0 : index
      %67 = vector.load %arg12[%c2, %c0_41, %c0_42] : memref<4x128x8xf32, #tpu.memory_space<vmem>>, vector<1x128x8xf32>
      %68 = vector.shape_cast %67 : vector<1x128x8xf32> to vector<128x8xf32>
      %69 = vector.shape_cast %66 : vector<128x8xf32> to vector<1x128x8xf32>
      tpu.vector_store %arg12[%c2, %c0_41, %c0_42], %69 {strides = array<i32>} : memref<4x128x8xf32, #tpu.memory_space<vmem>>, vector<1x128x8xf32>,
      %70 = vector.extract_strided_slice %57 {offsets = [0, 24], sizes = [128, 8], strides = [1, 1]} : vector<128x32xf32> to vector<128x8xf32>
      %c3 = arith.constant 3 : index
      %c0_43 = arith.constant 0 : index
      %c0_44 = arith.constant 0 : index
      %71 = vector.load %arg12[%c3, %c0_43, %c0_44] : memref<4x128x8xf32, #tpu.memory_space<vmem>>, vector<1x128x8xf32>
      %72 = vector.shape_cast %71 : vector<1x128x8xf32> to vector<128x8xf32>
      %73 = vector.shape_cast %70 : vector<128x8xf32> to vector<1x128x8xf32>
      tpu.vector_store %arg12[%c3, %c0_43, %c0_44], %73 {strides = array<i32>} : memref<4x128x8xf32, #tpu.memory_space<vmem>>, vector<1x128x8xf32>,
      %c0_45 = arith.constant 0 : index
      %c0_46 = arith.constant 0 : index
      %74 = vector.load %arg4[%c0_45, %c0_46] : memref<32x32xf32, #tpu.memory_space<vmem>>, vector<32x32xf32>
      %cst_47 = arith.constant dense<0.000000e+00> : vector<128x32xf32>
      %75 = tpu.matmul %50, %74, %cst_47 {dimension_numbers = #tpu.dot_dimension_numbers<[1], [0], [0], [1], [0, 0, 1, 1], [], []>} : vector<128x32xf32>, vector<32x32xf32>, vector<128x32xf32> -> vector<128x32xf32>
      %c0_48 = arith.constant 0 : index
      %c0_49 = arith.constant 0 : index
      %76 = vector.load %arg7[%c0_48, %c0_49] : memref<1x32xf32, #tpu.memory_space<vmem>>, vector<1x32xf32>
      %77 = vector.broadcast %76 : vector<1x32xf32> to vector<128x32xf32>
      %78 = arith.addf %75, %77 : vector<128x32xf32>
      %79 = vector.extract_strided_slice %78 {offsets = [0, 0], sizes = [128, 8], strides = [1, 1]} : vector<128x32xf32> to vector<128x8xf32>
      %c0_50 = arith.constant 0 : index
      %c0_51 = arith.constant 0 : index
      %c0_52 = arith.constant 0 : index
      %80 = vector.load %arg13[%c0_50, %c0_51, %c0_52] : memref<4x128x8xf32, #tpu.memory_space<vmem>>, vector<1x128x8xf32>
      %81 = vector.shape_cast %80 : vector<1x128x8xf32> to vector<128x8xf32>
      %82 = vector.shape_cast %79 : vector<128x8xf32> to vector<1x128x8xf32>
      tpu.vector_store %arg13[%c0_50, %c0_51, %c0_52], %82 {strides = array<i32>} : memref<4x128x8xf32, #tpu.memory_space<vmem>>, vector<1x128x8xf32>,
      %83 = vector.extract_strided_slice %78 {offsets = [0, 8], sizes = [128, 8], strides = [1, 1]} : vector<128x32xf32> to vector<128x8xf32>
      %c1_53 = arith.constant 1 : index
      %c0_54 = arith.constant 0 : index
      %c0_55 = arith.constant 0 : index
      %84 = vector.load %arg13[%c1_53, %c0_54, %c0_55] : memref<4x128x8xf32, #tpu.memory_space<vmem>>, vector<1x128x8xf32>
      %85 = vector.shape_cast %84 : vector<1x128x8xf32> to vector<128x8xf32>
      %86 = vector.shape_cast %83 : vector<128x8xf32> to vector<1x128x8xf32>
      tpu.vector_store %arg13[%c1_53, %c0_54, %c0_55], %86 {strides = array<i32>} : memref<4x128x8xf32, #tpu.memory_space<vmem>>, vector<1x128x8xf32>,
      %87 = vector.extract_strided_slice %78 {offsets = [0, 16], sizes = [128, 8], strides = [1, 1]} : vector<128x32xf32> to vector<128x8xf32>
      %c2_56 = arith.constant 2 : index
      %c0_57 = arith.constant 0 : index
      %c0_58 = arith.constant 0 : index
      %88 = vector.load %arg13[%c2_56, %c0_57, %c0_58] : memref<4x128x8xf32, #tpu.memory_space<vmem>>, vector<1x128x8xf32>
      %89 = vector.shape_cast %88 : vector<1x128x8xf32> to vector<128x8xf32>
      %90 = vector.shape_cast %87 : vector<128x8xf32> to vector<1x128x8xf32>
      tpu.vector_store %arg13[%c2_56, %c0_57, %c0_58], %90 {strides = array<i32>} : memref<4x128x8xf32, #tpu.memory_space<vmem>>, vector<1x128x8xf32>,
      %91 = vector.extract_strided_slice %78 {offsets = [0, 24], sizes = [128, 8], strides = [1, 1]} : vector<128x32xf32> to vector<128x8xf32>
      %c3_59 = arith.constant 3 : index
      %c0_60 = arith.constant 0 : index
      %c0_61 = arith.constant 0 : index
      %92 = vector.load %arg13[%c3_59, %c0_60, %c0_61] : memref<4x128x8xf32, #tpu.memory_space<vmem>>, vector<1x128x8xf32>
      %93 = vector.shape_cast %92 : vector<1x128x8xf32> to vector<128x8xf32>
      %94 = vector.shape_cast %91 : vector<128x8xf32> to vector<1x128x8xf32>
      tpu.vector_store %arg13[%c3_59, %c0_60, %c0_61], %94 {strides = array<i32>} : memref<4x128x8xf32, #tpu.memory_space<vmem>>, vector<1x128x8xf32>,
      %c0_62 = arith.constant 0 : index
      %c0_63 = arith.constant 0 : index
      %95 = vector.load %arg5[%c0_62, %c0_63] : memref<32x32xf32, #tpu.memory_space<vmem>>, vector<32x32xf32>
      %cst_64 = arith.constant dense<0.000000e+00> : vector<128x32xf32>
      %96 = tpu.matmul %50, %95, %cst_64 {dimension_numbers = #tpu.dot_dimension_numbers<[1], [0], [0], [1], [0, 0, 1, 1], [], []>} : vector<128x32xf32>, vector<32x32xf32>, vector<128x32xf32> -> vector<128x32xf32>
      %c0_65 = arith.constant 0 : index
      %c0_66 = arith.constant 0 : index
      %97 = vector.load %arg8[%c0_65, %c0_66] : memref<1x32xf32, #tpu.memory_space<vmem>>, vector<1x32xf32>
      %98 = vector.broadcast %97 : vector<1x32xf32> to vector<128x32xf32>
      %99 = arith.addf %96, %98 : vector<128x32xf32>
      %100 = vector.extract_strided_slice %99 {offsets = [0, 0], sizes = [128, 8], strides = [1, 1]} : vector<128x32xf32> to vector<128x8xf32>
      %c0_67 = arith.constant 0 : index
      %c0_68 = arith.constant 0 : index
      %c0_69 = arith.constant 0 : index
      %101 = vector.load %arg14[%c0_67, %c0_68, %c0_69] : memref<4x128x8xf32, #tpu.memory_space<vmem>>, vector<1x128x8xf32>
      %102 = vector.shape_cast %101 : vector<1x128x8xf32> to vector<128x8xf32>
      %103 = vector.shape_cast %100 : vector<128x8xf32> to vector<1x128x8xf32>
      tpu.vector_store %arg14[%c0_67, %c0_68, %c0_69], %103 {strides = array<i32>} : memref<4x128x8xf32, #tpu.memory_space<vmem>>, vector<1x128x8xf32>,
      %104 = vector.extract_strided_slice %99 {offsets = [0, 8], sizes = [128, 8], strides = [1, 1]} : vector<128x32xf32> to vector<128x8xf32>
      %c1_70 = arith.constant 1 : index
      %c0_71 = arith.constant 0 : index
      %c0_72 = arith.constant 0 : index
      %105 = vector.load %arg14[%c1_70, %c0_71, %c0_72] : memref<4x128x8xf32, #tpu.memory_space<vmem>>, vector<1x128x8xf32>
      %106 = vector.shape_cast %105 : vector<1x128x8xf32> to vector<128x8xf32>
      %107 = vector.shape_cast %104 : vector<128x8xf32> to vector<1x128x8xf32>
      tpu.vector_store %arg14[%c1_70, %c0_71, %c0_72], %107 {strides = array<i32>} : memref<4x128x8xf32, #tpu.memory_space<vmem>>, vector<1x128x8xf32>,
      %108 = vector.extract_strided_slice %99 {offsets = [0, 16], sizes = [128, 8], strides = [1, 1]} : vector<128x32xf32> to vector<128x8xf32>
      %c2_73 = arith.constant 2 : index
      %c0_74 = arith.constant 0 : index
      %c0_75 = arith.constant 0 : index
      %109 = vector.load %arg14[%c2_73, %c0_74, %c0_75] : memref<4x128x8xf32, #tpu.memory_space<vmem>>, vector<1x128x8xf32>
      %110 = vector.shape_cast %109 : vector<1x128x8xf32> to vector<128x8xf32>
      %111 = vector.shape_cast %108 : vector<128x8xf32> to vector<1x128x8xf32>
      tpu.vector_store %arg14[%c2_73, %c0_74, %c0_75], %111 {strides = array<i32>} : memref<4x128x8xf32, #tpu.memory_space<vmem>>, vector<1x128x8xf32>,
      %112 = vector.extract_strided_slice %99 {offsets = [0, 24], sizes = [128, 8], strides = [1, 1]} : vector<128x32xf32> to vector<128x8xf32>
      %c3_76 = arith.constant 3 : index
      %c0_77 = arith.constant 0 : index
      %c0_78 = arith.constant 0 : index
      %113 = vector.load %arg14[%c3_76, %c0_77, %c0_78] : memref<4x128x8xf32, #tpu.memory_space<vmem>>, vector<1x128x8xf32>
      %114 = vector.shape_cast %113 : vector<1x128x8xf32> to vector<128x8xf32>
      %115 = vector.shape_cast %112 : vector<128x8xf32> to vector<1x128x8xf32>
      tpu.vector_store %arg14[%c3_76, %c0_77, %c0_78], %115 {strides = array<i32>} : memref<4x128x8xf32, #tpu.memory_space<vmem>>, vector<1x128x8xf32>,
    } else {
    }
    %c128_i32 = arith.constant 128 : i32
    %3 = arith.muli %arg1, %c128_i32 : i32
    %4 = tpu.assume_multiple %3, 128 : i32
    %c0 = arith.constant 0 : index
    %5 = arith.index_cast %4 : i32 to index
    %c0_1 = arith.constant 0 : index
    %6 = vector.load %arg12[%c0, %5, %c0_1] : memref<4x128x8xf32, #tpu.memory_space<vmem>>, vector<4x128x8xf32>
    %c0_2 = arith.constant 0 : index
    %c0_3 = arith.constant 0 : index
    %c0_4 = arith.constant 0 : index
    %7 = vector.load %arg13[%c0_2, %c0_3, %c0_4] : memref<4x128x8xf32, #tpu.memory_space<vmem>>, vector<4x128x8xf32>
    "tpu.trace_start"() <{level = 10 : i32, message = "hqd,hkd->hqk"}> : () -> ()
    %cst = arith.constant dense<0.000000e+00> : vector<4x128x128xf32>
    %8 = tpu.matmul %6, %7, %cst {dimension_numbers = #tpu.dot_dimension_numbers<[2], [2], [1], [1], [0, 0, 0, 1, 1, 1], [0], [0]>} : vector<4x128x8xf32>, vector<4x128x8xf32>, vector<4x128x128xf32> -> vector<4x128x128xf32>
    "tpu.trace_stop"() : () -> ()
    %9 = tpu.iota {dimensions = array<i32: 2>} : vector<1x1x128xi32>
    %c8_i32 = arith.constant 8 : i32
    %10 = vector.broadcast %c8_i32 : i32 to vector<1x1x128xi32>
    %11 = arith.cmpi slt, %9, %10 : vector<1x1x128xi32>
    %cst_5 = arith.constant -1.000000e+30 : f32
    %12 = vector.shape_cast %11 : vector<1x1x128xi1> to vector<1x1x128xi1>
    %13 = vector.broadcast %12 : vector<1x1x128xi1> to vector<4x128x128xi1>
    %14 = vector.broadcast %cst_5 : f32 to vector<4x128x128xf32>
    %15 = arith.select %13, %8, %14 : vector<4x128x128xi1>, vector<4x128x128xf32>
    %cst_6 = arith.constant dense<0xFF800000> : vector<4x128xf32>
    %16 = vector.multi_reduction <maximumf>, %15, %cst_6 [2] : vector<4x128x128xf32> to vector<4x128xf32>
    %17 = vector.shape_cast %16 : vector<4x128xf32> to vector<4x128x1xf32>
    %18 = vector.broadcast %17 : vector<4x128x1xf32> to vector<4x128x128xf32>
    %19 = arith.subf %15, %18 : vector<4x128x128xf32>
    %20 = math.exp %19 : vector<4x128x128xf32>
    %cst_7 = arith.constant dense<0.000000e+00> : vector<4x128xf32>
    %21 = vector.multi_reduction <add>, %20, %cst_7 [2] : vector<4x128x128xf32> to vector<4x128xf32>
    %22 = vector.shape_cast %21 : vector<4x128xf32> to vector<4x128x1xf32>
    %c0_8 = arith.constant 0 : index
    %c0_9 = arith.constant 0 : index
    %c0_10 = arith.constant 0 : index
    %23 = vector.load %arg14[%c0_8, %c0_9, %c0_10] : memref<4x128x8xf32, #tpu.memory_space<vmem>>, vector<4x128x8xf32>
    "tpu.trace_start"() <{level = 10 : i32, message = "hqk,hkd->hqd"}> : () -> ()
    %cst_11 = arith.constant dense<0.000000e+00> : vector<4x128x8xf32>
    %24 = tpu.matmul %20, %23, %cst_11 {dimension_numbers = #tpu.dot_dimension_numbers<[2], [1], [1], [2], [0, 0, 0, 1, 1, 2], [0], [0]>} : vector<4x128x128xf32>, vector<4x128x8xf32>, vector<4x128x8xf32> -> vector<4x128x8xf32>
    "tpu.trace_stop"() : () -> ()
    %25 = tpu.reciprocal %22 {approx = true} : vector<4x128x1xf32> -> vector<4x128x1xf32>
    %26 = vector.broadcast %25 : vector<4x128x1xf32> to vector<4x128x8xf32>
    %27 = arith.mulf %24, %26 : vector<4x128x8xf32>
    %28 = vector.extract_strided_slice %27 {offsets = [0, 0, 0], sizes = [1, 128, 8], strides = [1, 1, 1]} : vector<4x128x8xf32> to vector<1x128x8xf32>
    %29 = vector.shape_cast %28 : vector<1x128x8xf32> to vector<128x8xf32>
    %c0_12 = arith.constant 0 : index
    %c0_13 = arith.constant 0 : index
    %30 = vector.load %arg15[%c0_12, %c0_13] : memref<128x32xf32, #tpu.memory_space<vmem>>, vector<128x8xf32>
    tpu.vector_store %arg15[%c0_12, %c0_13], %29 {strides = array<i32>} : memref<128x32xf32, #tpu.memory_space<vmem>>, vector<128x8xf32>,
    %31 = vector.extract_strided_slice %27 {offsets = [1, 0, 0], sizes = [1, 128, 8], strides = [1, 1, 1]} : vector<4x128x8xf32> to vector<1x128x8xf32>
    %32 = vector.shape_cast %31 : vector<1x128x8xf32> to vector<128x8xf32>
    %c0_14 = arith.constant 0 : index
    %c8 = arith.constant 8 : index
    %33 = vector.load %arg15[%c0_14, %c8] : memref<128x32xf32, #tpu.memory_space<vmem>>, vector<128x8xf32>
    tpu.vector_store %arg15[%c0_14, %c8], %32 {strides = array<i32>} : memref<128x32xf32, #tpu.memory_space<vmem>>, vector<128x8xf32>,
    %34 = vector.extract_strided_slice %27 {offsets = [2, 0, 0], sizes = [1, 128, 8], strides = [1, 1, 1]} : vector<4x128x8xf32> to vector<1x128x8xf32>
    %35 = vector.shape_cast %34 : vector<1x128x8xf32> to vector<128x8xf32>
    %c0_15 = arith.constant 0 : index
    %c16 = arith.constant 16 : index
    %36 = vector.load %arg15[%c0_15, %c16] : memref<128x32xf32, #tpu.memory_space<vmem>>, vector<128x8xf32>
    tpu.vector_store %arg15[%c0_15, %c16], %35 {strides = array<i32>} : memref<128x32xf32, #tpu.memory_space<vmem>>, vector<128x8xf32>,
    %37 = vector.extract_strided_slice %27 {offsets = [3, 0, 0], sizes = [1, 128, 8], strides = [1, 1, 1]} : vector<4x128x8xf32> to vector<1x128x8xf32>
    %38 = vector.shape_cast %37 : vector<1x128x8xf32> to vector<128x8xf32>
    %c0_16 = arith.constant 0 : index
    %c24 = arith.constant 24 : index
    %39 = vector.load %arg15[%c0_16, %c24] : memref<128x32xf32, #tpu.memory_space<vmem>>, vector<128x8xf32>
    tpu.vector_store %arg15[%c0_16, %c24], %38 {strides = array<i32>} : memref<128x32xf32, #tpu.memory_space<vmem>>, vector<128x8xf32>,
    %c0_17 = arith.constant 0 : index
    %c0_18 = arith.constant 0 : index
    %40 = vector.load %arg15[%c0_17, %c0_18] : memref<128x32xf32, #tpu.memory_space<vmem>>, vector<128x32xf32>
    %c0_19 = arith.constant 0 : index
    %c0_20 = arith.constant 0 : index
    %41 = vector.load %arg9[%c0_19, %c0_20] : memref<32x32xf32, #tpu.memory_space<vmem>>, vector<32x32xf32>
    %cst_21 = arith.constant dense<0.000000e+00> : vector<128x32xf32>
    %42 = tpu.matmul %40, %41, %cst_21 {dimension_numbers = #tpu.dot_dimension_numbers<[1], [0], [0], [1], [0, 0, 1, 1], [], []>} : vector<128x32xf32>, vector<32x32xf32>, vector<128x32xf32> -> vector<128x32xf32>
    %c0_22 = arith.constant 0 : index
    %c0_23 = arith.constant 0 : index
    %43 = vector.load %arg10[%c0_22, %c0_23] : memref<1x32xf32, #tpu.memory_space<vmem>>, vector<1x32xf32>
    %44 = vector.broadcast %43 : vector<1x32xf32> to vector<128x32xf32>
    %45 = arith.addf %42, %44 : vector<128x32xf32>
    %c0_24 = arith.constant 0 : index
    %c0_25 = arith.constant 0 : index
    %c0_26 = arith.constant 0 : index
    %46 = vector.load %arg11[%c0_24, %c0_25, %c0_26] : memref<1x128x32xf32, #tpu.memory_space<vmem>>, vector<1x128x32xf32>
    %47 = vector.shape_cast %46 : vector<1x128x32xf32> to vector<128x32xf32>
    %48 = vector.shape_cast %45 : vector<128x32xf32> to vector<1x128x32xf32>
    tpu.vector_store %arg11[%c0_24, %c0_25, %c0_26], %48 {strides = array<i32>} : memref<1x128x32xf32, #tpu.memory_space<vmem>>, vector<1x128x32xf32>,
    return
  }
  func.func @transform_0(%arg0: i32, %arg1: i32) -> (i32, i32, i32) {
    %c0_i32 = arith.constant 0 : i32
    %c0_i32_0 = arith.constant 0 : i32
    %c0_i32_1 = arith.constant 0 : i32
    return %arg0, %c0_i32, %c0_i32_0 : i32, i32, i32
  }
  func.func @transform_1(%arg0: i32, %arg1: i32) -> (i32, i32) {
    %c0_i32 = arith.constant 0 : i32
    %c0_i32_0 = arith.constant 0 : i32
    %c0_i32_1 = arith.constant 0 : i32
    return %c0_i32, %c0_i32_0 : i32, i32
  }
  func.func @transform_2(%arg0: i32, %arg1: i32) -> (i32, i32) {
    %c0_i32 = arith.constant 0 : i32
    %c0_i32_0 = arith.constant 0 : i32
    %c0_i32_1 = arith.constant 0 : i32
    return %c0_i32, %c0_i32_0 : i32, i32
  }
  func.func @transform_3(%arg0: i32, %arg1: i32) -> (i32, i32) {
    %c0_i32 = arith.constant 0 : i32
    %c0_i32_0 = arith.constant 0 : i32
    %c0_i32_1 = arith.constant 0 : i32
    return %c0_i32, %c0_i32_0 : i32, i32
  }
  func.func @transform_4(%arg0: i32, %arg1: i32) -> (i32, i32) {
    %c0_i32 = arith.constant 0 : i32
    %c0_i32_0 = arith.constant 0 : i32
    %c0_i32_1 = arith.constant 0 : i32
    return %c0_i32, %c0_i32_0 : i32, i32
  }
  func.func @transform_5(%arg0: i32, %arg1: i32) -> (i32, i32) {
    %c0_i32 = arith.constant 0 : i32
    %c0_i32_0 = arith.constant 0 : i32
    %c0_i32_1 = arith.constant 0 : i32
    return %c0_i32, %c0_i32_0 : i32, i32
  }
  func.func @transform_6(%arg0: i32, %arg1: i32) -> (i32, i32) {
    %c0_i32 = arith.constant 0 : i32
    %c0_i32_0 = arith.constant 0 : i32
    %c0_i32_1 = arith.constant 0 : i32
    return %c0_i32, %c0_i32_0 : i32, i32
  }
  func.func @transform_7(%arg0: i32, %arg1: i32) -> (i32, i32) {
    %c0_i32 = arith.constant 0 : i32
    %c0_i32_0 = arith.constant 0 : i32
    %c0_i32_1 = arith.constant 0 : i32
    return %c0_i32, %c0_i32_0 : i32, i32
  }
  func.func @transform_8(%arg0: i32, %arg1: i32) -> (i32, i32) {
    %c0_i32 = arith.constant 0 : i32
    %c0_i32_0 = arith.constant 0 : i32
    %c0_i32_1 = arith.constant 0 : i32
    return %c0_i32, %c0_i32_0 : i32, i32
  }
  func.func @transform_9(%arg0: i32, %arg1: i32) -> (i32, i32, i32) {
    %c0_i32 = arith.constant 0 : i32
    %c0_i32_0 = arith.constant 0 : i32
    return %arg0, %arg1, %c0_i32 : i32, i32, i32
  }
}

</mosaic_0001>

<llo_original>
// kernel: tpu_custom_call.1
$region0: #{tpu_custom_call.1}
  #allocation0 [shape = 'u32[]', space=smem, size = 0x4, offset = 0x4, fixed_abs, tag = 'smem constant byte address 0x4 - core index']
  #allocation1 [shape = 'u32[144,128]{1,0:T(1,128)}', space=vmem, size = 0x12000, scoped, tag = 'internal scratch']
  #allocation2 [shape = 'f32[4,128,8]{2,1,0:T(8,128)}', space=vmem, size = 0x40000, scoped, tag = 'scratch operand']
  #allocation3 [shape = 'f32[4,128,8]{2,1,0:T(8,128)}', space=vmem, size = 0x40000, scoped, tag = 'scratch operand']
  #allocation4 [shape = 'f32[4,128,8]{2,1,0:T(8,128)}', space=vmem, size = 0x40000, scoped, tag = 'scratch operand']
  #allocation5 [shape = 'f32[128,32]{1,0:T(8,128)}', space=vmem, size = 0x10000, scoped, tag = 'scratch operand']
  %s0 = inlined_call_operand.vmem [shape: f32[2,128,32], index: 0, kind: input, shape index: {}]
  %s1 = inlined_call_operand.vmem [shape: f32[32,32], index: 1, kind: input, shape index: {}]
  %s2 = inlined_call_operand.vmem [shape: f32[32,32], index: 2, kind: input, shape index: {}]
  %s3 = inlined_call_operand.vmem [shape: f32[32,32], index: 3, kind: input, shape index: {}]
  %s4 = inlined_call_operand.vmem [shape: f32[1,32], index: 4, kind: input, shape index: {}]
  %s5 = inlined_call_operand.vmem [shape: f32[1,32], index: 5, kind: input, shape index: {}]
  %s6 = inlined_call_operand.vmem [shape: f32[1,32], index: 6, kind: input, shape index: {}]
  %s7 = inlined_call_operand.vmem [shape: f32[32,32], index: 7, kind: input, shape index: {}]
  %s8 = inlined_call_operand.vmem [shape: f32[1,32], index: 8, kind: input, shape index: {}]
  %s9 = inlined_call_operand.vmem [shape: f32[2,128,32], index: 9, kind: output, shape index: {}]
  %s10 = sld [smem:[#allocation0]]
  $region73: #{tpu_custom_call.1} parent=0
    _
  %s12 = ssub.s32 1, %s10
  %s13 = scalar_select 0, %s12, %s10
  loop: start=0, step=1, limit=4
  $region2: #{tpu_custom_call.1} parent=0 // loop_pre_header
    _
  $region3: #{tpu_custom_call.1} parent=0 // loop_header
    %s15 = sphi 0, %s19
    %p16 = scmp.ge.s32.totalorder %s15, 4
    %s22 = sphi 0, %s34
    %s23 = sphi 0, %s30
    %s24 = sphi 0, %s22
    %s25 = sphi 0, %s23
    %s26 = sphi 0, %s24
    %s27 = sphi 0, %s25
    %s37 = sphi 0, %s39
    %s40 = sphi 0, %s37
    %s41 = sphi 0, %s40
    %s57 = sphi 0, %s41
    %s61 = sphi 0, %s61
    %s63 = sphi 0, %s61
    %s64 = sphi 0, %s63
    %s78 = sphi 0, %s64
    %s82 = sphi 0, %s82
    %s84 = sphi 0, %s82
    %s85 = sphi 0, %s84
    %s99 = sphi 0, %s85
    %s103 = sphi 0, %s103
    %s105 = sphi 0, %s103
    %s106 = sphi 0, %s105
    %s120 = sphi 0, %s106
    %s124 = sphi 0, %s124
    %s126 = sphi 0, %s124
    %s127 = sphi 0, %s126
    %s141 = sphi 0, %s127
    %s145 = sphi 0, %s145
    %s147 = sphi 0, %s145
    %s148 = sphi 0, %s147
    %s162 = sphi 0, %s148
    %s166 = sphi 0, %s166
    %s168 = sphi 0, %s166
    %s169 = sphi 0, %s168
    %s183 = sphi 0, %s169
    %s187 = sphi 0, %s187
    %s189 = sphi 0, %s187
    %s190 = sphi 0, %s189
    %s204 = sphi 0, %s190
    %s208 = sphi 0, %s208
    %s210 = sphi 0, %s208
    %s211 = sphi 0, %s210
    %s225 = sphi 0, %s211
    %s233 = sphi 0, %s235
    %s236 = sphi 0, %s233
    %s237 = sphi 0, %s236
    %s253 = sphi 0, %s237
  $region4: #{tpu_custom_call.1} parent=0 // loop_header_branch
    %18 = sbr.rel (%p16) target = $region8
  $region5: #{tpu_custom_call.1} parent=0 // loop_body
    %s20 = ssub.s32 %s15, 1
    %s21 = ssub.s32 %s15, 2
    %s28 = sadd.s32 1, %s23
    %p29 = scmp.ge.s32.totalorder %s28, 1
    %s30 = scalar_select %p29, 0, %s28
    %s31 = sadd.s32 1, %s22
    %s32 = scalar_select %p29, %s31, %s22
    %p33 = scmp.ge.s32.totalorder %s32, 2
    %s34 = scalar_select %p33, 0, %s32
    %s35 = ssub.s32 %s22, %s34
    %p36 = scmp.eq.s32.totalorder %s35, 0
    %s38 = sadd.s32 %s37, 1
    %s39 = scalar_select %p36, %s37, %s38
    %p42 = pneg %p36
    %p43 = scmp.eq.s32.totalorder %s15, 1
    %p44 = por %p42, %p43
    %p45 = scmp.ne.s32.totalorder %s37, %s40
    %p46 = scmp.eq.s32.totalorder %s15, 0
    %p47 = por %p45, %p46
    %p48 = scmp.ne.s32.totalorder %s37, %s40
    %p49 = scmp.eq.s32.totalorder %s20, 1
    %p50 = por %p48, %p49
    %p51 = scmp.ne.s32.totalorder %s40, %s41
    %p52 = scmp.eq.s32.totalorder %s20, 0
    %p53 = por %p51, %p52
    %p54 = scmp.ne.s32.totalorder %s40, %s41
    %p55 = scmp.eq.s32.totalorder %s21, 1
    %p56 = por %p54, %p55
    %p58 = scmp.ne.s32.totalorder %s41, %s57
    %p59 = scmp.eq.s32.totalorder %s21, 0
    %p60 = por %p58, %p59
    %s62 = sadd.s32 %s61, 1
    %p65 = scmp.eq.s32.totalorder %s15, 1
    %p66 = scmp.ne.s32.totalorder %s61, %s63
    %p67 = scmp.eq.s32.totalorder %s15, 0
    %p68 = por %p66, %p67
    %p69 = scmp.ne.s32.totalorder %s61, %s63
    %p70 = scmp.eq.s32.totalorder %s20, 1
    %p71 = por %p69, %p70
    %p72 = scmp.ne.s32.totalorder %s63, %s64
    %p73 = scmp.eq.s32.totalorder %s20, 0
    %p74 = por %p72, %p73
    %p75 = scmp.ne.s32.totalorder %s63, %s64
    %p76 = scmp.eq.s32.totalorder %s21, 1
    %p77 = por %p75, %p76
    %p79 = scmp.ne.s32.totalorder %s64, %s78
    %p80 = scmp.eq.s32.totalorder %s21, 0
    %p81 = por %p79, %p80
    %s83 = sadd.s32 %s82, 1
    %p86 = scmp.eq.s32.totalorder %s15, 1
    %p87 = scmp.ne.s32.totalorder %s82, %s84
    %p88 = scmp.eq.s32.totalorder %s15, 0
    %p89 = por %p87, %p88
    %p90 = scmp.ne.s32.totalorder %s82, %s84
    %p91 = scmp.eq.s32.totalorder %s20, 1
    %p92 = por %p90, %p91
    %p93 = scmp.ne.s32.totalorder %s84, %s85
    %p94 = scmp.eq.s32.totalorder %s20, 0
    %p95 = por %p93, %p94
    %p96 = scmp.ne.s32.totalorder %s84, %s85
    %p97 = scmp.eq.s32.totalorder %s21, 1
    %p98 = por %p96, %p97
    %p100 = scmp.ne.s32.totalorder %s85, %s99
    %p101 = scmp.eq.s32.totalorder %s21, 0
    %p102 = por %p100, %p101
    %s104 = sadd.s32 %s103, 1
    %p107 = scmp.eq.s32.totalorder %s15, 1
    %p108 = scmp.ne.s32.totalorder %s103, %s105
    %p109 = scmp.eq.s32.totalorder %s15, 0
    %p110 = por %p108, %p109
    %p111 = scmp.ne.s32.totalorder %s103, %s105
    %p112 = scmp.eq.s32.totalorder %s20, 1
    %p113 = por %p111, %p112
    %p114 = scmp.ne.s32.totalorder %s105, %s106
    %p115 = scmp.eq.s32.totalorder %s20, 0
    %p116 = por %p114, %p115
    %p117 = scmp.ne.s32.totalorder %s105, %s106
    %p118 = scmp.eq.s32.totalorder %s21, 1
    %p119 = por %p117, %p118
    %p121 = scmp.ne.s32.totalorder %s106, %s120
    %p122 = scmp.eq.s32.totalorder %s21, 0
    %p123 = por %p121, %p122
    %s125 = sadd.s32 %s124, 1
    %p128 = scmp.eq.s32.totalorder %s15, 1
    %p129 = scmp.ne.s32.totalorder %s124, %s126
    %p130 = scmp.eq.s32.totalorder %s15, 0
    %p131 = por %p129, %p130
    %p132 = scmp.ne.s32.totalorder %s124, %s126
    %p133 = scmp.eq.s32.totalorder %s20, 1
    %p134 = por %p132, %p133
    %p135 = scmp.ne.s32.totalorder %s126, %s127
    %p136 = scmp.eq.s32.totalorder %s20, 0
    %p137 = por %p135, %p136
    %p138 = scmp.ne.s32.totalorder %s126, %s127
    %p139 = scmp.eq.s32.totalorder %s21, 1
    %p140 = por %p138, %p139
    %p142 = scmp.ne.s32.totalorder %s127, %s141
    %p143 = scmp.eq.s32.totalorder %s21, 0
    %p144 = por %p142, %p143
    %s146 = sadd.s32 %s145, 1
    %p149 = scmp.eq.s32.totalorder %s15, 1
    %p150 = scmp.ne.s32.totalorder %s145, %s147
    %p151 = scmp.eq.s32.totalorder %s15, 0
    %p152 = por %p150, %p151
    %p153 = scmp.ne.s32.totalorder %s145, %s147
    %p154 = scmp.eq.s32.totalorder %s20, 1
    %p155 = por %p153, %p154
    %p156 = scmp.ne.s32.totalorder %s147, %s148
    %p157 = scmp.eq.s32.totalorder %s20, 0
    %p158 = por %p156, %p157
    %p159 = scmp.ne.s32.totalorder %s147, %s148
    %p160 = scmp.eq.s32.totalorder %s21, 1
    %p161 = por %p159, %p160
    %p163 = scmp.ne.s32.totalorder %s148, %s162
    %p164 = scmp.eq.s32.totalorder %s21, 0
    %p165 = por %p163, %p164
    %s167 = sadd.s32 %s166, 1
    %p170 = scmp.eq.s32.totalorder %s15, 1
    %p171 = scmp.ne.s32.totalorder %s166, %s168
    %p172 = scmp.eq.s32.totalorder %s15, 0
    %p173 = por %p171, %p172
    %p174 = scmp.ne.s32.totalorder %s166, %s168
    %p175 = scmp.eq.s32.totalorder %s20, 1
    %p176 = por %p174, %p175
    %p177 = scmp.ne.s32.totalorder %s168, %s169
    %p178 = scmp.eq.s32.totalorder %s20, 0
    %p179 = por %p177, %p178
    %p180 = scmp.ne.s32.totalorder %s168, %s169
    %p181 = scmp.eq.s32.totalorder %s21, 1
    %p182 = por %p180, %p181
    %p184 = scmp.ne.s32.totalorder %s169, %s183
    %p185 = scmp.eq.s32.totalorder %s21, 0
    %p186 = por %p184, %p185
    %s188 = sadd.s32 %s187, 1
    %p191 = scmp.eq.s32.totalorder %s15, 1
    %p192 = scmp.ne.s32.totalorder %s187, %s189
    %p193 = scmp.eq.s32.totalorder %s15, 0
    %p194 = por %p192, %p193
    %p195 = scmp.ne.s32.totalorder %s187, %s189
    %p196 = scmp.eq.s32.totalorder %s20, 1
    %p197 = por %p195, %p196
    %p198 = scmp.ne.s32.totalorder %s189, %s190
    %p199 = scmp.eq.s32.totalorder %s20, 0
    %p200 = por %p198, %p199
    %p201 = scmp.ne.s32.totalorder %s189, %s190
    %p202 = scmp.eq.s32.totalorder %s21, 1
    %p203 = por %p201, %p202
    %p205 = scmp.ne.s32.totalorder %s190, %s204
    %p206 = scmp.eq.s32.totalorder %s21, 0
    %p207 = por %p205, %p206
    %s209 = sadd.s32 %s208, 1
    %p212 = scmp.eq.s32.totalorder %s15, 1
    %p213 = scmp.ne.s32.totalorder %s208, %s210
    %p214 = scmp.eq.s32.totalorder %s15, 0
    %p215 = por %p213, %p214
    %p216 = scmp.ne.s32.totalorder %s208, %s210
    %p217 = scmp.eq.s32.totalorder %s20, 1
    %p218 = por %p216, %p217
    %p219 = scmp.ne.s32.totalorder %s210, %s211
    %p220 = scmp.eq.s32.totalorder %s20, 0
    %p221 = por %p219, %p220
    %p222 = scmp.ne.s32.totalorder %s210, %s211
    %p223 = scmp.eq.s32.totalorder %s21, 1
    %p224 = por %p222, %p223
    %p226 = scmp.ne.s32.totalorder %s211, %s225
    %p227 = scmp.eq.s32.totalorder %s21, 0
    %p228 = por %p226, %p227
    %s229 = ssub.s32 %s22, %s34
    %s230 = ssub.s32 %s23, %s30
    %s231 = sor.u32 %s229, %s230
    %p232 = scmp.eq.s32.totalorder %s231, 0
    %s234 = sadd.s32 %s233, 1
    %s235 = scalar_select %p232, %s233, %s234
    %p238 = pneg %p232
    %p239 = scmp.eq.s32.totalorder %s15, 1
    %p240 = por %p238, %p239
    %p241 = scmp.ne.s32.totalorder %s233, %s236
    %p242 = scmp.eq.s32.totalorder %s15, 0
    %p243 = por %p241, %p242
    %p244 = scmp.ne.s32.totalorder %s233, %s236
    %p245 = scmp.eq.s32.totalorder %s20, 1
    %p246 = por %p244, %p245
    %p247 = scmp.ne.s32.totalorder %s236, %s237
    %p248 = scmp.eq.s32.totalorder %s20, 0
    %p249 = por %p247, %p248
    %p250 = scmp.ne.s32.totalorder %s236, %s237
    %p251 = scmp.eq.s32.totalorder %s21, 1
    %p252 = por %p250, %p251
    %p254 = scmp.ne.s32.totalorder %s237, %s253
    %p255 = scmp.eq.s32.totalorder %s21, 0
    %p256 = por %p254, %p255
    %p257 = scmp.le.s32.totalorder 1, %s15
    %p258 = scmp.lt.s32.totalorder %s15, 3
    %p259 = pnand %p257, %p258
    %p260 = pneg %p259
    // Predicated region
    $region9: #{tpu_custom_call.1} parent=5 // pred_check
      _
    $region10: #{tpu_custom_call.1} parent=5 // pred_check_branch
      %262 = sbr.rel (%p259) target = $region12
    $region11: #{tpu_custom_call.1} parent=5 // pred_region
      %s263 = ssub.s32 %s15, 1
      // Predicated region
      $region13: #{tpu_custom_call.1} parent=11 // pred_check
        %p264 = pneg %p74
      $region14: #{tpu_custom_call.1} parent=11 // pred_check_branch
        %266 = sbr.rel (%p264) target = $region16
      $region15: #{tpu_custom_call.1} parent=11 // pred_region
        _
      $region16: #{tpu_custom_call.1} parent=11 // pred_fallthru
        _
      // Predicated region
      $region17: #{tpu_custom_call.1} parent=11 // pred_check
        %p267 = pneg %p95
      $region18: #{tpu_custom_call.1} parent=11 // pred_check_branch
        %269 = sbr.rel (%p267) target = $region20
      $region19: #{tpu_custom_call.1} parent=11 // pred_region
        _
      $region20: #{tpu_custom_call.1} parent=11 // pred_fallthru
        _
      // Predicated region
      $region21: #{tpu_custom_call.1} parent=11 // pred_check
        %p270 = pneg %p116
      $region22: #{tpu_custom_call.1} parent=11 // pred_check_branch
        %272 = sbr.rel (%p270) target = $region24
      $region23: #{tpu_custom_call.1} parent=11 // pred_region
        _
      $region24: #{tpu_custom_call.1} parent=11 // pred_fallthru
        _
      // Predicated region
      $region25: #{tpu_custom_call.1} parent=11 // pred_check
        %p273 = pneg %p137
      $region26: #{tpu_custom_call.1} parent=11 // pred_check_branch
        %275 = sbr.rel (%p273) target = $region28
      $region27: #{tpu_custom_call.1} parent=11 // pred_region
        _
      $region28: #{tpu_custom_call.1} parent=11 // pred_fallthru
        _
      // Predicated region
      $region29: #{tpu_custom_call.1} parent=11 // pred_check
        %p276 = pneg %p158
      $region30: #{tpu_custom_call.1} parent=11 // pred_check_branch
        %278 = sbr.rel (%p276) target = $region32
      $region31: #{tpu_custom_call.1} parent=11 // pred_region
        _
      $region32: #{tpu_custom_call.1} parent=11 // pred_fallthru
        _
      // Predicated region
      $region33: #{tpu_custom_call.1} parent=11 // pred_check
        %p279 = pneg %p179
      $region34: #{tpu_custom_call.1} parent=11 // pred_check_branch
        %281 = sbr.rel (%p279) target = $region36
      $region35: #{tpu_custom_call.1} parent=11 // pred_region
        _
      $region36: #{tpu_custom_call.1} parent=11 // pred_fallthru
        _
      // Predicated region
      $region37: #{tpu_custom_call.1} parent=11 // pred_check
        %p282 = pneg %p200
      $region38: #{tpu_custom_call.1} parent=11 // pred_check_branch
        %284 = sbr.rel (%p282) target = $region40
      $region39: #{tpu_custom_call.1} parent=11 // pred_region
        _
      $region40: #{tpu_custom_call.1} parent=11 // pred_fallthru
        _
      // Predicated region
      $region41: #{tpu_custom_call.1} parent=11 // pred_check
        %p285 = pneg %p221
      $region42: #{tpu_custom_call.1} parent=11 // pred_check_branch
        %287 = sbr.rel (%p285) target = $region44
      $region43: #{tpu_custom_call.1} parent=11 // pred_region
        _
      $region44: #{tpu_custom_call.1} parent=11 // pred_fallthru
        _
    $region12: #{tpu_custom_call.1} parent=5 // pred_fallthru
      _
    %p288 = scmp.lt.s32.totalorder %s15, 2
    // Predicated region
    $region45: #{tpu_custom_call.1} parent=5 // pred_check
      %p289 = pneg %p288
    $region46: #{tpu_custom_call.1} parent=5 // pred_check_branch
      %291 = sbr.rel (%p289) target = $region48
    $region47: #{tpu_custom_call.1} parent=5 // pred_region
      // Predicated region
      $region49: #{tpu_custom_call.1} parent=47 // pred_check
        %p292 = pneg %p47
      $region50: #{tpu_custom_call.1} parent=47 // pred_check_branch
        %294 = sbr.rel (%p292) target = $region52
      $region51: #{tpu_custom_call.1} parent=47 // pred_region
        %p295 = scmp.lt.s32.totalorder %s22, 1
        %s296 = scalar_select %p295, %s22, 1
        %s297 = smul.addr %s296, 16
        %s298 = smul.addr %s297, 8
        %s299 = scalar_lea.vmem %s0, %s298
      $region52: #{tpu_custom_call.1} parent=47 // pred_fallthru
        _
    $region48: #{tpu_custom_call.1} parent=5 // pred_fallthru
      _
    %p300 = scmp.le.s32.totalorder 1, %s15
    %p301 = scmp.lt.s32.totalorder %s15, 3
    %p302 = pnand %p300, %p301
    %p303 = pneg %p302
    // Predicated region
    $region53: #{tpu_custom_call.1} parent=5 // pred_check
      _
    $region54: #{tpu_custom_call.1} parent=5 // pred_check_branch
      %305 = sbr.rel (%p302) target = $region56
    $region55: #{tpu_custom_call.1} parent=5 // pred_region
      %s306 = ssub.s32 %s15, 1
      %p307 = scmp.lt.s32.totalorder %s24, 1
      %s308 = scalar_select %p307, %s24, 1
      %s309 = smul.addr %s308, 16
      %s310 = smul.addr %s309, 8
      %s311 = scalar_lea.vmem %s0, %s310
      %p312 = pneg %p53
      %p313 = pneg %p50
      %p314 = pneg %p74
      %p315 = pneg %p71
      %p316 = pneg %p95
      %p317 = pneg %p92
      %p318 = pneg %p116
      %p319 = pneg %p113
      %p320 = pneg %p137
      %p321 = pneg %p134
      %p322 = pneg %p158
      %p323 = pneg %p155
      %p324 = pneg %p179
      %p325 = pneg %p176
      %p326 = pneg %p200
      %p327 = pneg %p197
      %p328 = pneg %p221
      %p329 = pneg %p218
      %p330 = pneg %p249
      %p331 = pneg %p246
      %s332 = smul.u32 16, %s25
      %p333 = scmp.lt.s32.totalorder %s24, 1
      %s334 = scalar_select %p333, %s24, 1
      %p335 = scmp.lt.s32.totalorder %s332, 15
      %s336 = scalar_select %p335, %s332, 15
      %s337 = smul.addr %s334, 16
      %s338 = sadd.s32 %s336, %s337
      %s339 = smul.addr %s338, 8
      %s340 = scalar_lea.vmem %s9, %s339
      %p341 = scmp.lt.s32.totalorder %s24, 1
      %s342 = scalar_select %p341, %s24, 1
      %s343 = smul.addr %s342, 16
      %s344 = smul.addr %s343, 8
      %s345 = scalar_lea.vmem %s0, %s344
      %s346 = smul.u32 16, %s25
      %p347 = scmp.lt.s32.totalorder %s24, 1
      %s348 = scalar_select %p347, %s24, 1
      %p349 = scmp.lt.s32.totalorder %s346, 15
      %s350 = scalar_select %p349, %s346, 15
      %s351 = smul.addr %s348, 16
      %s352 = sadd.s32 %s350, %s351
      %s353 = smul.addr %s352, 8
      %s354 = scalar_lea.vmem %s9, %s353
      %s355 = smul.u32 16, %s25
      %p356 = scmp.eq.s32.totalorder %s25, 0
      // Predicated region
      $region57: #{tpu_custom_call.1} parent=55 // pred_check
        %p357 = pneg %p356
      $region58: #{tpu_custom_call.1} parent=55 // pred_check_branch
        %359 = sbr.rel (%p357) target = $region60
      $region59: #{tpu_custom_call.1} parent=55 // pred_region
        %v360 = vld [vmem:[%s345] sm:$0xff]
        %v361 = vld [vmem:[%s345 + $0x8] sm:$0xff]
        %v362 = vld [vmem:[%s345 + $0x10] sm:$0xff]
        %v363 = vld [vmem:[%s345 + $0x18] sm:$0xff]
        %v364 = vld [vmem:[%s345 + $0x20] sm:$0xff]
        %v365 = vld [vmem:[%s345 + $0x28] sm:$0xff]
        %v366 = vld [vmem:[%s345 + $0x30] sm:$0xff]
        %v367 = vld [vmem:[%s345 + $0x38] sm:$0xff]
        %v368 = vld [vmem:[%s345 + $0x40] sm:$0xff]
        %v369 = vld [vmem:[%s345 + $0x48] sm:$0xff]
        %v370 = vld [vmem:[%s345 + $0x50] sm:$0xff]
        %v371 = vld [vmem:[%s345 + $0x58] sm:$0xff]
        %v372 = vld [vmem:[%s345 + $0x60] sm:$0xff]
        %v373 = vld [vmem:[%s345 + $0x68] sm:$0xff]
        %v374 = vld [vmem:[%s345 + $0x70] sm:$0xff]
        %v375 = vld [vmem:[%s345 + $0x78] sm:$0xff]
        %v376 = vld [vmem:[%s1] sm:$0xff]
        %v377 = vld [vmem:[%s1 + $0x8] sm:$0xff]
        %v378 = vld [vmem:[%s1 + $0x10] sm:$0xff]
        %v379 = vld [vmem:[%s1 + $0x18] sm:$0xff]
        %v380 = vld [vmem:[%s4] sm:$0x1]
        %v382 = vlaneseq
        %v383 = vshrl.u32 %v382, 7
        %v384 = vsub.s32 0, %v383
        %v385 = vrot.slane %v380, %v384
        %vm387 = vcmask 261120
        %v389 = vsel %vm387, %v360, 0
        %v392 = vsel %vm387, %v361, 0
        %v395 = vsel %vm387, %v362, 0
        %v398 = vsel %vm387, %v363, 0
        %v401 = vsel %vm387, %v364, 0
        %v404 = vsel %vm387, %v365, 0
        %v407 = vsel %vm387, %v366, 0
        %v410 = vsel %vm387, %v367, 0
        %v413 = vsel %vm387, %v368, 0
        %v416 = vsel %vm387, %v369, 0
        %v419 = vsel %vm387, %v370, 0
        %v422 = vsel %vm387, %v371, 0
        %v425 = vsel %vm387, %v372, 0
        %v428 = vsel %vm387, %v373, 0
        %v431 = vsel %vm387, %v374, 0
        %v434 = vsel %vm387, %v375, 0
        %436 = vmatprep.subr.mxu0 0.0
        %437 = vmatpush1.msra.mxu0 %v376
        %438 = vmatprep.subr.mxu0 0.0
        %439 = vmatpush1.msra.mxu0 %v377
        %440 = vmatprep.subr.mxu0 0.0
        %441 = vmatpush1.msra.mxu0 %v378
        %442 = vmatprep.subr.mxu0 0.0
        %443 = vmatpush1.msra.mxu0 %v379
        %444 = vmatprep.subr.mxu0 0.0
        %445 = vmatpush1.msra.mxu0 0.0
        %446 = vmatprep.subr.mxu0 0.0
        %447 = vmatpush1.msra.mxu0 0.0
        %448 = vmatprep.subr.mxu0 0.0
        %449 = vmatpush1.msra.mxu0 0.0
        %450 = vmatprep.subr.mxu0 0.0
        %451 = vmatpush1.msra.mxu0 0.0
        %452 = vmatprep.subr.mxu0 0.0
        %453 = vmatpush1.msra.mxu0 0.0
        %454 = vmatprep.subr.mxu0 0.0
        %455 = vmatpush1.msra.mxu0 0.0
        %456 = vmatprep.subr.mxu0 0.0
        %457 = vmatpush1.msra.mxu0 0.0
        %458 = vmatprep.subr.mxu0 0.0
        %459 = vmatpush1.msra.mxu0 0.0
        %460 = vmatprep.subr.mxu0 0.0
        %461 = vmatpush1.msra.mxu0 0.0
        %462 = vmatprep.subr.mxu0 0.0
        %463 = vmatpush1.msra.mxu0 0.0
        %464 = vmatprep.subr.mxu0 0.0
        %465 = vmatpush1.msra.mxu0 0.0
        %466 = vmatprep.subr.mxu0 0.0
        %467 = vmatpush1.msra.mxu0 0.0
        %468 = vmatprep.subr.mxu0 0.0
        %469 = vmatpush1.msra.mxu0 0.0
        %470 = vmatprep.subr.mxu0 0.0
        %471 = vmatpush1.msra.mxu0 0.0
        %472 = vmatprep.subr.mxu0 0.0
        %473 = vmatpush1.msra.mxu0 0.0
        %474 = vmatprep.subr.mxu0 0.0
        %475 = vmatpush1.msra.mxu0 0.0
        %476 = vmatprep.subr.mxu0 0.0
        %477 = vmatpush1.msra.mxu0 0.0
        %478 = vmatprep.subr.mxu0 0.0
        %479 = vmatpush1.msra.mxu0 0.0
        %480 = vmatprep.subr.mxu0 0.0
        %481 = vmatpush1.msra.mxu0 0.0
        %482 = vmatprep.subr.mxu0 0.0
        %483 = vmatpush1.msra.mxu0 0.0
        %484 = vmatprep.subr.mxu0 0.0
        %485 = vmatpush1.msra.mxu0 0.0
        %486 = vmatprep.subr.mxu0 0.0
        %487 = vmatpush1.msra.mxu0 0.0
        %488 = vmatprep.subr.mxu0 0.0
        %489 = vmatpush1.msra.mxu0 0.0
        %490 = vmatprep.subr.mxu0 0.0
        %491 = vmatpush1.msra.mxu0 0.0
        %492 = vmatprep.subr.mxu0 0.0
        %493 = vmatpush1.msra.mxu0 0.0
        %494 = vmatprep.subr.mxu0 0.0
        %495 = vmatpush1.msra.mxu0 0.0
        %496 = vmatprep.subr.mxu0 0.0
        %497 = vmatpush1.msra.mxu0 0.0
        %498 = vmatprep.subr.mxu0 0.0
        %499 = vmatpush1.msra.mxu0 0.0
        %500 = vmatprep.mubr.f32.mxu0 0.0
        %501 = vmatmul.mubr.f32.gmra.mrb[0].mxu0 %v389
        %v502 = vpop.f32.mrb[0].mxu0
        %v503 = vadd.f32 %v385, %v502
        %v504 = vpop.f32.mrb[0].mxu0
        %505 = vmatprep.mubr.f32.mxu0 0.0
        %506 = vmatmul.mubr.f32.gmra.mrb[0].mxu0 %v392
        %v507 = vpop.f32.mrb[0].mxu0
        %v508 = vadd.f32 %v385, %v507
        %v509 = vpop.f32.mrb[0].mxu0
        %510 = vmatprep.mubr.f32.mxu0 0.0
        %511 = vmatmul.mubr.f32.gmra.mrb[0].mxu0 %v395
        %v512 = vpop.f32.mrb[0].mxu0
        %v513 = vadd.f32 %v385, %v512
        %v514 = vpop.f32.mrb[0].mxu0
        %515 = vmatprep.mubr.f32.mxu0 0.0
        %516 = vmatmul.mubr.f32.gmra.mrb[0].mxu0 %v398
        %v517 = vpop.f32.mrb[0].mxu0
        %v518 = vadd.f32 %v385, %v517
        %v519 = vpop.f32.mrb[0].mxu0
        %520 = vmatprep.mubr.f32.mxu0 0.0
        %521 = vmatmul.mubr.f32.gmra.mrb[0].mxu0 %v401
        %v522 = vpop.f32.mrb[0].mxu0
        %v523 = vadd.f32 %v385, %v522
        %v524 = vpop.f32.mrb[0].mxu0
        %525 = vmatprep.mubr.f32.mxu0 0.0
        %526 = vmatmul.mubr.f32.gmra.mrb[0].mxu0 %v404
        %v527 = vpop.f32.mrb[0].mxu0
        %v528 = vadd.f32 %v385, %v527
        %v529 = vpop.f32.mrb[0].mxu0
        %530 = vmatprep.mubr.f32.mxu0 0.0
        %531 = vmatmul.mubr.f32.gmra.mrb[0].mxu0 %v407
        %v532 = vpop.f32.mrb[0].mxu0
        %v533 = vadd.f32 %v385, %v532
        %v534 = vpop.f32.mrb[0].mxu0
        %535 = vmatprep.mubr.f32.mxu0 0.0
        %536 = vmatmul.mubr.f32.gmra.mrb[0].mxu0 %v410
        %v537 = vpop.f32.mrb[0].mxu0
        %v538 = vadd.f32 %v385, %v537
        %v539 = vpop.f32.mrb[0].mxu0
        %540 = vmatprep.mubr.f32.mxu0 0.0
        %541 = vmatmul.mubr.f32.gmra.mrb[0].mxu0 %v413
        %v542 = vpop.f32.mrb[0].mxu0
        %v543 = vadd.f32 %v385, %v542
        %v544 = vpop.f32.mrb[0].mxu0
        %545 = vmatprep.mubr.f32.mxu0 0.0
        %546 = vmatmul.mubr.f32.gmra.mrb[0].mxu0 %v416
        %v547 = vpop.f32.mrb[0].mxu0
        %v548 = vadd.f32 %v385, %v547
        %v549 = vpop.f32.mrb[0].mxu0
        %550 = vmatprep.mubr.f32.mxu0 0.0
        %551 = vmatmul.mubr.f32.gmra.mrb[0].mxu0 %v419
        %v552 = vpop.f32.mrb[0].mxu0
        %v553 = vadd.f32 %v385, %v552
        %v554 = vpop.f32.mrb[0].mxu0
        %555 = vmatprep.mubr.f32.mxu0 0.0
        %556 = vmatmul.mubr.f32.gmra.mrb[0].mxu0 %v422
        %v557 = vpop.f32.mrb[0].mxu0
        %v558 = vadd.f32 %v385, %v557
        %v559 = vpop.f32.mrb[0].mxu0
        %560 = vmatprep.mubr.f32.mxu0 0.0
        %561 = vmatmul.mubr.f32.gmra.mrb[0].mxu0 %v425
        %v562 = vpop.f32.mrb[0].mxu0
        %v563 = vadd.f32 %v385, %v562
        %v564 = vpop.f32.mrb[0].mxu0
        %565 = vmatprep.mubr.f32.mxu0 0.0
        %566 = vmatmul.mubr.f32.gmra.mrb[0].mxu0 %v428
        %v567 = vpop.f32.mrb[0].mxu0
        %v568 = vadd.f32 %v385, %v567
        %v569 = vpop.f32.mrb[0].mxu0
        %570 = vmatprep.mubr.f32.mxu0 0.0
        %571 = vmatmul.mubr.f32.gmra.mrb[0].mxu0 %v431
        %v572 = vpop.f32.mrb[0].mxu0
        %v573 = vadd.f32 %v385, %v572
        %v574 = vpop.f32.mrb[0].mxu0
        %575 = vmatprep.mubr.f32.mxu0 0.0
        %576 = vmatmul.mubr.f32.gmra.mrb[0].mxu0 %v434
        %v577 = vpop.f32.mrb[0].mxu0
        %v578 = vadd.f32 %v385, %v577
        %v579 = vpop.f32.mrb[0].mxu0
        %580 = vdwg.mxu0
        %v581 = vmul.f32 %v503, 0.35355338
        %v582 = vmul.f32 %v508, 0.35355338
        %v583 = vmul.f32 %v513, 0.35355338
        %v584 = vmul.f32 %v518, 0.35355338
        %v585 = vmul.f32 %v523, 0.35355338
        %v586 = vmul.f32 %v528, 0.35355338
        %v587 = vmul.f32 %v533, 0.35355338
        %v588 = vmul.f32 %v538, 0.35355338
        %v589 = vmul.f32 %v543, 0.35355338
        %v590 = vmul.f32 %v548, 0.35355338
        %v591 = vmul.f32 %v553, 0.35355338
        %v592 = vmul.f32 %v558, 0.35355338
        %v593 = vmul.f32 %v563, 0.35355338
        %v594 = vmul.f32 %v568, 0.35355338
        %v595 = vmul.f32 %v573, 0.35355338
        %v596 = vmul.f32 %v578, 0.35355338
        %vm597 = vcmask 64512
        %598 = vst.msk [vmem:[#allocation2] sm:$0xff] %vm597, %v581
        %599 = vst.msk [vmem:[#allocation2 + $0x8] sm:$0xff] %vm597, %v582
        %600 = vst.msk [vmem:[#allocation2 + $0x10] sm:$0xff] %vm597, %v583
        %601 = vst.msk [vmem:[#allocation2 + $0x18] sm:$0xff] %vm597, %v584
        %602 = vst.msk [vmem:[#allocation2 + $0x20] sm:$0xff] %vm597, %v585
        %603 = vst.msk [vmem:[#allocation2 + $0x28] sm:$0xff] %vm597, %v586
        %604 = vst.msk [vmem:[#allocation2 + $0x30] sm:$0xff] %vm597, %v587
        %605 = vst.msk [vmem:[#allocation2 + $0x38] sm:$0xff] %vm597, %v588
        %606 = vst.msk [vmem:[#allocation2 + $0x40] sm:$0xff] %vm597, %v589
        %607 = vst.msk [vmem:[#allocation2 + $0x48] sm:$0xff] %vm597, %v590
        %608 = vst.msk [vmem:[#allocation2 + $0x50] sm:$0xff] %vm597, %v591
        %609 = vst.msk [vmem:[#allocation2 + $0x58] sm:$0xff] %vm597, %v592
        %610 = vst.msk [vmem:[#allocation2 + $0x60] sm:$0xff] %vm597, %v593
        %611 = vst.msk [vmem:[#allocation2 + $0x68] sm:$0xff] %vm597, %v594
        %612 = vst.msk [vmem:[#allocation2 + $0x70] sm:$0xff] %vm597, %v595
        %613 = vst.msk [vmem:[#allocation2 + $0x78] sm:$0xff] %vm597, %v596
        %630 = vrot.lane.b32.xlu0 %v581, 120
        %v631 = vpop.permute.xlu0 %630
        %632 = vrot.lane.b32.xlu0 %v582, 120
        %v633 = vpop.permute.xlu0 %632
        %634 = vrot.lane.b32.xlu0 %v583, 120
        %v635 = vpop.permute.xlu0 %634
        %636 = vrot.lane.b32.xlu0 %v584, 120
        %v637 = vpop.permute.xlu0 %636
        %638 = vrot.lane.b32.xlu0 %v585, 120
        %v639 = vpop.permute.xlu0 %638
        %640 = vrot.lane.b32.xlu0 %v586, 120
        %v641 = vpop.permute.xlu0 %640
        %642 = vrot.lane.b32.xlu0 %v587, 120
        %v643 = vpop.permute.xlu0 %642
        %644 = vrot.lane.b32.xlu0 %v588, 120
        %v645 = vpop.permute.xlu0 %644
        %646 = vrot.lane.b32.xlu0 %v589, 120
        %v647 = vpop.permute.xlu0 %646
        %648 = vrot.lane.b32.xlu0 %v590, 120
        %v649 = vpop.permute.xlu0 %648
        %650 = vrot.lane.b32.xlu0 %v591, 120
        %v651 = vpop.permute.xlu0 %650
        %652 = vrot.lane.b32.xlu0 %v592, 120
        %v653 = vpop.permute.xlu0 %652
        %654 = vrot.lane.b32.xlu0 %v593, 120
        %v655 = vpop.permute.xlu0 %654
        %656 = vrot.lane.b32.xlu0 %v594, 120
        %v657 = vpop.permute.xlu0 %656
        %658 = vrot.lane.b32.xlu0 %v595, 120
        %v659 = vpop.permute.xlu0 %658
        %660 = vrot.lane.b32.xlu0 %v596, 120
        %v661 = vpop.permute.xlu0 %660
        %s678 = scalar_lea.vmem [#allocation2], 128
        %679 = vst.msk [vmem:[%s678] sm:$0xff] %vm597, %v631
        %680 = vst.msk [vmem:[%s678 + $0x8] sm:$0xff] %vm597, %v633
        %681 = vst.msk [vmem:[%s678 + $0x10] sm:$0xff] %vm597, %v635
        %682 = vst.msk [vmem:[%s678 + $0x18] sm:$0xff] %vm597, %v637
        %683 = vst.msk [vmem:[%s678 + $0x20] sm:$0xff] %vm597, %v639
        %684 = vst.msk [vmem:[%s678 + $0x28] sm:$0xff] %vm597, %v641
        %685 = vst.msk [vmem:[%s678 + $0x30] sm:$0xff] %vm597, %v643
        %686 = vst.msk [vmem:[%s678 + $0x38] sm:$0xff] %vm597, %v645
        %687 = vst.msk [vmem:[%s678 + $0x40] sm:$0xff] %vm597, %v647
        %688 = vst.msk [vmem:[%s678 + $0x48] sm:$0xff] %vm597, %v649
        %689 = vst.msk [vmem:[%s678 + $0x50] sm:$0xff] %vm597, %v651
        %690 = vst.msk [vmem:[%s678 + $0x58] sm:$0xff] %vm597, %v653
        %691 = vst.msk [vmem:[%s678 + $0x60] sm:$0xff] %vm597, %v655
        %692 = vst.msk [vmem:[%s678 + $0x68] sm:$0xff] %vm597, %v657
        %693 = vst.msk [vmem:[%s678 + $0x70] sm:$0xff] %vm597, %v659
        %694 = vst.msk [vmem:[%s678 + $0x78] sm:$0xff] %vm597, %v661
        %695 = vrot.lane.b32.xlu0 %v581, 112
        %v696 = vpop.permute.xlu0 %695
        %697 = vrot.lane.b32.xlu0 %v582, 112
        %v698 = vpop.permute.xlu0 %697
        %699 = vrot.lane.b32.xlu0 %v583, 112
        %v700 = vpop.permute.xlu0 %699
        %701 = vrot.lane.b32.xlu0 %v584, 112
        %v702 = vpop.permute.xlu0 %701
        %703 = vrot.lane.b32.xlu0 %v585, 112
        %v704 = vpop.permute.xlu0 %703
        %705 = vrot.lane.b32.xlu0 %v586, 112
        %v706 = vpop.permute.xlu0 %705
        %707 = vrot.lane.b32.xlu0 %v587, 112
        %v708 = vpop.permute.xlu0 %707
        %709 = vrot.lane.b32.xlu0 %v588, 112
        %v710 = vpop.permute.xlu0 %709
        %711 = vrot.lane.b32.xlu0 %v589, 112
        %v712 = vpop.permute.xlu0 %711
        %713 = vrot.lane.b32.xlu0 %v590, 112
        %v714 = vpop.permute.xlu0 %713
        %715 = vrot.lane.b32.xlu0 %v591, 112
        %v716 = vpop.permute.xlu0 %715
        %717 = vrot.lane.b32.xlu0 %v592, 112
        %v718 = vpop.permute.xlu0 %717
        %719 = vrot.lane.b32.xlu0 %v593, 112
        %v720 = vpop.permute.xlu0 %719
        %721 = vrot.lane.b32.xlu0 %v594, 112
        %v722 = vpop.permute.xlu0 %721
        %723 = vrot.lane.b32.xlu0 %v595, 112
        %v724 = vpop.permute.xlu0 %723
        %725 = vrot.lane.b32.xlu0 %v596, 112
        %v726 = vpop.permute.xlu0 %725
        %s743 = scalar_lea.vmem [#allocation2], 256
        %744 = vst.msk [vmem:[%s743] sm:$0xff] %vm597, %v696
        %745 = vst.msk [vmem:[%s743 + $0x8] sm:$0xff] %vm597, %v698
        %746 = vst.msk [vmem:[%s743 + $0x10] sm:$0xff] %vm597, %v700
        %747 = vst.msk [vmem:[%s743 + $0x18] sm:$0xff] %vm597, %v702
        %748 = vst.msk [vmem:[%s743 + $0x20] sm:$0xff] %vm597, %v704
        %749 = vst.msk [vmem:[%s743 + $0x28] sm:$0xff] %vm597, %v706
        %750 = vst.msk [vmem:[%s743 + $0x30] sm:$0xff] %vm597, %v708
        %751 = vst.msk [vmem:[%s743 + $0x38] sm:$0xff] %vm597, %v710
        %752 = vst.msk [vmem:[%s743 + $0x40] sm:$0xff] %vm597, %v712
        %753 = vst.msk [vmem:[%s743 + $0x48] sm:$0xff] %vm597, %v714
        %754 = vst.msk [vmem:[%s743 + $0x50] sm:$0xff] %vm597, %v716
        %755 = vst.msk [vmem:[%s743 + $0x58] sm:$0xff] %vm597, %v718
        %756 = vst.msk [vmem:[%s743 + $0x60] sm:$0xff] %vm597, %v720
        %757 = vst.msk [vmem:[%s743 + $0x68] sm:$0xff] %vm597, %v722
        %758 = vst.msk [vmem:[%s743 + $0x70] sm:$0xff] %vm597, %v724
        %759 = vst.msk [vmem:[%s743 + $0x78] sm:$0xff] %vm597, %v726
        %760 = vrot.lane.b32.xlu0 %v581, 104
        %v761 = vpop.permute.xlu0 %760
        %762 = vrot.lane.b32.xlu0 %v582, 104
        %v763 = vpop.permute.xlu0 %762
        %764 = vrot.lane.b32.xlu0 %v583, 104
        %v765 = vpop.permute.xlu0 %764
        %766 = vrot.lane.b32.xlu0 %v584, 104
        %v767 = vpop.permute.xlu0 %766
        %768 = vrot.lane.b32.xlu0 %v585, 104
        %v769 = vpop.permute.xlu0 %768
        %770 = vrot.lane.b32.xlu0 %v586, 104
        %v771 = vpop.permute.xlu0 %770
        %772 = vrot.lane.b32.xlu0 %v587, 104
        %v773 = vpop.permute.xlu0 %772
        %774 = vrot.lane.b32.xlu0 %v588, 104
        %v775 = vpop.permute.xlu0 %774
        %776 = vrot.lane.b32.xlu0 %v589, 104
        %v777 = vpop.permute.xlu0 %776
        %778 = vrot.lane.b32.xlu0 %v590, 104
        %v779 = vpop.permute.xlu0 %778
        %780 = vrot.lane.b32.xlu0 %v591, 104
        %v781 = vpop.permute.xlu0 %780
        %782 = vrot.lane.b32.xlu0 %v592, 104
        %v783 = vpop.permute.xlu0 %782
        %784 = vrot.lane.b32.xlu0 %v593, 104
        %v785 = vpop.permute.xlu0 %784
        %786 = vrot.lane.b32.xlu0 %v594, 104
        %v787 = vpop.permute.xlu0 %786
        %788 = vrot.lane.b32.xlu0 %v595, 104
        %v789 = vpop.permute.xlu0 %788
        %790 = vrot.lane.b32.xlu0 %v596, 104
        %v791 = vpop.permute.xlu0 %790
        %s808 = scalar_lea.vmem [#allocation2], 384
        %809 = vst.msk [vmem:[%s808] sm:$0xff] %vm597, %v761
        %810 = vst.msk [vmem:[%s808 + $0x8] sm:$0xff] %vm597, %v763
        %811 = vst.msk [vmem:[%s808 + $0x10] sm:$0xff] %vm597, %v765
        %812 = vst.msk [vmem:[%s808 + $0x18] sm:$0xff] %vm597, %v767
        %813 = vst.msk [vmem:[%s808 + $0x20] sm:$0xff] %vm597, %v769
        %814 = vst.msk [vmem:[%s808 + $0x28] sm:$0xff] %vm597, %v771
        %815 = vst.msk [vmem:[%s808 + $0x30] sm:$0xff] %vm597, %v773
        %816 = vst.msk [vmem:[%s808 + $0x38] sm:$0xff] %vm597, %v775
        %817 = vst.msk [vmem:[%s808 + $0x40] sm:$0xff] %vm597, %v777
        %818 = vst.msk [vmem:[%s808 + $0x48] sm:$0xff] %vm597, %v779
        %819 = vst.msk [vmem:[%s808 + $0x50] sm:$0xff] %vm597, %v781
        %820 = vst.msk [vmem:[%s808 + $0x58] sm:$0xff] %vm597, %v783
        %821 = vst.msk [vmem:[%s808 + $0x60] sm:$0xff] %vm597, %v785
        %822 = vst.msk [vmem:[%s808 + $0x68] sm:$0xff] %vm597, %v787
        %823 = vst.msk [vmem:[%s808 + $0x70] sm:$0xff] %vm597, %v789
        %824 = vst.msk [vmem:[%s808 + $0x78] sm:$0xff] %vm597, %v791
        %v825 = vld [vmem:[%s2] sm:$0xff]
        %v826 = vld [vmem:[%s2 + $0x8] sm:$0xff]
        %v827 = vld [vmem:[%s2 + $0x10] sm:$0xff]
        %v828 = vld [vmem:[%s2 + $0x18] sm:$0xff]
        %v829 = vld [vmem:[%s5] sm:$0x1]
        %v831 = vlaneseq
        %v832 = vshrl.u32 %v831, 7
        %v833 = vsub.s32 0, %v832
        %v834 = vrot.slane %v829, %v833
        %836 = vmatprep.subr.mxu0 0.0
        %837 = vmatpush1.msra.mxu0 %v825
        %838 = vmatprep.subr.mxu0 0.0
        %839 = vmatpush1.msra.mxu0 %v826
        %840 = vmatprep.subr.mxu0 0.0
        %841 = vmatpush1.msra.mxu0 %v827
        %842 = vmatprep.subr.mxu0 0.0
        %843 = vmatpush1.msra.mxu0 %v828
        %844 = vmatprep.subr.mxu0 0.0
        %845 = vmatpush1.msra.mxu0 0.0
        %846 = vmatprep.subr.mxu0 0.0
        %847 = vmatpush1.msra.mxu0 0.0
        %848 = vmatprep.subr.mxu0 0.0
        %849 = vmatpush1.msra.mxu0 0.0
        %850 = vmatprep.subr.mxu0 0.0
        %851 = vmatpush1.msra.mxu0 0.0
        %852 = vmatprep.subr.mxu0 0.0
        %853 = vmatpush1.msra.mxu0 0.0
        %854 = vmatprep.subr.mxu0 0.0
        %855 = vmatpush1.msra.mxu0 0.0
        %856 = vmatprep.subr.mxu0 0.0
        %857 = vmatpush1.msra.mxu0 0.0
        %858 = vmatprep.subr.mxu0 0.0
        %859 = vmatpush1.msra.mxu0 0.0
        %860 = vmatprep.subr.mxu0 0.0
        %861 = vmatpush1.msra.mxu0 0.0
        %862 = vmatprep.subr.mxu0 0.0
        %863 = vmatpush1.msra.mxu0 0.0
        %864 = vmatprep.subr.mxu0 0.0
        %865 = vmatpush1.msra.mxu0 0.0
        %866 = vmatprep.subr.mxu0 0.0
        %867 = vmatpush1.msra.mxu0 0.0
        %868 = vmatprep.subr.mxu0 0.0
        %869 = vmatpush1.msra.mxu0 0.0
        %870 = vmatprep.subr.mxu0 0.0
        %871 = vmatpush1.msra.mxu0 0.0
        %872 = vmatprep.subr.mxu0 0.0
        %873 = vmatpush1.msra.mxu0 0.0
        %874 = vmatprep.subr.mxu0 0.0
        %875 = vmatpush1.msra.mxu0 0.0
        %876 = vmatprep.subr.mxu0 0.0
        %877 = vmatpush1.msra.mxu0 0.0
        %878 = vmatprep.subr.mxu0 0.0
        %879 = vmatpush1.msra.mxu0 0.0
        %880 = vmatprep.subr.mxu0 0.0
        %881 = vmatpush1.msra.mxu0 0.0
        %882 = vmatprep.subr.mxu0 0.0
        %883 = vmatpush1.msra.mxu0 0.0
        %884 = vmatprep.subr.mxu0 0.0
        %885 = vmatpush1.msra.mxu0 0.0
        %886 = vmatprep.subr.mxu0 0.0
        %887 = vmatpush1.msra.mxu0 0.0
        %888 = vmatprep.subr.mxu0 0.0
        %889 = vmatpush1.msra.mxu0 0.0
        %890 = vmatprep.subr.mxu0 0.0
        %891 = vmatpush1.msra.mxu0 0.0
        %892 = vmatprep.subr.mxu0 0.0
        %893 = vmatpush1.msra.mxu0 0.0
        %894 = vmatprep.subr.mxu0 0.0
        %895 = vmatpush1.msra.mxu0 0.0
        %896 = vmatprep.subr.mxu0 0.0
        %897 = vmatpush1.msra.mxu0 0.0
        %898 = vmatprep.subr.mxu0 0.0
        %899 = vmatpush1.msra.mxu0 0.0
        %900 = vmatprep.mubr.f32.mxu0 0.0
        %901 = vmatmul.mubr.f32.gmra.mrb[0].mxu0 %v389
        %v902 = vpop.f32.mrb[0].mxu0
        %v903 = vadd.f32 %v834, %v902
        %v904 = vpop.f32.mrb[0].mxu0
        %905 = vmatprep.mubr.f32.mxu0 0.0
        %906 = vmatmul.mubr.f32.gmra.mrb[0].mxu0 %v392
        %v907 = vpop.f32.mrb[0].mxu0
        %v908 = vadd.f32 %v834, %v907
        %v909 = vpop.f32.mrb[0].mxu0
        %910 = vmatprep.mubr.f32.mxu0 0.0
        %911 = vmatmul.mubr.f32.gmra.mrb[0].mxu0 %v395
        %v912 = vpop.f32.mrb[0].mxu0
        %v913 = vadd.f32 %v834, %v912
        %v914 = vpop.f32.mrb[0].mxu0
        %915 = vmatprep.mubr.f32.mxu0 0.0
        %916 = vmatmul.mubr.f32.gmra.mrb[0].mxu0 %v398
        %v917 = vpop.f32.mrb[0].mxu0
        %v918 = vadd.f32 %v834, %v917
        %v919 = vpop.f32.mrb[0].mxu0
        %920 = vmatprep.mubr.f32.mxu0 0.0
        %921 = vmatmul.mubr.f32.gmra.mrb[0].mxu0 %v401
        %v922 = vpop.f32.mrb[0].mxu0
        %v923 = vadd.f32 %v834, %v922
        %v924 = vpop.f32.mrb[0].mxu0
        %925 = vmatprep.mubr.f32.mxu0 0.0
        %926 = vmatmul.mubr.f32.gmra.mrb[0].mxu0 %v404
        %v927 = vpop.f32.mrb[0].mxu0
        %v928 = vadd.f32 %v834, %v927
        %v929 = vpop.f32.mrb[0].mxu0
        %930 = vmatprep.mubr.f32.mxu0 0.0
        %931 = vmatmul.mubr.f32.gmra.mrb[0].mxu0 %v407
        %v932 = vpop.f32.mrb[0].mxu0
        %v933 = vadd.f32 %v834, %v932
        %v934 = vpop.f32.mrb[0].mxu0
        %935 = vmatprep.mubr.f32.mxu0 0.0
        %936 = vmatmul.mubr.f32.gmra.mrb[0].mxu0 %v410
        %v937 = vpop.f32.mrb[0].mxu0
        %v938 = vadd.f32 %v834, %v937
        %v939 = vpop.f32.mrb[0].mxu0
        %940 = vmatprep.mubr.f32.mxu0 0.0
        %941 = vmatmul.mubr.f32.gmra.mrb[0].mxu0 %v413
        %v942 = vpop.f32.mrb[0].mxu0
        %v943 = vadd.f32 %v834, %v942
        %v944 = vpop.f32.mrb[0].mxu0
        %945 = vmatprep.mubr.f32.mxu0 0.0
        %946 = vmatmul.mubr.f32.gmra.mrb[0].mxu0 %v416
        %v947 = vpop.f32.mrb[0].mxu0
        %v948 = vadd.f32 %v834, %v947
        %v949 = vpop.f32.mrb[0].mxu0
        %950 = vmatprep.mubr.f32.mxu0 0.0
        %951 = vmatmul.mubr.f32.gmra.mrb[0].mxu0 %v419
        %v952 = vpop.f32.mrb[0].mxu0
        %v953 = vadd.f32 %v834, %v952
        %v954 = vpop.f32.mrb[0].mxu0
        %955 = vmatprep.mubr.f32.mxu0 0.0
        %956 = vmatmul.mubr.f32.gmra.mrb[0].mxu0 %v422
        %v957 = vpop.f32.mrb[0].mxu0
        %v958 = vadd.f32 %v834, %v957
        %v959 = vpop.f32.mrb[0].mxu0
        %960 = vmatprep.mubr.f32.mxu0 0.0
        %961 = vmatmul.mubr.f32.gmra.mrb[0].mxu0 %v425
        %v962 = vpop.f32.mrb[0].mxu0
        %v963 = vadd.f32 %v834, %v962
        %v964 = vpop.f32.mrb[0].mxu0
        %965 = vmatprep.mubr.f32.mxu0 0.0
        %966 = vmatmul.mubr.f32.gmra.mrb[0].mxu0 %v428
        %v967 = vpop.f32.mrb[0].mxu0
        %v968 = vadd.f32 %v834, %v967
        %v969 = vpop.f32.mrb[0].mxu0
        %970 = vmatprep.mubr.f32.mxu0 0.0
        %971 = vmatmul.mubr.f32.gmra.mrb[0].mxu0 %v431
        %v972 = vpop.f32.mrb[0].mxu0
        %v973 = vadd.f32 %v834, %v972
        %v974 = vpop.f32.mrb[0].mxu0
        %975 = vmatprep.mubr.f32.mxu0 0.0
        %976 = vmatmul.mubr.f32.gmra.mrb[0].mxu0 %v434
        %v977 = vpop.f32.mrb[0].mxu0
        %v978 = vadd.f32 %v834, %v977
        %v979 = vpop.f32.mrb[0].mxu0
        %980 = vdwg.mxu0
        %981 = vst.msk [vmem:[#allocation3] sm:$0xff] %vm597, %v903
        %982 = vst.msk [vmem:[#allocation3 + $0x8] sm:$0xff] %vm597, %v908
        %983 = vst.msk [vmem:[#allocation3 + $0x10] sm:$0xff] %vm597, %v913
        %984 = vst.msk [vmem:[#allocation3 + $0x18] sm:$0xff] %vm597, %v918
        %985 = vst.msk [vmem:[#allocation3 + $0x20] sm:$0xff] %vm597, %v923
        %986 = vst.msk [vmem:[#allocation3 + $0x28] sm:$0xff] %vm597, %v928
        %987 = vst.msk [vmem:[#allocation3 + $0x30] sm:$0xff] %vm597, %v933
        %988 = vst.msk [vmem:[#allocation3 + $0x38] sm:$0xff] %vm597, %v938
        %989 = vst.msk [vmem:[#allocation3 + $0x40] sm:$0xff] %vm597, %v943
        %990 = vst.msk [vmem:[#allocation3 + $0x48] sm:$0xff] %vm597, %v948
        %991 = vst.msk [vmem:[#allocation3 + $0x50] sm:$0xff] %vm597, %v953
        %992 = vst.msk [vmem:[#allocation3 + $0x58] sm:$0xff] %vm597, %v958
        %993 = vst.msk [vmem:[#allocation3 + $0x60] sm:$0xff] %vm597, %v963
        %994 = vst.msk [vmem:[#allocation3 + $0x68] sm:$0xff] %vm597, %v968
        %995 = vst.msk [vmem:[#allocation3 + $0x70] sm:$0xff] %vm597, %v973
        %996 = vst.msk [vmem:[#allocation3 + $0x78] sm:$0xff] %vm597, %v978
        %1013 = vrot.lane.b32.xlu0 %v903, 120
        %v1014 = vpop.permute.xlu0 %1013
        %1015 = vrot.lane.b32.xlu0 %v908, 120
        %v1016 = vpop.permute.xlu0 %1015
        %1017 = vrot.lane.b32.xlu0 %v913, 120
        %v1018 = vpop.permute.xlu0 %1017
        %1019 = vrot.lane.b32.xlu0 %v918, 120
        %v1020 = vpop.permute.xlu0 %1019
        %1021 = vrot.lane.b32.xlu0 %v923, 120
        %v1022 = vpop.permute.xlu0 %1021
        %1023 = vrot.lane.b32.xlu0 %v928, 120
        %v1024 = vpop.permute.xlu0 %1023
        %1025 = vrot.lane.b32.xlu0 %v933, 120
        %v1026 = vpop.permute.xlu0 %1025
        %1027 = vrot.lane.b32.xlu0 %v938, 120
        %v1028 = vpop.permute.xlu0 %1027
        %1029 = vrot.lane.b32.xlu0 %v943, 120
        %v1030 = vpop.permute.xlu0 %1029
        %1031 = vrot.lane.b32.xlu0 %v948, 120
        %v1032 = vpop.permute.xlu0 %1031
        %1033 = vrot.lane.b32.xlu0 %v953, 120
        %v1034 = vpop.permute.xlu0 %1033
        %1035 = vrot.lane.b32.xlu0 %v958, 120
        %v1036 = vpop.permute.xlu0 %1035
        %1037 = vrot.lane.b32.xlu0 %v963, 120
        %v1038 = vpop.permute.xlu0 %1037
        %1039 = vrot.lane.b32.xlu0 %v968, 120
        %v1040 = vpop.permute.xlu0 %1039
        %1041 = vrot.lane.b32.xlu0 %v973, 120
        %v1042 = vpop.permute.xlu0 %1041
        %1043 = vrot.lane.b32.xlu0 %v978, 120
        %v1044 = vpop.permute.xlu0 %1043
        %s1061 = scalar_lea.vmem [#allocation3], 128
        %1062 = vst.msk [vmem:[%s1061] sm:$0xff] %vm597, %v1014
        %1063 = vst.msk [vmem:[%s1061 + $0x8] sm:$0xff] %vm597, %v1016
        %1064 = vst.msk [vmem:[%s1061 + $0x10] sm:$0xff] %vm597, %v1018
        %1065 = vst.msk [vmem:[%s1061 + $0x18] sm:$0xff] %vm597, %v1020
        %1066 = vst.msk [vmem:[%s1061 + $0x20] sm:$0xff] %vm597, %v1022
        %1067 = vst.msk [vmem:[%s1061 + $0x28] sm:$0xff] %vm597, %v1024
        %1068 = vst.msk [vmem:[%s1061 + $0x30] sm:$0xff] %vm597, %v1026
        %1069 = vst.msk [vmem:[%s1061 + $0x38] sm:$0xff] %vm597, %v1028
        %1070 = vst.msk [vmem:[%s1061 + $0x40] sm:$0xff] %vm597, %v1030
        %1071 = vst.msk [vmem:[%s1061 + $0x48] sm:$0xff] %vm597, %v1032
        %1072 = vst.msk [vmem:[%s1061 + $0x50] sm:$0xff] %vm597, %v1034
        %1073 = vst.msk [vmem:[%s1061 + $0x58] sm:$0xff] %vm597, %v1036
        %1074 = vst.msk [vmem:[%s1061 + $0x60] sm:$0xff] %vm597, %v1038
        %1075 = vst.msk [vmem:[%s1061 + $0x68] sm:$0xff] %vm597, %v1040
        %1076 = vst.msk [vmem:[%s1061 + $0x70] sm:$0xff] %vm597, %v1042
        %1077 = vst.msk [vmem:[%s1061 + $0x78] sm:$0xff] %vm597, %v1044
        %1078 = vrot.lane.b32.xlu0 %v903, 112
        %v1079 = vpop.permute.xlu0 %1078
        %1080 = vrot.lane.b32.xlu0 %v908, 112
        %v1081 = vpop.permute.xlu0 %1080
        %1082 = vrot.lane.b32.xlu0 %v913, 112
        %v1083 = vpop.permute.xlu0 %1082
        %1084 = vrot.lane.b32.xlu0 %v918, 112
        %v1085 = vpop.permute.xlu0 %1084
        %1086 = vrot.lane.b32.xlu0 %v923, 112
        %v1087 = vpop.permute.xlu0 %1086
        %1088 = vrot.lane.b32.xlu0 %v928, 112
        %v1089 = vpop.permute.xlu0 %1088
        %1090 = vrot.lane.b32.xlu0 %v933, 112
        %v1091 = vpop.permute.xlu0 %1090
        %1092 = vrot.lane.b32.xlu0 %v938, 112
        %v1093 = vpop.permute.xlu0 %1092
        %1094 = vrot.lane.b32.xlu0 %v943, 112
        %v1095 = vpop.permute.xlu0 %1094
        %1096 = vrot.lane.b32.xlu0 %v948, 112
        %v1097 = vpop.permute.xlu0 %1096
        %1098 = vrot.lane.b32.xlu0 %v953, 112
        %v1099 = vpop.permute.xlu0 %1098
        %1100 = vrot.lane.b32.xlu0 %v958, 112
        %v1101 = vpop.permute.xlu0 %1100
        %1102 = vrot.lane.b32.xlu0 %v963, 112
        %v1103 = vpop.permute.xlu0 %1102
        %1104 = vrot.lane.b32.xlu0 %v968, 112
        %v1105 = vpop.permute.xlu0 %1104
        %1106 = vrot.lane.b32.xlu0 %v973, 112
        %v1107 = vpop.permute.xlu0 %1106
        %1108 = vrot.lane.b32.xlu0 %v978, 112
        %v1109 = vpop.permute.xlu0 %1108
        %s1126 = scalar_lea.vmem [#allocation3], 256
        %1127 = vst.msk [vmem:[%s1126] sm:$0xff] %vm597, %v1079
        %1128 = vst.msk [vmem:[%s1126 + $0x8] sm:$0xff] %vm597, %v1081
        %1129 = vst.msk [vmem:[%s1126 + $0x10] sm:$0xff] %vm597, %v1083
        %1130 = vst.msk [vmem:[%s1126 + $0x18] sm:$0xff] %vm597, %v1085
        %1131 = vst.msk [vmem:[%s1126 + $0x20] sm:$0xff] %vm597, %v1087
        %1132 = vst.msk [vmem:[%s1126 + $0x28] sm:$0xff] %vm597, %v1089
        %1133 = vst.msk [vmem:[%s1126 + $0x30] sm:$0xff] %vm597, %v1091
        %1134 = vst.msk [vmem:[%s1126 + $0x38] sm:$0xff] %vm597, %v1093
        %1135 = vst.msk [vmem:[%s1126 + $0x40] sm:$0xff] %vm597, %v1095
        %1136 = vst.msk [vmem:[%s1126 + $0x48] sm:$0xff] %vm597, %v1097
        %1137 = vst.msk [vmem:[%s1126 + $0x50] sm:$0xff] %vm597, %v1099
        %1138 = vst.msk [vmem:[%s1126 + $0x58] sm:$0xff] %vm597, %v1101
        %1139 = vst.msk [vmem:[%s1126 + $0x60] sm:$0xff] %vm597, %v1103
        %1140 = vst.msk [vmem:[%s1126 + $0x68] sm:$0xff] %vm597, %v1105
        %1141 = vst.msk [vmem:[%s1126 + $0x70] sm:$0xff] %vm597, %v1107
        %1142 = vst.msk [vmem:[%s1126 + $0x78] sm:$0xff] %vm597, %v1109
        %1143 = vrot.lane.b32.xlu0 %v903, 104
        %v1144 = vpop.permute.xlu0 %1143
        %1145 = vrot.lane.b32.xlu0 %v908, 104
        %v1146 = vpop.permute.xlu0 %1145
        %1147 = vrot.lane.b32.xlu0 %v913, 104
        %v1148 = vpop.permute.xlu0 %1147
        %1149 = vrot.lane.b32.xlu0 %v918, 104
        %v1150 = vpop.permute.xlu0 %1149
        %1151 = vrot.lane.b32.xlu0 %v923, 104
        %v1152 = vpop.permute.xlu0 %1151
        %1153 = vrot.lane.b32.xlu0 %v928, 104
        %v1154 = vpop.permute.xlu0 %1153
        %1155 = vrot.lane.b32.xlu0 %v933, 104
        %v1156 = vpop.permute.xlu0 %1155
        %1157 = vrot.lane.b32.xlu0 %v938, 104
        %v1158 = vpop.permute.xlu0 %1157
        %1159 = vrot.lane.b32.xlu0 %v943, 104
        %v1160 = vpop.permute.xlu0 %1159
        %1161 = vrot.lane.b32.xlu0 %v948, 104
        %v1162 = vpop.permute.xlu0 %1161
        %1163 = vrot.lane.b32.xlu0 %v953, 104
        %v1164 = vpop.permute.xlu0 %1163
        %1165 = vrot.lane.b32.xlu0 %v958, 104
        %v1166 = vpop.permute.xlu0 %1165
        %1167 = vrot.lane.b32.xlu0 %v963, 104
        %v1168 = vpop.permute.xlu0 %1167
        %1169 = vrot.lane.b32.xlu0 %v968, 104
        %v1170 = vpop.permute.xlu0 %1169
        %1171 = vrot.lane.b32.xlu0 %v973, 104
        %v1172 = vpop.permute.xlu0 %1171
        %1173 = vrot.lane.b32.xlu0 %v978, 104
        %v1174 = vpop.permute.xlu0 %1173
        %s1191 = scalar_lea.vmem [#allocation3], 384
        %1192 = vst.msk [vmem:[%s1191] sm:$0xff] %vm597, %v1144
        %1193 = vst.msk [vmem:[%s1191 + $0x8] sm:$0xff] %vm597, %v1146
        %1194 = vst.msk [vmem:[%s1191 + $0x10] sm:$0xff] %vm597, %v1148
        %1195 = vst.msk [vmem:[%s1191 + $0x18] sm:$0xff] %vm597, %v1150
        %1196 = vst.msk [vmem:[%s1191 + $0x20] sm:$0xff] %vm597, %v1152
        %1197 = vst.msk [vmem:[%s1191 + $0x28] sm:$0xff] %vm597, %v1154
        %1198 = vst.msk [vmem:[%s1191 + $0x30] sm:$0xff] %vm597, %v1156
        %1199 = vst.msk [vmem:[%s1191 + $0x38] sm:$0xff] %vm597, %v1158
        %1200 = vst.msk [vmem:[%s1191 + $0x40] sm:$0xff] %vm597, %v1160
        %1201 = vst.msk [vmem:[%s1191 + $0x48] sm:$0xff] %vm597, %v1162
        %1202 = vst.msk [vmem:[%s1191 + $0x50] sm:$0xff] %vm597, %v1164
        %1203 = vst.msk [vmem:[%s1191 + $0x58] sm:$0xff] %vm597, %v1166
        %1204 = vst.msk [vmem:[%s1191 + $0x60] sm:$0xff] %vm597, %v1168
        %1205 = vst.msk [vmem:[%s1191 + $0x68] sm:$0xff] %vm597, %v1170
        %1206 = vst.msk [vmem:[%s1191 + $0x70] sm:$0xff] %vm597, %v1172
        %1207 = vst.msk [vmem:[%s1191 + $0x78] sm:$0xff] %vm597, %v1174
        %v1208 = vld [vmem:[%s3] sm:$0xff]
        %v1209 = vld [vmem:[%s3 + $0x8] sm:$0xff]
        %v1210 = vld [vmem:[%s3 + $0x10] sm:$0xff]
        %v1211 = vld [vmem:[%s3 + $0x18] sm:$0xff]
        %v1212 = vld [vmem:[%s6] sm:$0x1]
        %v1214 = vlaneseq
        %v1215 = vshrl.u32 %v1214, 7
        %v1216 = vsub.s32 0, %v1215
        %v1217 = vrot.slane %v1212, %v1216
        %1219 = vmatprep.subr.mxu0 0.0
        %1220 = vmatpush1.msra.mxu0 %v1208
        %1221 = vmatprep.subr.mxu0 0.0
        %1222 = vmatpush1.msra.mxu0 %v1209
        %1223 = vmatprep.subr.mxu0 0.0
        %1224 = vmatpush1.msra.mxu0 %v1210
        %1225 = vmatprep.subr.mxu0 0.0
        %1226 = vmatpush1.msra.mxu0 %v1211
        %1227 = vmatprep.subr.mxu0 0.0
        %1228 = vmatpush1.msra.mxu0 0.0
        %1229 = vmatprep.subr.mxu0 0.0
        %1230 = vmatpush1.msra.mxu0 0.0
        %1231 = vmatprep.subr.mxu0 0.0
        %1232 = vmatpush1.msra.mxu0 0.0
        %1233 = vmatprep.subr.mxu0 0.0
        %1234 = vmatpush1.msra.mxu0 0.0
        %1235 = vmatprep.subr.mxu0 0.0
        %1236 = vmatpush1.msra.mxu0 0.0
        %1237 = vmatprep.subr.mxu0 0.0
        %1238 = vmatpush1.msra.mxu0 0.0
        %1239 = vmatprep.subr.mxu0 0.0
        %1240 = vmatpush1.msra.mxu0 0.0
        %1241 = vmatprep.subr.mxu0 0.0
        %1242 = vmatpush1.msra.mxu0 0.0
        %1243 = vmatprep.subr.mxu0 0.0
        %1244 = vmatpush1.msra.mxu0 0.0
        %1245 = vmatprep.subr.mxu0 0.0
        %1246 = vmatpush1.msra.mxu0 0.0
        %1247 = vmatprep.subr.mxu0 0.0
        %1248 = vmatpush1.msra.mxu0 0.0
        %1249 = vmatprep.subr.mxu0 0.0
        %1250 = vmatpush1.msra.mxu0 0.0
        %1251 = vmatprep.subr.mxu0 0.0
        %1252 = vmatpush1.msra.mxu0 0.0
        %1253 = vmatprep.subr.mxu0 0.0
        %1254 = vmatpush1.msra.mxu0 0.0
        %1255 = vmatprep.subr.mxu0 0.0
        %1256 = vmatpush1.msra.mxu0 0.0
        %1257 = vmatprep.subr.mxu0 0.0
        %1258 = vmatpush1.msra.mxu0 0.0
        %1259 = vmatprep.subr.mxu0 0.0
        %1260 = vmatpush1.msra.mxu0 0.0
        %1261 = vmatprep.subr.mxu0 0.0
        %1262 = vmatpush1.msra.mxu0 0.0
        %1263 = vmatprep.subr.mxu0 0.0
        %1264 = vmatpush1.msra.mxu0 0.0
        %1265 = vmatprep.subr.mxu0 0.0
        %1266 = vmatpush1.msra.mxu0 0.0
        %1267 = vmatprep.subr.mxu0 0.0
        %1268 = vmatpush1.msra.mxu0 0.0
        %1269 = vmatprep.subr.mxu0 0.0
        %1270 = vmatpush1.msra.mxu0 0.0
        %1271 = vmatprep.subr.mxu0 0.0
        %1272 = vmatpush1.msra.mxu0 0.0
        %1273 = vmatprep.subr.mxu0 0.0
        %1274 = vmatpush1.msra.mxu0 0.0
        %1275 = vmatprep.subr.mxu0 0.0
        %1276 = vmatpush1.msra.mxu0 0.0
        %1277 = vmatprep.subr.mxu0 0.0
        %1278 = vmatpush1.msra.mxu0 0.0
        %1279 = vmatprep.subr.mxu0 0.0
        %1280 = vmatpush1.msra.mxu0 0.0
        %1281 = vmatprep.subr.mxu0 0.0
        %1282 = vmatpush1.msra.mxu0 0.0
        %1283 = vmatprep.mubr.f32.mxu0 0.0
        %1284 = vmatmul.mubr.f32.gmra.mrb[0].mxu0 %v389
        %v1285 = vpop.f32.mrb[0].mxu0
        %v1286 = vadd.f32 %v1217, %v1285
        %v1287 = vpop.f32.mrb[0].mxu0
        %1288 = vmatprep.mubr.f32.mxu0 0.0
        %1289 = vmatmul.mubr.f32.gmra.mrb[0].mxu0 %v392
        %v1290 = vpop.f32.mrb[0].mxu0
        %v1291 = vadd.f32 %v1217, %v1290
        %v1292 = vpop.f32.mrb[0].mxu0
        %1293 = vmatprep.mubr.f32.mxu0 0.0
        %1294 = vmatmul.mubr.f32.gmra.mrb[0].mxu0 %v395
        %v1295 = vpop.f32.mrb[0].mxu0
        %v1296 = vadd.f32 %v1217, %v1295
        %v1297 = vpop.f32.mrb[0].mxu0
        %1298 = vmatprep.mubr.f32.mxu0 0.0
        %1299 = vmatmul.mubr.f32.gmra.mrb[0].mxu0 %v398
        %v1300 = vpop.f32.mrb[0].mxu0
        %v1301 = vadd.f32 %v1217, %v1300
        %v1302 = vpop.f32.mrb[0].mxu0
        %1303 = vmatprep.mubr.f32.mxu0 0.0
        %1304 = vmatmul.mubr.f32.gmra.mrb[0].mxu0 %v401
        %v1305 = vpop.f32.mrb[0].mxu0
        %v1306 = vadd.f32 %v1217, %v1305
        %v1307 = vpop.f32.mrb[0].mxu0
        %1308 = vmatprep.mubr.f32.mxu0 0.0
        %1309 = vmatmul.mubr.f32.gmra.mrb[0].mxu0 %v404
        %v1310 = vpop.f32.mrb[0].mxu0
        %v1311 = vadd.f32 %v1217, %v1310
        %v1312 = vpop.f32.mrb[0].mxu0
        %1313 = vmatprep.mubr.f32.mxu0 0.0
        %1314 = vmatmul.mubr.f32.gmra.mrb[0].mxu0 %v407
        %v1315 = vpop.f32.mrb[0].mxu0
        %v1316 = vadd.f32 %v1217, %v1315
        %v1317 = vpop.f32.mrb[0].mxu0
        %1318 = vmatprep.mubr.f32.mxu0 0.0
        %1319 = vmatmul.mubr.f32.gmra.mrb[0].mxu0 %v410
        %v1320 = vpop.f32.mrb[0].mxu0
        %v1321 = vadd.f32 %v1217, %v1320
        %v1322 = vpop.f32.mrb[0].mxu0
        %1323 = vmatprep.mubr.f32.mxu0 0.0
        %1324 = vmatmul.mubr.f32.gmra.mrb[0].mxu0 %v413
        %v1325 = vpop.f32.mrb[0].mxu0
        %v1326 = vadd.f32 %v1217, %v1325
        %v1327 = vpop.f32.mrb[0].mxu0
        %1328 = vmatprep.mubr.f32.mxu0 0.0
        %1329 = vmatmul.mubr.f32.gmra.mrb[0].mxu0 %v416
        %v1330 = vpop.f32.mrb[0].mxu0
        %v1331 = vadd.f32 %v1217, %v1330
        %v1332 = vpop.f32.mrb[0].mxu0
        %1333 = vmatprep.mubr.f32.mxu0 0.0
        %1334 = vmatmul.mubr.f32.gmra.mrb[0].mxu0 %v419
        %v1335 = vpop.f32.mrb[0].mxu0
        %v1336 = vadd.f32 %v1217, %v1335
        %v1337 = vpop.f32.mrb[0].mxu0
        %1338 = vmatprep.mubr.f32.mxu0 0.0
        %1339 = vmatmul.mubr.f32.gmra.mrb[0].mxu0 %v422
        %v1340 = vpop.f32.mrb[0].mxu0
        %v1341 = vadd.f32 %v1217, %v1340
        %v1342 = vpop.f32.mrb[0].mxu0
        %1343 = vmatprep.mubr.f32.mxu0 0.0
        %1344 = vmatmul.mubr.f32.gmra.mrb[0].mxu0 %v425
        %v1345 = vpop.f32.mrb[0].mxu0
        %v1346 = vadd.f32 %v1217, %v1345
        %v1347 = vpop.f32.mrb[0].mxu0
        %1348 = vmatprep.mubr.f32.mxu0 0.0
        %1349 = vmatmul.mubr.f32.gmra.mrb[0].mxu0 %v428
        %v1350 = vpop.f32.mrb[0].mxu0
        %v1351 = vadd.f32 %v1217, %v1350
        %v1352 = vpop.f32.mrb[0].mxu0
        %1353 = vmatprep.mubr.f32.mxu0 0.0
        %1354 = vmatmul.mubr.f32.gmra.mrb[0].mxu0 %v431
        %v1355 = vpop.f32.mrb[0].mxu0
        %v1356 = vadd.f32 %v1217, %v1355
        %v1357 = vpop.f32.mrb[0].mxu0
        %1358 = vmatprep.mubr.f32.mxu0 0.0
        %1359 = vmatmul.mubr.f32.gmra.mrb[0].mxu0 %v434
        %v1360 = vpop.f32.mrb[0].mxu0
        %v1361 = vadd.f32 %v1217, %v1360
        %v1362 = vpop.f32.mrb[0].mxu0
        %1363 = vdwg.mxu0
        %1364 = vst.msk [vmem:[#allocation4] sm:$0xff] %vm597, %v1286
        %1365 = vst.msk [vmem:[#allocation4 + $0x8] sm:$0xff] %vm597, %v1291
        %1366 = vst.msk [vmem:[#allocation4 + $0x10] sm:$0xff] %vm597, %v1296
        %1367 = vst.msk [vmem:[#allocation4 + $0x18] sm:$0xff] %vm597, %v1301
        %1368 = vst.msk [vmem:[#allocation4 + $0x20] sm:$0xff] %vm597, %v1306
        %1369 = vst.msk [vmem:[#allocation4 + $0x28] sm:$0xff] %vm597, %v1311
        %1370 = vst.msk [vmem:[#allocation4 + $0x30] sm:$0xff] %vm597, %v1316
        %1371 = vst.msk [vmem:[#allocation4 + $0x38] sm:$0xff] %vm597, %v1321
        %1372 = vst.msk [vmem:[#allocation4 + $0x40] sm:$0xff] %vm597, %v1326
        %1373 = vst.msk [vmem:[#allocation4 + $0x48] sm:$0xff] %vm597, %v1331
        %1374 = vst.msk [vmem:[#allocation4 + $0x50] sm:$0xff] %vm597, %v1336
        %1375 = vst.msk [vmem:[#allocation4 + $0x58] sm:$0xff] %vm597, %v1341
        %1376 = vst.msk [vmem:[#allocation4 + $0x60] sm:$0xff] %vm597, %v1346
        %1377 = vst.msk [vmem:[#allocation4 + $0x68] sm:$0xff] %vm597, %v1351
        %1378 = vst.msk [vmem:[#allocation4 + $0x70] sm:$0xff] %vm597, %v1356
        %1379 = vst.msk [vmem:[#allocation4 + $0x78] sm:$0xff] %vm597, %v1361
        %1396 = vrot.lane.b32.xlu0 %v1286, 120
        %v1397 = vpop.permute.xlu0 %1396
        %1398 = vrot.lane.b32.xlu0 %v1291, 120
        %v1399 = vpop.permute.xlu0 %1398
        %1400 = vrot.lane.b32.xlu0 %v1296, 120
        %v1401 = vpop.permute.xlu0 %1400
        %1402 = vrot.lane.b32.xlu0 %v1301, 120
        %v1403 = vpop.permute.xlu0 %1402
        %1404 = vrot.lane.b32.xlu0 %v1306, 120
        %v1405 = vpop.permute.xlu0 %1404
        %1406 = vrot.lane.b32.xlu0 %v1311, 120
        %v1407 = vpop.permute.xlu0 %1406
        %1408 = vrot.lane.b32.xlu0 %v1316, 120
        %v1409 = vpop.permute.xlu0 %1408
        %1410 = vrot.lane.b32.xlu0 %v1321, 120
        %v1411 = vpop.permute.xlu0 %1410
        %1412 = vrot.lane.b32.xlu0 %v1326, 120
        %v1413 = vpop.permute.xlu0 %1412
        %1414 = vrot.lane.b32.xlu0 %v1331, 120
        %v1415 = vpop.permute.xlu0 %1414
        %1416 = vrot.lane.b32.xlu0 %v1336, 120
        %v1417 = vpop.permute.xlu0 %1416
        %1418 = vrot.lane.b32.xlu0 %v1341, 120
        %v1419 = vpop.permute.xlu0 %1418
        %1420 = vrot.lane.b32.xlu0 %v1346, 120
        %v1421 = vpop.permute.xlu0 %1420
        %1422 = vrot.lane.b32.xlu0 %v1351, 120
        %v1423 = vpop.permute.xlu0 %1422
        %1424 = vrot.lane.b32.xlu0 %v1356, 120
        %v1425 = vpop.permute.xlu0 %1424
        %1426 = vrot.lane.b32.xlu0 %v1361, 120
        %v1427 = vpop.permute.xlu0 %1426
        %s1444 = scalar_lea.vmem [#allocation4], 128
        %1445 = vst.msk [vmem:[%s1444] sm:$0xff] %vm597, %v1397
        %1446 = vst.msk [vmem:[%s1444 + $0x8] sm:$0xff] %vm597, %v1399
        %1447 = vst.msk [vmem:[%s1444 + $0x10] sm:$0xff] %vm597, %v1401
        %1448 = vst.msk [vmem:[%s1444 + $0x18] sm:$0xff] %vm597, %v1403
        %1449 = vst.msk [vmem:[%s1444 + $0x20] sm:$0xff] %vm597, %v1405
        %1450 = vst.msk [vmem:[%s1444 + $0x28] sm:$0xff] %vm597, %v1407
        %1451 = vst.msk [vmem:[%s1444 + $0x30] sm:$0xff] %vm597, %v1409
        %1452 = vst.msk [vmem:[%s1444 + $0x38] sm:$0xff] %vm597, %v1411
        %1453 = vst.msk [vmem:[%s1444 + $0x40] sm:$0xff] %vm597, %v1413
        %1454 = vst.msk [vmem:[%s1444 + $0x48] sm:$0xff] %vm597, %v1415
        %1455 = vst.msk [vmem:[%s1444 + $0x50] sm:$0xff] %vm597, %v1417
        %1456 = vst.msk [vmem:[%s1444 + $0x58] sm:$0xff] %vm597, %v1419
        %1457 = vst.msk [vmem:[%s1444 + $0x60] sm:$0xff] %vm597, %v1421
        %1458 = vst.msk [vmem:[%s1444 + $0x68] sm:$0xff] %vm597, %v1423
        %1459 = vst.msk [vmem:[%s1444 + $0x70] sm:$0xff] %vm597, %v1425
        %1460 = vst.msk [vmem:[%s1444 + $0x78] sm:$0xff] %vm597, %v1427
        %1461 = vrot.lane.b32.xlu0 %v1286, 112
        %v1462 = vpop.permute.xlu0 %1461
        %1463 = vrot.lane.b32.xlu0 %v1291, 112
        %v1464 = vpop.permute.xlu0 %1463
        %1465 = vrot.lane.b32.xlu0 %v1296, 112
        %v1466 = vpop.permute.xlu0 %1465
        %1467 = vrot.lane.b32.xlu0 %v1301, 112
        %v1468 = vpop.permute.xlu0 %1467
        %1469 = vrot.lane.b32.xlu0 %v1306, 112
        %v1470 = vpop.permute.xlu0 %1469
        %1471 = vrot.lane.b32.xlu0 %v1311, 112
        %v1472 = vpop.permute.xlu0 %1471
        %1473 = vrot.lane.b32.xlu0 %v1316, 112
        %v1474 = vpop.permute.xlu0 %1473
        %1475 = vrot.lane.b32.xlu0 %v1321, 112
        %v1476 = vpop.permute.xlu0 %1475
        %1477 = vrot.lane.b32.xlu0 %v1326, 112
        %v1478 = vpop.permute.xlu0 %1477
        %1479 = vrot.lane.b32.xlu0 %v1331, 112
        %v1480 = vpop.permute.xlu0 %1479
        %1481 = vrot.lane.b32.xlu0 %v1336, 112
        %v1482 = vpop.permute.xlu0 %1481
        %1483 = vrot.lane.b32.xlu0 %v1341, 112
        %v1484 = vpop.permute.xlu0 %1483
        %1485 = vrot.lane.b32.xlu0 %v1346, 112
        %v1486 = vpop.permute.xlu0 %1485
        %1487 = vrot.lane.b32.xlu0 %v1351, 112
        %v1488 = vpop.permute.xlu0 %1487
        %1489 = vrot.lane.b32.xlu0 %v1356, 112
        %v1490 = vpop.permute.xlu0 %1489
        %1491 = vrot.lane.b32.xlu0 %v1361, 112
        %v1492 = vpop.permute.xlu0 %1491
        %s1509 = scalar_lea.vmem [#allocation4], 256
        %1510 = vst.msk [vmem:[%s1509] sm:$0xff] %vm597, %v1462
        %1511 = vst.msk [vmem:[%s1509 + $0x8] sm:$0xff] %vm597, %v1464
        %1512 = vst.msk [vmem:[%s1509 + $0x10] sm:$0xff] %vm597, %v1466
        %1513 = vst.msk [vmem:[%s1509 + $0x18] sm:$0xff] %vm597, %v1468
        %1514 = vst.msk [vmem:[%s1509 + $0x20] sm:$0xff] %vm597, %v1470
        %1515 = vst.msk [vmem:[%s1509 + $0x28] sm:$0xff] %vm597, %v1472
        %1516 = vst.msk [vmem:[%s1509 + $0x30] sm:$0xff] %vm597, %v1474
        %1517 = vst.msk [vmem:[%s1509 + $0x38] sm:$0xff] %vm597, %v1476
        %1518 = vst.msk [vmem:[%s1509 + $0x40] sm:$0xff] %vm597, %v1478
        %1519 = vst.msk [vmem:[%s1509 + $0x48] sm:$0xff] %vm597, %v1480
        %1520 = vst.msk [vmem:[%s1509 + $0x50] sm:$0xff] %vm597, %v1482
        %1521 = vst.msk [vmem:[%s1509 + $0x58] sm:$0xff] %vm597, %v1484
        %1522 = vst.msk [vmem:[%s1509 + $0x60] sm:$0xff] %vm597, %v1486
        %1523 = vst.msk [vmem:[%s1509 + $0x68] sm:$0xff] %vm597, %v1488
        %1524 = vst.msk [vmem:[%s1509 + $0x70] sm:$0xff] %vm597, %v1490
        %1525 = vst.msk [vmem:[%s1509 + $0x78] sm:$0xff] %vm597, %v1492
        %1526 = vrot.lane.b32.xlu0 %v1286, 104
        %v1527 = vpop.permute.xlu0 %1526
        %1528 = vrot.lane.b32.xlu0 %v1291, 104
        %v1529 = vpop.permute.xlu0 %1528
        %1530 = vrot.lane.b32.xlu0 %v1296, 104
        %v1531 = vpop.permute.xlu0 %1530
        %1532 = vrot.lane.b32.xlu0 %v1301, 104
        %v1533 = vpop.permute.xlu0 %1532
        %1534 = vrot.lane.b32.xlu0 %v1306, 104
        %v1535 = vpop.permute.xlu0 %1534
        %1536 = vrot.lane.b32.xlu0 %v1311, 104
        %v1537 = vpop.permute.xlu0 %1536
        %1538 = vrot.lane.b32.xlu0 %v1316, 104
        %v1539 = vpop.permute.xlu0 %1538
        %1540 = vrot.lane.b32.xlu0 %v1321, 104
        %v1541 = vpop.permute.xlu0 %1540
        %1542 = vrot.lane.b32.xlu0 %v1326, 104
        %v1543 = vpop.permute.xlu0 %1542
        %1544 = vrot.lane.b32.xlu0 %v1331, 104
        %v1545 = vpop.permute.xlu0 %1544
        %1546 = vrot.lane.b32.xlu0 %v1336, 104
        %v1547 = vpop.permute.xlu0 %1546
        %1548 = vrot.lane.b32.xlu0 %v1341, 104
        %v1549 = vpop.permute.xlu0 %1548
        %1550 = vrot.lane.b32.xlu0 %v1346, 104
        %v1551 = vpop.permute.xlu0 %1550
        %1552 = vrot.lane.b32.xlu0 %v1351, 104
        %v1553 = vpop.permute.xlu0 %1552
        %1554 = vrot.lane.b32.xlu0 %v1356, 104
        %v1555 = vpop.permute.xlu0 %1554
        %1556 = vrot.lane.b32.xlu0 %v1361, 104
        %v1557 = vpop.permute.xlu0 %1556
        %s1574 = scalar_lea.vmem [#allocation4], 384
        %1575 = vst.msk [vmem:[%s1574] sm:$0xff] %vm597, %v1527
        %1576 = vst.msk [vmem:[%s1574 + $0x8] sm:$0xff] %vm597, %v1529
        %1577 = vst.msk [vmem:[%s1574 + $0x10] sm:$0xff] %vm597, %v1531
        %1578 = vst.msk [vmem:[%s1574 + $0x18] sm:$0xff] %vm597, %v1533
        %1579 = vst.msk [vmem:[%s1574 + $0x20] sm:$0xff] %vm597, %v1535
        %1580 = vst.msk [vmem:[%s1574 + $0x28] sm:$0xff] %vm597, %v1537
        %1581 = vst.msk [vmem:[%s1574 + $0x30] sm:$0xff] %vm597, %v1539
        %1582 = vst.msk [vmem:[%s1574 + $0x38] sm:$0xff] %vm597, %v1541
        %1583 = vst.msk [vmem:[%s1574 + $0x40] sm:$0xff] %vm597, %v1543
        %1584 = vst.msk [vmem:[%s1574 + $0x48] sm:$0xff] %vm597, %v1545
        %1585 = vst.msk [vmem:[%s1574 + $0x50] sm:$0xff] %vm597, %v1547
        %1586 = vst.msk [vmem:[%s1574 + $0x58] sm:$0xff] %vm597, %v1549
        %1587 = vst.msk [vmem:[%s1574 + $0x60] sm:$0xff] %vm597, %v1551
        %1588 = vst.msk [vmem:[%s1574 + $0x68] sm:$0xff] %vm597, %v1553
        %1589 = vst.msk [vmem:[%s1574 + $0x70] sm:$0xff] %vm597, %v1555
        %1590 = vst.msk [vmem:[%s1574 + $0x78] sm:$0xff] %vm597, %v1557
      $region60: #{tpu_custom_call.1} parent=55 // pred_fallthru
        _
      %s1591 = smul.u32 %s25, 128
      %s1592 = scalar_lea.vmem [#allocation2], %s1591
      %v1593 = vld [vmem:[%s1592] sm:$0xff]
      %v1594 = vld [vmem:[%s1592 + $0x8] sm:$0xff]
      %v1595 = vld [vmem:[%s1592 + $0x10] sm:$0xff]
      %v1596 = vld [vmem:[%s1592 + $0x18] sm:$0xff]
      %v1597 = vld [vmem:[%s1592 + $0x20] sm:$0xff]
      %v1598 = vld [vmem:[%s1592 + $0x28] sm:$0xff]
      %v1599 = vld [vmem:[%s1592 + $0x30] sm:$0xff]
      %v1600 = vld [vmem:[%s1592 + $0x38] sm:$0xff]
      %v1601 = vld [vmem:[%s1592 + $0x40] sm:$0xff]
      %v1602 = vld [vmem:[%s1592 + $0x48] sm:$0xff]
      %v1603 = vld [vmem:[%s1592 + $0x50] sm:$0xff]
      %v1604 = vld [vmem:[%s1592 + $0x58] sm:$0xff]
      %v1605 = vld [vmem:[%s1592 + $0x60] sm:$0xff]
      %v1606 = vld [vmem:[%s1592 + $0x68] sm:$0xff]
      %v1607 = vld [vmem:[%s1592 + $0x70] sm:$0xff]
      %v1608 = vld [vmem:[%s1592 + $0x78] sm:$0xff]
      %v1609 = vld [vmem:[%s1592 + $0x80] sm:$0xff]
      %v1610 = vld [vmem:[%s1592 + $0x88] sm:$0xff]
      %v1611 = vld [vmem:[%s1592 + $0x90] sm:$0xff]
      %v1612 = vld [vmem:[%s1592 + $0x98] sm:$0xff]
      %v1613 = vld [vmem:[%s1592 + $0xa0] sm:$0xff]
      %v1614 = vld [vmem:[%s1592 + $0xa8] sm:$0xff]
      %v1615 = vld [vmem:[%s1592 + $0xb0] sm:$0xff]
      %v1616 = vld [vmem:[%s1592 + $0xb8] sm:$0xff]
      %v1617 = vld [vmem:[%s1592 + $0xc0] sm:$0xff]
      %v1618 = vld [vmem:[%s1592 + $0xc8] sm:$0xff]
      %v1619 = vld [vmem:[%s1592 + $0xd0] sm:$0xff]
      %v1620 = vld [vmem:[%s1592 + $0xd8] sm:$0xff]
      %v1621 = vld [vmem:[%s1592 + $0xe0] sm:$0xff]
      %v1622 = vld [vmem:[%s1592 + $0xe8] sm:$0xff]
      %v1623 = vld [vmem:[%s1592 + $0xf0] sm:$0xff]
      %v1624 = vld [vmem:[%s1592 + $0xf8] sm:$0xff]
      %v1625 = vld [vmem:[%s1592 + $0x100] sm:$0xff]
      %v1626 = vld [vmem:[%s1592 + $0x108] sm:$0xff]
      %v1627 = vld [vmem:[%s1592 + $0x110] sm:$0xff]
      %v1628 = vld [vmem:[%s1592 + $0x118] sm:$0xff]
      %v1629 = vld [vmem:[%s1592 + $0x120] sm:$0xff]
      %v1630 = vld [vmem:[%s1592 + $0x128] sm:$0xff]
      %v1631 = vld [vmem:[%s1592 + $0x130] sm:$0xff]
      %v1632 = vld [vmem:[%s1592 + $0x138] sm:$0xff]
      %v1633 = vld [vmem:[%s1592 + $0x140] sm:$0xff]
      %v1634 = vld [vmem:[%s1592 + $0x148] sm:$0xff]
      %v1635 = vld [vmem:[%s1592 + $0x150] sm:$0xff]
      %v1636 = vld [vmem:[%s1592 + $0x158] sm:$0xff]
      %v1637 = vld [vmem:[%s1592 + $0x160] sm:$0xff]
      %v1638 = vld [vmem:[%s1592 + $0x168] sm:$0xff]
      %v1639 = vld [vmem:[%s1592 + $0x170] sm:$0xff]
      %v1640 = vld [vmem:[%s1592 + $0x178] sm:$0xff]
      %v1641 = vld [vmem:[%s1592 + $0x180] sm:$0xff]
      %v1642 = vld [vmem:[%s1592 + $0x188] sm:$0xff]
      %v1643 = vld [vmem:[%s1592 + $0x190] sm:$0xff]
      %v1644 = vld [vmem:[%s1592 + $0x198] sm:$0xff]
      %v1645 = vld [vmem:[%s1592 + $0x1a0] sm:$0xff]
      %v1646 = vld [vmem:[%s1592 + $0x1a8] sm:$0xff]
      %v1647 = vld [vmem:[%s1592 + $0x1b0] sm:$0xff]
      %v1648 = vld [vmem:[%s1592 + $0x1b8] sm:$0xff]
      %v1649 = vld [vmem:[%s1592 + $0x1c0] sm:$0xff]
      %v1650 = vld [vmem:[%s1592 + $0x1c8] sm:$0xff]
      %v1651 = vld [vmem:[%s1592 + $0x1d0] sm:$0xff]
      %v1652 = vld [vmem:[%s1592 + $0x1d8] sm:$0xff]
      %v1653 = vld [vmem:[%s1592 + $0x1e0] sm:$0xff]
      %v1654 = vld [vmem:[%s1592 + $0x1e8] sm:$0xff]
      %v1655 = vld [vmem:[%s1592 + $0x1f0] sm:$0xff]
      %v1656 = vld [vmem:[%s1592 + $0x1f8] sm:$0xff]
      %v1657 = vld [vmem:[#allocation3] sm:$0xff]
      %v1658 = vld [vmem:[#allocation3 + $0x8] sm:$0xff]
      %v1659 = vld [vmem:[#allocation3 + $0x10] sm:$0xff]
      %v1660 = vld [vmem:[#allocation3 + $0x18] sm:$0xff]
      %v1661 = vld [vmem:[#allocation3 + $0x20] sm:$0xff]
      %v1662 = vld [vmem:[#allocation3 + $0x28] sm:$0xff]
      %v1663 = vld [vmem:[#allocation3 + $0x30] sm:$0xff]
      %v1664 = vld [vmem:[#allocation3 + $0x38] sm:$0xff]
      %v1665 = vld [vmem:[#allocation3 + $0x40] sm:$0xff]
      %v1666 = vld [vmem:[#allocation3 + $0x48] sm:$0xff]
      %v1667 = vld [vmem:[#allocation3 + $0x50] sm:$0xff]
      %v1668 = vld [vmem:[#allocation3 + $0x58] sm:$0xff]
      %v1669 = vld [vmem:[#allocation3 + $0x60] sm:$0xff]
      %v1670 = vld [vmem:[#allocation3 + $0x68] sm:$0xff]
      %v1671 = vld [vmem:[#allocation3 + $0x70] sm:$0xff]
      %v1672 = vld [vmem:[#allocation3 + $0x78] sm:$0xff]
      %v1673 = vld [vmem:[#allocation3 + $0x80] sm:$0xff]
      %v1674 = vld [vmem:[#allocation3 + $0x88] sm:$0xff]
      %v1675 = vld [vmem:[#allocation3 + $0x90] sm:$0xff]
      %v1676 = vld [vmem:[#allocation3 + $0x98] sm:$0xff]
      %v1677 = vld [vmem:[#allocation3 + $0xa0] sm:$0xff]
      %v1678 = vld [vmem:[#allocation3 + $0xa8] sm:$0xff]
      %v1679 = vld [vmem:[#allocation3 + $0xb0] sm:$0xff]
      %v1680 = vld [vmem:[#allocation3 + $0xb8] sm:$0xff]
      %v1681 = vld [vmem:[#allocation3 + $0xc0] sm:$0xff]
      %v1682 = vld [vmem:[#allocation3 + $0xc8] sm:$0xff]
      %v1683 = vld [vmem:[#allocation3 + $0xd0] sm:$0xff]
      %v1684 = vld [vmem:[#allocation3 + $0xd8] sm:$0xff]
      %v1685 = vld [vmem:[#allocation3 + $0xe0] sm:$0xff]
      %v1686 = vld [vmem:[#allocation3 + $0xe8] sm:$0xff]
      %v1687 = vld [vmem:[#allocation3 + $0xf0] sm:$0xff]
      %v1688 = vld [vmem:[#allocation3 + $0xf8] sm:$0xff]
      %v1689 = vld [vmem:[#allocation3 + $0x100] sm:$0xff]
      %v1690 = vld [vmem:[#allocation3 + $0x108] sm:$0xff]
      %v1691 = vld [vmem:[#allocation3 + $0x110] sm:$0xff]
      %v1692 = vld [vmem:[#allocation3 + $0x118] sm:$0xff]
      %v1693 = vld [vmem:[#allocation3 + $0x120] sm:$0xff]
      %v1694 = vld [vmem:[#allocation3 + $0x128] sm:$0xff]
      %v1695 = vld [vmem:[#allocation3 + $0x130] sm:$0xff]
      %v1696 = vld [vmem:[#allocation3 + $0x138] sm:$0xff]
      %v1697 = vld [vmem:[#allocation3 + $0x140] sm:$0xff]
      %v1698 = vld [vmem:[#allocation3 + $0x148] sm:$0xff]
      %v1699 = vld [vmem:[#allocation3 + $0x150] sm:$0xff]
      %v1700 = vld [vmem:[#allocation3 + $0x158] sm:$0xff]
      %v1701 = vld [vmem:[#allocation3 + $0x160] sm:$0xff]
      %v1702 = vld [vmem:[#allocation3 + $0x168] sm:$0xff]
      %v1703 = vld [vmem:[#allocation3 + $0x170] sm:$0xff]
      %v1704 = vld [vmem:[#allocation3 + $0x178] sm:$0xff]
      %v1705 = vld [vmem:[#allocation3 + $0x180] sm:$0xff]
      %v1706 = vld [vmem:[#allocation3 + $0x188] sm:$0xff]
      %v1707 = vld [vmem:[#allocation3 + $0x190] sm:$0xff]
      %v1708 = vld [vmem:[#allocation3 + $0x198] sm:$0xff]
      %v1709 = vld [vmem:[#allocation3 + $0x1a0] sm:$0xff]
      %v1710 = vld [vmem:[#allocation3 + $0x1a8] sm:$0xff]
      %v1711 = vld [vmem:[#allocation3 + $0x1b0] sm:$0xff]
      %v1712 = vld [vmem:[#allocation3 + $0x1b8] sm:$0xff]
      %v1713 = vld [vmem:[#allocation3 + $0x1c0] sm:$0xff]
      %v1714 = vld [vmem:[#allocation3 + $0x1c8] sm:$0xff]
      %v1715 = vld [vmem:[#allocation3 + $0x1d0] sm:$0xff]
      %v1716 = vld [vmem:[#allocation3 + $0x1d8] sm:$0xff]
      %v1717 = vld [vmem:[#allocation3 + $0x1e0] sm:$0xff]
      %v1718 = vld [vmem:[#allocation3 + $0x1e8] sm:$0xff]
      %v1719 = vld [vmem:[#allocation3 + $0x1f0] sm:$0xff]
      %v1720 = vld [vmem:[#allocation3 + $0x1f8] sm:$0xff]
      %vm1721 = vcmask 64512
      %v1723 = vsel %vm1721, %v1593, 0
      %v1726 = vsel %vm1721, %v1594, 0
      %v1729 = vsel %vm1721, %v1595, 0
      %v1732 = vsel %vm1721, %v1596, 0
      %v1735 = vsel %vm1721, %v1597, 0
      %v1738 = vsel %vm1721, %v1598, 0
      %v1741 = vsel %vm1721, %v1599, 0
      %v1744 = vsel %vm1721, %v1600, 0
      %v1747 = vsel %vm1721, %v1601, 0
      %v1750 = vsel %vm1721, %v1602, 0
      %v1753 = vsel %vm1721, %v1603, 0
      %v1756 = vsel %vm1721, %v1604, 0
      %v1759 = vsel %vm1721, %v1605, 0
      %v1762 = vsel %vm1721, %v1606, 0
      %v1765 = vsel %vm1721, %v1607, 0
      %v1768 = vsel %vm1721, %v1608, 0
      %v1771 = vsel %vm1721, %v1657, 0
      %v1774 = vsel %vm1721, %v1658, 0
      %v1777 = vsel %vm1721, %v1659, 0
      %v1780 = vsel %vm1721, %v1660, 0
      %v1783 = vsel %vm1721, %v1661, 0
      %v1786 = vsel %vm1721, %v1662, 0
      %v1789 = vsel %vm1721, %v1663, 0
      %v1792 = vsel %vm1721, %v1664, 0
      %v1795 = vsel %vm1721, %v1665, 0
      %v1798 = vsel %vm1721, %v1666, 0
      %v1801 = vsel %vm1721, %v1667, 0
      %v1804 = vsel %vm1721, %v1668, 0
      %v1807 = vsel %vm1721, %v1669, 0
      %v1810 = vsel %vm1721, %v1670, 0
      %v1813 = vsel %vm1721, %v1671, 0
      %v1816 = vsel %vm1721, %v1672, 0
      %1818 = vmatprep.subr.mxu0 0.0
      %1819 = vmatpush1.xpose.msra.mxu0 %v1771
      %1820 = vmatprep.subr.mxu0 0.0
      %1821 = vmatpush1.xpose.msra.mxu0 %v1774
      %1822 = vmatprep.subr.mxu0 0.0
      %1823 = vmatpush1.xpose.msra.mxu0 %v1777
      %1824 = vmatprep.subr.mxu0 0.0
      %1825 = vmatpush1.xpose.msra.mxu0 %v1780
      %1826 = vmatprep.subr.mxu0 0.0
      %1827 = vmatpush1.xpose.msra.mxu0 %v1783
      %1828 = vmatprep.subr.mxu0 0.0
      %1829 = vmatpush1.xpose.msra.mxu0 %v1786
      %1830 = vmatprep.subr.mxu0 0.0
      %1831 = vmatpush1.xpose.msra.mxu0 %v1789
      %1832 = vmatprep.subr.mxu0 0.0
      %1833 = vmatpush1.xpose.msra.mxu0 %v1792
      %1834 = vmatprep.subr.mxu0 0.0
      %1835 = vmatpush1.xpose.msra.mxu0 %v1795
      %1836 = vmatprep.subr.mxu0 0.0
      %1837 = vmatpush1.xpose.msra.mxu0 %v1798
      %1838 = vmatprep.subr.mxu0 0.0
      %1839 = vmatpush1.xpose.msra.mxu0 %v1801
      %1840 = vmatprep.subr.mxu0 0.0
      %1841 = vmatpush1.xpose.msra.mxu0 %v1804
      %1842 = vmatprep.subr.mxu0 0.0
      %1843 = vmatpush1.xpose.msra.mxu0 %v1807
      %1844 = vmatprep.subr.mxu0 0.0
      %1845 = vmatpush1.xpose.msra.mxu0 %v1810
      %1846 = vmatprep.subr.mxu0 0.0
      %1847 = vmatpush1.xpose.msra.mxu0 %v1813
      %1848 = vmatprep.subr.mxu0 0.0
      %1849 = vmatpush1.xpose.msra.mxu0 %v1816
      %1850 = vmatprep.subr.mxu0 0.0
      %1851 = vmatpush1.xpose.msra.mxu0 0.0
      %1852 = vmatprep.subr.mxu0 0.0
      %1853 = vmatpush1.xpose.msra.mxu0 0.0
      %1854 = vmatprep.subr.mxu0 0.0
      %1855 = vmatpush1.xpose.msra.mxu0 0.0
      %1856 = vmatprep.subr.mxu0 0.0
      %1857 = vmatpush1.xpose.msra.mxu0 0.0
      %1858 = vmatprep.subr.mxu0 0.0
      %1859 = vmatpush1.xpose.msra.mxu0 0.0
      %1860 = vmatprep.subr.mxu0 0.0
      %1861 = vmatpush1.xpose.msra.mxu0 0.0
      %1862 = vmatprep.subr.mxu0 0.0
      %1863 = vmatpush1.xpose.msra.mxu0 0.0
      %1864 = vmatprep.subr.mxu0 0.0
      %1865 = vmatpush1.xpose.msra.mxu0 0.0
      %1866 = vmatprep.subr.mxu0 0.0
      %1867 = vmatpush1.xpose.msra.mxu0 0.0
      %1868 = vmatprep.subr.mxu0 0.0
      %1869 = vmatpush1.xpose.msra.mxu0 0.0
      %1870 = vmatprep.subr.mxu0 0.0
      %1871 = vmatpush1.xpose.msra.mxu0 0.0
      %1872 = vmatprep.subr.mxu0 0.0
      %1873 = vmatpush1.xpose.msra.mxu0 0.0
      %1874 = vmatprep.subr.mxu0 0.0
      %1875 = vmatpush1.xpose.msra.mxu0 0.0
      %1876 = vmatprep.subr.mxu0 0.0
      %1877 = vmatpush1.xpose.msra.mxu0 0.0
      %1878 = vmatprep.subr.mxu0 0.0
      %1879 = vmatpush1.xpose.msra.mxu0 0.0
      %1880 = vmatprep.subr.mxu0 0.0
      %1881 = vmatpush1.xpose.msra.mxu0 0.0
      %1882 = vmatprep.mubr.f32.mxu0 0.0
      %1883 = vmatmul.mubr.f32.gmra.mrb[0].mxu0 %v1723
      %v1884 = vpop.f32.mrb[0].mxu0
      %v1885 = vadd.f32 0.0, %v1884
      %v1886 = vpop.f32.mrb[0].mxu0
      %1887 = vmatprep.mubr.f32.mxu0 0.0
      %1888 = vmatmul.mubr.f32.gmra.mrb[0].mxu0 %v1726
      %v1889 = vpop.f32.mrb[0].mxu0
      %v1890 = vadd.f32 0.0, %v1889
      %v1891 = vpop.f32.mrb[0].mxu0
      %1892 = vmatprep.mubr.f32.mxu0 0.0
      %1893 = vmatmul.mubr.f32.gmra.mrb[0].mxu0 %v1729
      %v1894 = vpop.f32.mrb[0].mxu0
      %v1895 = vadd.f32 0.0, %v1894
      %v1896 = vpop.f32.mrb[0].mxu0
      %1897 = vmatprep.mubr.f32.mxu0 0.0
      %1898 = vmatmul.mubr.f32.gmra.mrb[0].mxu0 %v1732
      %v1899 = vpop.f32.mrb[0].mxu0
      %v1900 = vadd.f32 0.0, %v1899
      %v1901 = vpop.f32.mrb[0].mxu0
      %1902 = vmatprep.mubr.f32.mxu0 0.0
      %1903 = vmatmul.mubr.f32.gmra.mrb[0].mxu0 %v1735
      %v1904 = vpop.f32.mrb[0].mxu0
      %v1905 = vadd.f32 0.0, %v1904
      %v1906 = vpop.f32.mrb[0].mxu0
      %1907 = vmatprep.mubr.f32.mxu0 0.0
      %1908 = vmatmul.mubr.f32.gmra.mrb[0].mxu0 %v1738
      %v1909 = vpop.f32.mrb[0].mxu0
      %v1910 = vadd.f32 0.0, %v1909
      %v1911 = vpop.f32.mrb[0].mxu0
      %1912 = vmatprep.mubr.f32.mxu0 0.0
      %1913 = vmatmul.mubr.f32.gmra.mrb[0].mxu0 %v1741
      %v1914 = vpop.f32.mrb[0].mxu0
      %v1915 = vadd.f32 0.0, %v1914
      %v1916 = vpop.f32.mrb[0].mxu0
      %1917 = vmatprep.mubr.f32.mxu0 0.0
      %1918 = vmatmul.mubr.f32.gmra.mrb[0].mxu0 %v1744
      %v1919 = vpop.f32.mrb[0].mxu0
      %v1920 = vadd.f32 0.0, %v1919
      %v1921 = vpop.f32.mrb[0].mxu0
      %1922 = vmatprep.mubr.f32.mxu0 0.0
      %1923 = vmatmul.mubr.f32.gmra.mrb[0].mxu0 %v1747
      %v1924 = vpop.f32.mrb[0].mxu0
      %v1925 = vadd.f32 0.0, %v1924
      %v1926 = vpop.f32.mrb[0].mxu0
      %1927 = vmatprep.mubr.f32.mxu0 0.0
      %1928 = vmatmul.mubr.f32.gmra.mrb[0].mxu0 %v1750
      %v1929 = vpop.f32.mrb[0].mxu0
      %v1930 = vadd.f32 0.0, %v1929
      %v1931 = vpop.f32.mrb[0].mxu0
      %1932 = vmatprep.mubr.f32.mxu0 0.0
      %1933 = vmatmul.mubr.f32.gmra.mrb[0].mxu0 %v1753
      %v1934 = vpop.f32.mrb[0].mxu0
      %v1935 = vadd.f32 0.0, %v1934
      %v1936 = vpop.f32.mrb[0].mxu0
      %1937 = vmatprep.mubr.f32.mxu0 0.0
      %1938 = vmatmul.mubr.f32.gmra.mrb[0].mxu0 %v1756
      %v1939 = vpop.f32.mrb[0].mxu0
      %v1940 = vadd.f32 0.0, %v1939
      %v1941 = vpop.f32.mrb[0].mxu0
      %1942 = vmatprep.mubr.f32.mxu0 0.0
      %1943 = vmatmul.mubr.f32.gmra.mrb[0].mxu0 %v1759
      %v1944 = vpop.f32.mrb[0].mxu0
      %v1945 = vadd.f32 0.0, %v1944
      %v1946 = vpop.f32.mrb[0].mxu0
      %1947 = vmatprep.mubr.f32.mxu0 0.0
      %1948 = vmatmul.mubr.f32.gmra.mrb[0].mxu0 %v1762
      %v1949 = vpop.f32.mrb[0].mxu0
      %v1950 = vadd.f32 0.0, %v1949
      %v1951 = vpop.f32.mrb[0].mxu0
      %1952 = vmatprep.mubr.f32.mxu0 0.0
      %1953 = vmatmul.mubr.f32.gmra.mrb[0].mxu0 %v1765
      %v1954 = vpop.f32.mrb[0].mxu0
      %v1955 = vadd.f32 0.0, %v1954
      %v1956 = vpop.f32.mrb[0].mxu0
      %1957 = vmatprep.mubr.f32.mxu0 0.0
      %1958 = vmatmul.mubr.f32.gmra.mrb[0].mxu0 %v1768
      %v1959 = vpop.f32.mrb[0].mxu0
      %v1960 = vadd.f32 0.0, %v1959
      %v1961 = vpop.f32.mrb[0].mxu0
      %1962 = vdwg.mxu0
      %v1964 = vsel %vm1721, %v1609, 0
      %v1967 = vsel %vm1721, %v1610, 0
      %v1970 = vsel %vm1721, %v1611, 0
      %v1973 = vsel %vm1721, %v1612, 0
      %v1976 = vsel %vm1721, %v1613, 0
      %v1979 = vsel %vm1721, %v1614, 0
      %v1982 = vsel %vm1721, %v1615, 0
      %v1985 = vsel %vm1721, %v1616, 0
      %v1988 = vsel %vm1721, %v1617, 0
      %v1991 = vsel %vm1721, %v1618, 0
      %v1994 = vsel %vm1721, %v1619, 0
      %v1997 = vsel %vm1721, %v1620, 0
      %v2000 = vsel %vm1721, %v1621, 0
      %v2003 = vsel %vm1721, %v1622, 0
      %v2006 = vsel %vm1721, %v1623, 0
      %v2009 = vsel %vm1721, %v1624, 0
      %v2012 = vsel %vm1721, %v1673, 0
      %v2015 = vsel %vm1721, %v1674, 0
      %v2018 = vsel %vm1721, %v1675, 0
      %v2021 = vsel %vm1721, %v1676, 0
      %v2024 = vsel %vm1721, %v1677, 0
      %v2027 = vsel %vm1721, %v1678, 0
      %v2030 = vsel %vm1721, %v1679, 0
      %v2033 = vsel %vm1721, %v1680, 0
      %v2036 = vsel %vm1721, %v1681, 0
      %v2039 = vsel %vm1721, %v1682, 0
      %v2042 = vsel %vm1721, %v1683, 0
      %v2045 = vsel %vm1721, %v1684, 0
      %v2048 = vsel %vm1721, %v1685, 0
      %v2051 = vsel %vm1721, %v1686, 0
      %v2054 = vsel %vm1721, %v1687, 0
      %v2057 = vsel %vm1721, %v1688, 0
      %2059 = vmatprep.subr.mxu0 0.0
      %2060 = vmatpush1.xpose.msra.mxu0 %v2012
      %2061 = vmatprep.subr.mxu0 0.0
      %2062 = vmatpush1.xpose.msra.mxu0 %v2015
      %2063 = vmatprep.subr.mxu0 0.0
      %2064 = vmatpush1.xpose.msra.mxu0 %v2018
      %2065 = vmatprep.subr.mxu0 0.0
      %2066 = vmatpush1.xpose.msra.mxu0 %v2021
      %2067 = vmatprep.subr.mxu0 0.0
      %2068 = vmatpush1.xpose.msra.mxu0 %v2024
      %2069 = vmatprep.subr.mxu0 0.0
      %2070 = vmatpush1.xpose.msra.mxu0 %v2027
      %2071 = vmatprep.subr.mxu0 0.0
      %2072 = vmatpush1.xpose.msra.mxu0 %v2030
      %2073 = vmatprep.subr.mxu0 0.0
      %2074 = vmatpush1.xpose.msra.mxu0 %v2033
      %2075 = vmatprep.subr.mxu0 0.0
      %2076 = vmatpush1.xpose.msra.mxu0 %v2036
      %2077 = vmatprep.subr.mxu0 0.0
      %2078 = vmatpush1.xpose.msra.mxu0 %v2039
      %2079 = vmatprep.subr.mxu0 0.0
      %2080 = vmatpush1.xpose.msra.mxu0 %v2042
      %2081 = vmatprep.subr.mxu0 0.0
      %2082 = vmatpush1.xpose.msra.mxu0 %v2045
      %2083 = vmatprep.subr.mxu0 0.0
      %2084 = vmatpush1.xpose.msra.mxu0 %v2048
      %2085 = vmatprep.subr.mxu0 0.0
      %2086 = vmatpush1.xpose.msra.mxu0 %v2051
      %2087 = vmatprep.subr.mxu0 0.0
      %2088 = vmatpush1.xpose.msra.mxu0 %v2054
      %2089 = vmatprep.subr.mxu0 0.0
      %2090 = vmatpush1.xpose.msra.mxu0 %v2057
      %2091 = vmatprep.subr.mxu0 0.0
      %2092 = vmatpush1.xpose.msra.mxu0 0.0
      %2093 = vmatprep.subr.mxu0 0.0
      %2094 = vmatpush1.xpose.msra.mxu0 0.0
      %2095 = vmatprep.subr.mxu0 0.0
      %2096 = vmatpush1.xpose.msra.mxu0 0.0
      %2097 = vmatprep.subr.mxu0 0.0
      %2098 = vmatpush1.xpose.msra.mxu0 0.0
      %2099 = vmatprep.subr.mxu0 0.0
      %2100 = vmatpush1.xpose.msra.mxu0 0.0
      %2101 = vmatprep.subr.mxu0 0.0
      %2102 = vmatpush1.xpose.msra.mxu0 0.0
      %2103 = vmatprep.subr.mxu0 0.0
      %2104 = vmatpush1.xpose.msra.mxu0 0.0
      %2105 = vmatprep.subr.mxu0 0.0
      %2106 = vmatpush1.xpose.msra.mxu0 0.0
      %2107 = vmatprep.subr.mxu0 0.0
      %2108 = vmatpush1.xpose.msra.mxu0 0.0
      %2109 = vmatprep.subr.mxu0 0.0
      %2110 = vmatpush1.xpose.msra.mxu0 0.0
      %2111 = vmatprep.subr.mxu0 0.0
      %2112 = vmatpush1.xpose.msra.mxu0 0.0
      %2113 = vmatprep.subr.mxu0 0.0
      %2114 = vmatpush1.xpose.msra.mxu0 0.0
      %2115 = vmatprep.subr.mxu0 0.0
      %2116 = vmatpush1.xpose.msra.mxu0 0.0
      %2117 = vmatprep.subr.mxu0 0.0
      %2118 = vmatpush1.xpose.msra.mxu0 0.0
      %2119 = vmatprep.subr.mxu0 0.0
      %2120 = vmatpush1.xpose.msra.mxu0 0.0
      %2121 = vmatprep.subr.mxu0 0.0
      %2122 = vmatpush1.xpose.msra.mxu0 0.0
      %2123 = vmatprep.mubr.f32.mxu0 0.0
      %2124 = vmatmul.mubr.f32.gmra.mrb[0].mxu0 %v1964
      %v2125 = vpop.f32.mrb[0].mxu0
      %v2126 = vadd.f32 0.0, %v2125
      %v2127 = vpop.f32.mrb[0].mxu0
      %2128 = vmatprep.mubr.f32.mxu0 0.0
      %2129 = vmatmul.mubr.f32.gmra.mrb[0].mxu0 %v1967
      %v2130 = vpop.f32.mrb[0].mxu0
      %v2131 = vadd.f32 0.0, %v2130
      %v2132 = vpop.f32.mrb[0].mxu0
      %2133 = vmatprep.mubr.f32.mxu0 0.0
      %2134 = vmatmul.mubr.f32.gmra.mrb[0].mxu0 %v1970
      %v2135 = vpop.f32.mrb[0].mxu0
      %v2136 = vadd.f32 0.0, %v2135
      %v2137 = vpop.f32.mrb[0].mxu0
      %2138 = vmatprep.mubr.f32.mxu0 0.0
      %2139 = vmatmul.mubr.f32.gmra.mrb[0].mxu0 %v1973
      %v2140 = vpop.f32.mrb[0].mxu0
      %v2141 = vadd.f32 0.0, %v2140
      %v2142 = vpop.f32.mrb[0].mxu0
      %2143 = vmatprep.mubr.f32.mxu0 0.0
      %2144 = vmatmul.mubr.f32.gmra.mrb[0].mxu0 %v1976
      %v2145 = vpop.f32.mrb[0].mxu0
      %v2146 = vadd.f32 0.0, %v2145
      %v2147 = vpop.f32.mrb[0].mxu0
      %2148 = vmatprep.mubr.f32.mxu0 0.0
      %2149 = vmatmul.mubr.f32.gmra.mrb[0].mxu0 %v1979
      %v2150 = vpop.f32.mrb[0].mxu0
      %v2151 = vadd.f32 0.0, %v2150
      %v2152 = vpop.f32.mrb[0].mxu0
      %2153 = vmatprep.mubr.f32.mxu0 0.0
      %2154 = vmatmul.mubr.f32.gmra.mrb[0].mxu0 %v1982
      %v2155 = vpop.f32.mrb[0].mxu0
      %v2156 = vadd.f32 0.0, %v2155
      %v2157 = vpop.f32.mrb[0].mxu0
      %2158 = vmatprep.mubr.f32.mxu0 0.0
      %2159 = vmatmul.mubr.f32.gmra.mrb[0].mxu0 %v1985
      %v2160 = vpop.f32.mrb[0].mxu0
      %v2161 = vadd.f32 0.0, %v2160
      %v2162 = vpop.f32.mrb[0].mxu0
      %2163 = vmatprep.mubr.f32.mxu0 0.0
      %2164 = vmatmul.mubr.f32.gmra.mrb[0].mxu0 %v1988
      %v2165 = vpop.f32.mrb[0].mxu0
      %v2166 = vadd.f32 0.0, %v2165
      %v2167 = vpop.f32.mrb[0].mxu0
      %2168 = vmatprep.mubr.f32.mxu0 0.0
      %2169 = vmatmul.mubr.f32.gmra.mrb[0].mxu0 %v1991
      %v2170 = vpop.f32.mrb[0].mxu0
      %v2171 = vadd.f32 0.0, %v2170
      %v2172 = vpop.f32.mrb[0].mxu0
      %2173 = vmatprep.mubr.f32.mxu0 0.0
      %2174 = vmatmul.mubr.f32.gmra.mrb[0].mxu0 %v1994
      %v2175 = vpop.f32.mrb[0].mxu0
      %v2176 = vadd.f32 0.0, %v2175
      %v2177 = vpop.f32.mrb[0].mxu0
      %2178 = vmatprep.mubr.f32.mxu0 0.0
      %2179 = vmatmul.mubr.f32.gmra.mrb[0].mxu0 %v1997
      %v2180 = vpop.f32.mrb[0].mxu0
      %v2181 = vadd.f32 0.0, %v2180
      %v2182 = vpop.f32.mrb[0].mxu0
      %2183 = vmatprep.mubr.f32.mxu0 0.0
      %2184 = vmatmul.mubr.f32.gmra.mrb[0].mxu0 %v2000
      %v2185 = vpop.f32.mrb[0].mxu0
      %v2186 = vadd.f32 0.0, %v2185
      %v2187 = vpop.f32.mrb[0].mxu0
      %2188 = vmatprep.mubr.f32.mxu0 0.0
      %2189 = vmatmul.mubr.f32.gmra.mrb[0].mxu0 %v2003
      %v2190 = vpop.f32.mrb[0].mxu0
      %v2191 = vadd.f32 0.0, %v2190
      %v2192 = vpop.f32.mrb[0].mxu0
      %2193 = vmatprep.mubr.f32.mxu0 0.0
      %2194 = vmatmul.mubr.f32.gmra.mrb[0].mxu0 %v2006
      %v2195 = vpop.f32.mrb[0].mxu0
      %v2196 = vadd.f32 0.0, %v2195
      %v2197 = vpop.f32.mrb[0].mxu0
      %2198 = vmatprep.mubr.f32.mxu0 0.0
      %2199 = vmatmul.mubr.f32.gmra.mrb[0].mxu0 %v2009
      %v2200 = vpop.f32.mrb[0].mxu0
      %v2201 = vadd.f32 0.0, %v2200
      %v2202 = vpop.f32.mrb[0].mxu0
      %2203 = vdwg.mxu0
      %v2205 = vsel %vm1721, %v1625, 0
      %v2208 = vsel %vm1721, %v1626, 0
      %v2211 = vsel %vm1721, %v1627, 0
      %v2214 = vsel %vm1721, %v1628, 0
      %v2217 = vsel %vm1721, %v1629, 0
      %v2220 = vsel %vm1721, %v1630, 0
      %v2223 = vsel %vm1721, %v1631, 0
      %v2226 = vsel %vm1721, %v1632, 0
      %v2229 = vsel %vm1721, %v1633, 0
      %v2232 = vsel %vm1721, %v1634, 0
      %v2235 = vsel %vm1721, %v1635, 0
      %v2238 = vsel %vm1721, %v1636, 0
      %v2241 = vsel %vm1721, %v1637, 0
      %v2244 = vsel %vm1721, %v1638, 0
      %v2247 = vsel %vm1721, %v1639, 0
      %v2250 = vsel %vm1721, %v1640, 0
      %v2253 = vsel %vm1721, %v1689, 0
      %v2256 = vsel %vm1721, %v1690, 0
      %v2259 = vsel %vm1721, %v1691, 0
      %v2262 = vsel %vm1721, %v1692, 0
      %v2265 = vsel %vm1721, %v1693, 0
      %v2268 = vsel %vm1721, %v1694, 0
      %v2271 = vsel %vm1721, %v1695, 0
      %v2274 = vsel %vm1721, %v1696, 0
      %v2277 = vsel %vm1721, %v1697, 0
      %v2280 = vsel %vm1721, %v1698, 0
      %v2283 = vsel %vm1721, %v1699, 0
      %v2286 = vsel %vm1721, %v1700, 0
      %v2289 = vsel %vm1721, %v1701, 0
      %v2292 = vsel %vm1721, %v1702, 0
      %v2295 = vsel %vm1721, %v1703, 0
      %v2298 = vsel %vm1721, %v1704, 0
      %2300 = vmatprep.subr.mxu0 0.0
      %2301 = vmatpush1.xpose.msra.mxu0 %v2253
      %2302 = vmatprep.subr.mxu0 0.0
      %2303 = vmatpush1.xpose.msra.mxu0 %v2256
      %2304 = vmatprep.subr.mxu0 0.0
      %2305 = vmatpush1.xpose.msra.mxu0 %v2259
      %2306 = vmatprep.subr.mxu0 0.0
      %2307 = vmatpush1.xpose.msra.mxu0 %v2262
      %2308 = vmatprep.subr.mxu0 0.0
      %2309 = vmatpush1.xpose.msra.mxu0 %v2265
      %2310 = vmatprep.subr.mxu0 0.0
      %2311 = vmatpush1.xpose.msra.mxu0 %v2268
      %2312 = vmatprep.subr.mxu0 0.0
      %2313 = vmatpush1.xpose.msra.mxu0 %v2271
      %2314 = vmatprep.subr.mxu0 0.0
      %2315 = vmatpush1.xpose.msra.mxu0 %v2274
      %2316 = vmatprep.subr.mxu0 0.0
      %2317 = vmatpush1.xpose.msra.mxu0 %v2277
      %2318 = vmatprep.subr.mxu0 0.0
      %2319 = vmatpush1.xpose.msra.mxu0 %v2280
      %2320 = vmatprep.subr.mxu0 0.0
      %2321 = vmatpush1.xpose.msra.mxu0 %v2283
      %2322 = vmatprep.subr.mxu0 0.0
      %2323 = vmatpush1.xpose.msra.mxu0 %v2286
      %2324 = vmatprep.subr.mxu0 0.0
      %2325 = vmatpush1.xpose.msra.mxu0 %v2289
      %2326 = vmatprep.subr.mxu0 0.0
      %2327 = vmatpush1.xpose.msra.mxu0 %v2292
      %2328 = vmatprep.subr.mxu0 0.0
      %2329 = vmatpush1.xpose.msra.mxu0 %v2295
      %2330 = vmatprep.subr.mxu0 0.0
      %2331 = vmatpush1.xpose.msra.mxu0 %v2298
      %2332 = vmatprep.subr.mxu0 0.0
      %2333 = vmatpush1.xpose.msra.mxu0 0.0
      %2334 = vmatprep.subr.mxu0 0.0
      %2335 = vmatpush1.xpose.msra.mxu0 0.0
      %2336 = vmatprep.subr.mxu0 0.0
      %2337 = vmatpush1.xpose.msra.mxu0 0.0
      %2338 = vmatprep.subr.mxu0 0.0
      %2339 = vmatpush1.xpose.msra.mxu0 0.0
      %2340 = vmatprep.subr.mxu0 0.0
      %2341 = vmatpush1.xpose.msra.mxu0 0.0
      %2342 = vmatprep.subr.mxu0 0.0
      %2343 = vmatpush1.xpose.msra.mxu0 0.0
      %2344 = vmatprep.subr.mxu0 0.0
      %2345 = vmatpush1.xpose.msra.mxu0 0.0
      %2346 = vmatprep.subr.mxu0 0.0
      %2347 = vmatpush1.xpose.msra.mxu0 0.0
      %2348 = vmatprep.subr.mxu0 0.0
      %2349 = vmatpush1.xpose.msra.mxu0 0.0
      %2350 = vmatprep.subr.mxu0 0.0
      %2351 = vmatpush1.xpose.msra.mxu0 0.0
      %2352 = vmatprep.subr.mxu0 0.0
      %2353 = vmatpush1.xpose.msra.mxu0 0.0
      %2354 = vmatprep.subr.mxu0 0.0
      %2355 = vmatpush1.xpose.msra.mxu0 0.0
      %2356 = vmatprep.subr.mxu0 0.0
      %2357 = vmatpush1.xpose.msra.mxu0 0.0
      %2358 = vmatprep.subr.mxu0 0.0
      %2359 = vmatpush1.xpose.msra.mxu0 0.0
      %2360 = vmatprep.subr.mxu0 0.0
      %2361 = vmatpush1.xpose.msra.mxu0 0.0
      %2362 = vmatprep.subr.mxu0 0.0
      %2363 = vmatpush1.xpose.msra.mxu0 0.0
      %2364 = vmatprep.mubr.f32.mxu0 0.0
      %2365 = vmatmul.mubr.f32.gmra.mrb[0].mxu0 %v2205
      %v2366 = vpop.f32.mrb[0].mxu0
      %v2367 = vadd.f32 0.0, %v2366
      %v2368 = vpop.f32.mrb[0].mxu0
      %2369 = vmatprep.mubr.f32.mxu0 0.0
      %2370 = vmatmul.mubr.f32.gmra.mrb[0].mxu0 %v2208
      %v2371 = vpop.f32.mrb[0].mxu0
      %v2372 = vadd.f32 0.0, %v2371
      %v2373 = vpop.f32.mrb[0].mxu0
      %2374 = vmatprep.mubr.f32.mxu0 0.0
      %2375 = vmatmul.mubr.f32.gmra.mrb[0].mxu0 %v2211
      %v2376 = vpop.f32.mrb[0].mxu0
      %v2377 = vadd.f32 0.0, %v2376
      %v2378 = vpop.f32.mrb[0].mxu0
      %2379 = vmatprep.mubr.f32.mxu0 0.0
      %2380 = vmatmul.mubr.f32.gmra.mrb[0].mxu0 %v2214
      %v2381 = vpop.f32.mrb[0].mxu0
      %v2382 = vadd.f32 0.0, %v2381
      %v2383 = vpop.f32.mrb[0].mxu0
      %2384 = vmatprep.mubr.f32.mxu0 0.0
      %2385 = vmatmul.mubr.f32.gmra.mrb[0].mxu0 %v2217
      %v2386 = vpop.f32.mrb[0].mxu0
      %v2387 = vadd.f32 0.0, %v2386
      %v2388 = vpop.f32.mrb[0].mxu0
      %2389 = vmatprep.mubr.f32.mxu0 0.0
      %2390 = vmatmul.mubr.f32.gmra.mrb[0].mxu0 %v2220
      %v2391 = vpop.f32.mrb[0].mxu0
      %v2392 = vadd.f32 0.0, %v2391
      %v2393 = vpop.f32.mrb[0].mxu0
      %2394 = vmatprep.mubr.f32.mxu0 0.0
      %2395 = vmatmul.mubr.f32.gmra.mrb[0].mxu0 %v2223
      %v2396 = vpop.f32.mrb[0].mxu0
      %v2397 = vadd.f32 0.0, %v2396
      %v2398 = vpop.f32.mrb[0].mxu0
      %2399 = vmatprep.mubr.f32.mxu0 0.0
      %2400 = vmatmul.mubr.f32.gmra.mrb[0].mxu0 %v2226
      %v2401 = vpop.f32.mrb[0].mxu0
      %v2402 = vadd.f32 0.0, %v2401
      %v2403 = vpop.f32.mrb[0].mxu0
      %2404 = vmatprep.mubr.f32.mxu0 0.0
      %2405 = vmatmul.mubr.f32.gmra.mrb[0].mxu0 %v2229
      %v2406 = vpop.f32.mrb[0].mxu0
      %v2407 = vadd.f32 0.0, %v2406
      %v2408 = vpop.f32.mrb[0].mxu0
      %2409 = vmatprep.mubr.f32.mxu0 0.0
      %2410 = vmatmul.mubr.f32.gmra.mrb[0].mxu0 %v2232
      %v2411 = vpop.f32.mrb[0].mxu0
      %v2412 = vadd.f32 0.0, %v2411
      %v2413 = vpop.f32.mrb[0].mxu0
      %2414 = vmatprep.mubr.f32.mxu0 0.0
      %2415 = vmatmul.mubr.f32.gmra.mrb[0].mxu0 %v2235
      %v2416 = vpop.f32.mrb[0].mxu0
      %v2417 = vadd.f32 0.0, %v2416
      %v2418 = vpop.f32.mrb[0].mxu0
      %2419 = vmatprep.mubr.f32.mxu0 0.0
      %2420 = vmatmul.mubr.f32.gmra.mrb[0].mxu0 %v2238
      %v2421 = vpop.f32.mrb[0].mxu0
      %v2422 = vadd.f32 0.0, %v2421
      %v2423 = vpop.f32.mrb[0].mxu0
      %2424 = vmatprep.mubr.f32.mxu0 0.0
      %2425 = vmatmul.mubr.f32.gmra.mrb[0].mxu0 %v2241
      %v2426 = vpop.f32.mrb[0].mxu0
      %v2427 = vadd.f32 0.0, %v2426
      %v2428 = vpop.f32.mrb[0].mxu0
      %2429 = vmatprep.mubr.f32.mxu0 0.0
      %2430 = vmatmul.mubr.f32.gmra.mrb[0].mxu0 %v2244
      %v2431 = vpop.f32.mrb[0].mxu0
      %v2432 = vadd.f32 0.0, %v2431
      %v2433 = vpop.f32.mrb[0].mxu0
      %2434 = vmatprep.mubr.f32.mxu0 0.0
      %2435 = vmatmul.mubr.f32.gmra.mrb[0].mxu0 %v2247
      %v2436 = vpop.f32.mrb[0].mxu0
      %v2437 = vadd.f32 0.0, %v2436
      %v2438 = vpop.f32.mrb[0].mxu0
      %2439 = vmatprep.mubr.f32.mxu0 0.0
      %2440 = vmatmul.mubr.f32.gmra.mrb[0].mxu0 %v2250
      %v2441 = vpop.f32.mrb[0].mxu0
      %v2442 = vadd.f32 0.0, %v2441
      %v2443 = vpop.f32.mrb[0].mxu0
      %2444 = vdwg.mxu0
      %v2446 = vsel %vm1721, %v1641, 0
      %v2449 = vsel %vm1721, %v1642, 0
      %v2452 = vsel %vm1721, %v1643, 0
      %v2455 = vsel %vm1721, %v1644, 0
      %v2458 = vsel %vm1721, %v1645, 0
      %v2461 = vsel %vm1721, %v1646, 0
      %v2464 = vsel %vm1721, %v1647, 0
      %v2467 = vsel %vm1721, %v1648, 0
      %v2470 = vsel %vm1721, %v1649, 0
      %v2473 = vsel %vm1721, %v1650, 0
      %v2476 = vsel %vm1721, %v1651, 0
      %v2479 = vsel %vm1721, %v1652, 0
      %v2482 = vsel %vm1721, %v1653, 0
      %v2485 = vsel %vm1721, %v1654, 0
      %v2488 = vsel %vm1721, %v1655, 0
      %v2491 = vsel %vm1721, %v1656, 0
      %v2494 = vsel %vm1721, %v1705, 0
      %v2497 = vsel %vm1721, %v1706, 0
      %v2500 = vsel %vm1721, %v1707, 0
      %v2503 = vsel %vm1721, %v1708, 0
      %v2506 = vsel %vm1721, %v1709, 0
      %v2509 = vsel %vm1721, %v1710, 0
      %v2512 = vsel %vm1721, %v1711, 0
      %v2515 = vsel %vm1721, %v1712, 0
      %v2518 = vsel %vm1721, %v1713, 0
      %v2521 = vsel %vm1721, %v1714, 0
      %v2524 = vsel %vm1721, %v1715, 0
      %v2527 = vsel %vm1721, %v1716, 0
      %v2530 = vsel %vm1721, %v1717, 0
      %v2533 = vsel %vm1721, %v1718, 0
      %v2536 = vsel %vm1721, %v1719, 0
      %v2539 = vsel %vm1721, %v1720, 0
      %2541 = vmatprep.subr.mxu0 0.0
      %2542 = vmatpush1.xpose.msra.mxu0 %v2494
      %2543 = vmatprep.subr.mxu0 0.0
      %2544 = vmatpush1.xpose.msra.mxu0 %v2497
      %2545 = vmatprep.subr.mxu0 0.0
      %2546 = vmatpush1.xpose.msra.mxu0 %v2500
      %2547 = vmatprep.subr.mxu0 0.0
      %2548 = vmatpush1.xpose.msra.mxu0 %v2503
      %2549 = vmatprep.subr.mxu0 0.0
      %2550 = vmatpush1.xpose.msra.mxu0 %v2506
      %2551 = vmatprep.subr.mxu0 0.0
      %2552 = vmatpush1.xpose.msra.mxu0 %v2509
      %2553 = vmatprep.subr.mxu0 0.0
      %2554 = vmatpush1.xpose.msra.mxu0 %v2512
      %2555 = vmatprep.subr.mxu0 0.0
      %2556 = vmatpush1.xpose.msra.mxu0 %v2515
      %2557 = vmatprep.subr.mxu0 0.0
      %2558 = vmatpush1.xpose.msra.mxu0 %v2518
      %2559 = vmatprep.subr.mxu0 0.0
      %2560 = vmatpush1.xpose.msra.mxu0 %v2521
      %2561 = vmatprep.subr.mxu0 0.0
      %2562 = vmatpush1.xpose.msra.mxu0 %v2524
      %2563 = vmatprep.subr.mxu0 0.0
      %2564 = vmatpush1.xpose.msra.mxu0 %v2527
      %2565 = vmatprep.subr.mxu0 0.0
      %2566 = vmatpush1.xpose.msra.mxu0 %v2530
      %2567 = vmatprep.subr.mxu0 0.0
      %2568 = vmatpush1.xpose.msra.mxu0 %v2533
      %2569 = vmatprep.subr.mxu0 0.0
      %2570 = vmatpush1.xpose.msra.mxu0 %v2536
      %2571 = vmatprep.subr.mxu0 0.0
      %2572 = vmatpush1.xpose.msra.mxu0 %v2539
      %2573 = vmatprep.subr.mxu0 0.0
      %2574 = vmatpush1.xpose.msra.mxu0 0.0
      %2575 = vmatprep.subr.mxu0 0.0
      %2576 = vmatpush1.xpose.msra.mxu0 0.0
      %2577 = vmatprep.subr.mxu0 0.0
      %2578 = vmatpush1.xpose.msra.mxu0 0.0
      %2579 = vmatprep.subr.mxu0 0.0
      %2580 = vmatpush1.xpose.msra.mxu0 0.0
      %2581 = vmatprep.subr.mxu0 0.0
      %2582 = vmatpush1.xpose.msra.mxu0 0.0
      %2583 = vmatprep.subr.mxu0 0.0
      %2584 = vmatpush1.xpose.msra.mxu0 0.0
      %2585 = vmatprep.subr.mxu0 0.0
      %2586 = vmatpush1.xpose.msra.mxu0 0.0
      %2587 = vmatprep.subr.mxu0 0.0
      %2588 = vmatpush1.xpose.msra.mxu0 0.0
      %2589 = vmatprep.subr.mxu0 0.0
      %2590 = vmatpush1.xpose.msra.mxu0 0.0
      %2591 = vmatprep.subr.mxu0 0.0
      %2592 = vmatpush1.xpose.msra.mxu0 0.0
      %2593 = vmatprep.subr.mxu0 0.0
      %2594 = vmatpush1.xpose.msra.mxu0 0.0
      %2595 = vmatprep.subr.mxu0 0.0
      %2596 = vmatpush1.xpose.msra.mxu0 0.0
      %2597 = vmatprep.subr.mxu0 0.0
      %2598 = vmatpush1.xpose.msra.mxu0 0.0
      %2599 = vmatprep.subr.mxu0 0.0
      %2600 = vmatpush1.xpose.msra.mxu0 0.0
      %2601 = vmatprep.subr.mxu0 0.0
      %2602 = vmatpush1.xpose.msra.mxu0 0.0
      %2603 = vmatprep.subr.mxu0 0.0
      %2604 = vmatpush1.xpose.msra.mxu0 0.0
      %2605 = vmatprep.mubr.f32.mxu0 0.0
      %2606 = vmatmul.mubr.f32.gmra.mrb[0].mxu0 %v2446
      %v2607 = vpop.f32.mrb[0].mxu0
      %v2608 = vadd.f32 0.0, %v2607
      %v2609 = vpop.f32.mrb[0].mxu0
      %2610 = vmatprep.mubr.f32.mxu0 0.0
      %2611 = vmatmul.mubr.f32.gmra.mrb[0].mxu0 %v2449
      %v2612 = vpop.f32.mrb[0].mxu0
      %v2613 = vadd.f32 0.0, %v2612
      %v2614 = vpop.f32.mrb[0].mxu0
      %2615 = vmatprep.mubr.f32.mxu0 0.0
      %2616 = vmatmul.mubr.f32.gmra.mrb[0].mxu0 %v2452
      %v2617 = vpop.f32.mrb[0].mxu0
      %v2618 = vadd.f32 0.0, %v2617
      %v2619 = vpop.f32.mrb[0].mxu0
      %2620 = vmatprep.mubr.f32.mxu0 0.0
      %2621 = vmatmul.mubr.f32.gmra.mrb[0].mxu0 %v2455
      %v2622 = vpop.f32.mrb[0].mxu0
      %v2623 = vadd.f32 0.0, %v2622
      %v2624 = vpop.f32.mrb[0].mxu0
      %2625 = vmatprep.mubr.f32.mxu0 0.0
      %2626 = vmatmul.mubr.f32.gmra.mrb[0].mxu0 %v2458
      %v2627 = vpop.f32.mrb[0].mxu0
      %v2628 = vadd.f32 0.0, %v2627
      %v2629 = vpop.f32.mrb[0].mxu0
      %2630 = vmatprep.mubr.f32.mxu0 0.0
      %2631 = vmatmul.mubr.f32.gmra.mrb[0].mxu0 %v2461
      %v2632 = vpop.f32.mrb[0].mxu0
      %v2633 = vadd.f32 0.0, %v2632
      %v2634 = vpop.f32.mrb[0].mxu0
      %2635 = vmatprep.mubr.f32.mxu0 0.0
      %2636 = vmatmul.mubr.f32.gmra.mrb[0].mxu0 %v2464
      %v2637 = vpop.f32.mrb[0].mxu0
      %v2638 = vadd.f32 0.0, %v2637
      %v2639 = vpop.f32.mrb[0].mxu0
      %2640 = vmatprep.mubr.f32.mxu0 0.0
      %2641 = vmatmul.mubr.f32.gmra.mrb[0].mxu0 %v2467
      %v2642 = vpop.f32.mrb[0].mxu0
      %v2643 = vadd.f32 0.0, %v2642
      %v2644 = vpop.f32.mrb[0].mxu0
      %2645 = vmatprep.mubr.f32.mxu0 0.0
      %2646 = vmatmul.mubr.f32.gmra.mrb[0].mxu0 %v2470
      %v2647 = vpop.f32.mrb[0].mxu0
      %v2648 = vadd.f32 0.0, %v2647
      %v2649 = vpop.f32.mrb[0].mxu0
      %2650 = vmatprep.mubr.f32.mxu0 0.0
      %2651 = vmatmul.mubr.f32.gmra.mrb[0].mxu0 %v2473
      %v2652 = vpop.f32.mrb[0].mxu0
      %v2653 = vadd.f32 0.0, %v2652
      %v2654 = vpop.f32.mrb[0].mxu0
      %2655 = vmatprep.mubr.f32.mxu0 0.0
      %2656 = vmatmul.mubr.f32.gmra.mrb[0].mxu0 %v2476
      %v2657 = vpop.f32.mrb[0].mxu0
      %v2658 = vadd.f32 0.0, %v2657
      %v2659 = vpop.f32.mrb[0].mxu0
      %2660 = vmatprep.mubr.f32.mxu0 0.0
      %2661 = vmatmul.mubr.f32.gmra.mrb[0].mxu0 %v2479
      %v2662 = vpop.f32.mrb[0].mxu0
      %v2663 = vadd.f32 0.0, %v2662
      %v2664 = vpop.f32.mrb[0].mxu0
      %2665 = vmatprep.mubr.f32.mxu0 0.0
      %2666 = vmatmul.mubr.f32.gmra.mrb[0].mxu0 %v2482
      %v2667 = vpop.f32.mrb[0].mxu0
      %v2668 = vadd.f32 0.0, %v2667
      %v2669 = vpop.f32.mrb[0].mxu0
      %2670 = vmatprep.mubr.f32.mxu0 0.0
      %2671 = vmatmul.mubr.f32.gmra.mrb[0].mxu0 %v2485
      %v2672 = vpop.f32.mrb[0].mxu0
      %v2673 = vadd.f32 0.0, %v2672
      %v2674 = vpop.f32.mrb[0].mxu0
      %2675 = vmatprep.mubr.f32.mxu0 0.0
      %2676 = vmatmul.mubr.f32.gmra.mrb[0].mxu0 %v2488
      %v2677 = vpop.f32.mrb[0].mxu0
      %v2678 = vadd.f32 0.0, %v2677
      %v2679 = vpop.f32.mrb[0].mxu0
      %2680 = vmatprep.mubr.f32.mxu0 0.0
      %2681 = vmatmul.mubr.f32.gmra.mrb[0].mxu0 %v2491
      %v2682 = vpop.f32.mrb[0].mxu0
      %v2683 = vadd.f32 0.0, %v2682
      %v2684 = vpop.f32.mrb[0].mxu0
      %2685 = vdwg.mxu0
      %v2686 = vlaneseq
      %v2687 = vand.u32 %v2686, 127
      %vm2688 = vcmp.lt.s32.totalorder %v2687, 8
      %v2689 = vsel %vm2688, 1, 0
      %vm2690 = vcmp.eq.s32.totalorder %v2689, 1
      %v2691 = vsel %vm2690, %v1885, -1e+30
      %v2692 = vsel %vm2690, %v1890, -1e+30
      %v2693 = vsel %vm2690, %v1895, -1e+30
      %v2694 = vsel %vm2690, %v1900, -1e+30
      %v2695 = vsel %vm2690, %v1905, -1e+30
      %v2696 = vsel %vm2690, %v1910, -1e+30
      %v2697 = vsel %vm2690, %v1915, -1e+30
      %v2698 = vsel %vm2690, %v1920, -1e+30
      %v2699 = vsel %vm2690, %v1925, -1e+30
      %v2700 = vsel %vm2690, %v1930, -1e+30
      %v2701 = vsel %vm2690, %v1935, -1e+30
      %v2702 = vsel %vm2690, %v1940, -1e+30
      %v2703 = vsel %vm2690, %v1945, -1e+30
      %v2704 = vsel %vm2690, %v1950, -1e+30
      %v2705 = vsel %vm2690, %v1955, -1e+30
      %v2706 = vsel %vm2690, %v1960, -1e+30
      %v2707 = vsel %vm2690, %v2126, -1e+30
      %v2708 = vsel %vm2690, %v2131, -1e+30
      %v2709 = vsel %vm2690, %v2136, -1e+30
      %v2710 = vsel %vm2690, %v2141, -1e+30
      %v2711 = vsel %vm2690, %v2146, -1e+30
      %v2712 = vsel %vm2690, %v2151, -1e+30
      %v2713 = vsel %vm2690, %v2156, -1e+30
      %v2714 = vsel %vm2690, %v2161, -1e+30
      %v2715 = vsel %vm2690, %v2166, -1e+30
      %v2716 = vsel %vm2690, %v2171, -1e+30
      %v2717 = vsel %vm2690, %v2176, -1e+30
      %v2718 = vsel %vm2690, %v2181, -1e+30
      %v2719 = vsel %vm2690, %v2186, -1e+30
      %v2720 = vsel %vm2690, %v2191, -1e+30
      %v2721 = vsel %vm2690, %v2196, -1e+30
      %v2722 = vsel %vm2690, %v2201, -1e+30
      %v2723 = vsel %vm2690, %v2367, -1e+30
      %v2724 = vsel %vm2690, %v2372, -1e+30
      %v2725 = vsel %vm2690, %v2377, -1e+30
      %v2726 = vsel %vm2690, %v2382, -1e+30
      %v2727 = vsel %vm2690, %v2387, -1e+30
      %v2728 = vsel %vm2690, %v2392, -1e+30
      %v2729 = vsel %vm2690, %v2397, -1e+30
      %v2730 = vsel %vm2690, %v2402, -1e+30
      %v2731 = vsel %vm2690, %v2407, -1e+30
      %v2732 = vsel %vm2690, %v2412, -1e+30
      %v2733 = vsel %vm2690, %v2417, -1e+30
      %v2734 = vsel %vm2690, %v2422, -1e+30
      %v2735 = vsel %vm2690, %v2427, -1e+30
      %v2736 = vsel %vm2690, %v2432, -1e+30
      %v2737 = vsel %vm2690, %v2437, -1e+30
      %v2738 = vsel %vm2690, %v2442, -1e+30
      %v2739 = vsel %vm2690, %v2608, -1e+30
      %v2740 = vsel %vm2690, %v2613, -1e+30
      %v2741 = vsel %vm2690, %v2618, -1e+30
      %v2742 = vsel %vm2690, %v2623, -1e+30
      %v2743 = vsel %vm2690, %v2628, -1e+30
      %v2744 = vsel %vm2690, %v2633, -1e+30
      %v2745 = vsel %vm2690, %v2638, -1e+30
      %v2746 = vsel %vm2690, %v2643, -1e+30
      %v2747 = vsel %vm2690, %v2648, -1e+30
      %v2748 = vsel %vm2690, %v2653, -1e+30
      %v2749 = vsel %vm2690, %v2658, -1e+30
      %v2750 = vsel %vm2690, %v2663, -1e+30
      %v2751 = vsel %vm2690, %v2668, -1e+30
      %v2752 = vsel %vm2690, %v2673, -1e+30
      %v2753 = vsel %vm2690, %v2678, -1e+30
      %v2754 = vsel %vm2690, %v2683, -1e+30
      %2755 = vmax.xlane.f32.xlu0 %v2691
      %v2756 = vpop.xlane.xlu0 %2755
      %2757 = vmax.xlane.f32.xlu0 %v2692
      %v2758 = vpop.xlane.xlu0 %2757
      %2759 = vmax.xlane.f32.xlu0 %v2693
      %v2760 = vpop.xlane.xlu0 %2759
      %2761 = vmax.xlane.f32.xlu0 %v2694
      %v2762 = vpop.xlane.xlu0 %2761
      %2763 = vmax.xlane.f32.xlu0 %v2695
      %v2764 = vpop.xlane.xlu0 %2763
      %2765 = vmax.xlane.f32.xlu0 %v2696
      %v2766 = vpop.xlane.xlu0 %2765
      %2767 = vmax.xlane.f32.xlu0 %v2697
      %v2768 = vpop.xlane.xlu0 %2767
      %2769 = vmax.xlane.f32.xlu0 %v2698
      %v2770 = vpop.xlane.xlu0 %2769
      %2771 = vmax.xlane.f32.xlu0 %v2699
      %v2772 = vpop.xlane.xlu0 %2771
      %2773 = vmax.xlane.f32.xlu0 %v2700
      %v2774 = vpop.xlane.xlu0 %2773
      %2775 = vmax.xlane.f32.xlu0 %v2701
      %v2776 = vpop.xlane.xlu0 %2775
      %2777 = vmax.xlane.f32.xlu0 %v2702
      %v2778 = vpop.xlane.xlu0 %2777
      %2779 = vmax.xlane.f32.xlu0 %v2703
      %v2780 = vpop.xlane.xlu0 %2779
      %2781 = vmax.xlane.f32.xlu0 %v2704
      %v2782 = vpop.xlane.xlu0 %2781
      %2783 = vmax.xlane.f32.xlu0 %v2705
      %v2784 = vpop.xlane.xlu0 %2783
      %2785 = vmax.xlane.f32.xlu0 %v2706
      %v2786 = vpop.xlane.xlu0 %2785
      %2787 = vmax.xlane.f32.xlu0 %v2707
      %v2788 = vpop.xlane.xlu0 %2787
      %2789 = vmax.xlane.f32.xlu0 %v2708
      %v2790 = vpop.xlane.xlu0 %2789
      %2791 = vmax.xlane.f32.xlu0 %v2709
      %v2792 = vpop.xlane.xlu0 %2791
      %2793 = vmax.xlane.f32.xlu0 %v2710
      %v2794 = vpop.xlane.xlu0 %2793
      %2795 = vmax.xlane.f32.xlu0 %v2711
      %v2796 = vpop.xlane.xlu0 %2795
      %2797 = vmax.xlane.f32.xlu0 %v2712
      %v2798 = vpop.xlane.xlu0 %2797
      %2799 = vmax.xlane.f32.xlu0 %v2713
      %v2800 = vpop.xlane.xlu0 %2799
      %2801 = vmax.xlane.f32.xlu0 %v2714
      %v2802 = vpop.xlane.xlu0 %2801
      %2803 = vmax.xlane.f32.xlu0 %v2715
      %v2804 = vpop.xlane.xlu0 %2803
      %2805 = vmax.xlane.f32.xlu0 %v2716
      %v2806 = vpop.xlane.xlu0 %2805
      %2807 = vmax.xlane.f32.xlu0 %v2717
      %v2808 = vpop.xlane.xlu0 %2807
      %2809 = vmax.xlane.f32.xlu0 %v2718
      %v2810 = vpop.xlane.xlu0 %2809
      %2811 = vmax.xlane.f32.xlu0 %v2719
      %v2812 = vpop.xlane.xlu0 %2811
      %2813 = vmax.xlane.f32.xlu0 %v2720
      %v2814 = vpop.xlane.xlu0 %2813
      %2815 = vmax.xlane.f32.xlu0 %v2721
      %v2816 = vpop.xlane.xlu0 %2815
      %2817 = vmax.xlane.f32.xlu0 %v2722
      %v2818 = vpop.xlane.xlu0 %2817
      %2819 = vmax.xlane.f32.xlu0 %v2723
      %v2820 = vpop.xlane.xlu0 %2819
      %2821 = vmax.xlane.f32.xlu0 %v2724
      %v2822 = vpop.xlane.xlu0 %2821
      %2823 = vmax.xlane.f32.xlu0 %v2725
      %v2824 = vpop.xlane.xlu0 %2823
      %2825 = vmax.xlane.f32.xlu0 %v2726
      %v2826 = vpop.xlane.xlu0 %2825
      %2827 = vmax.xlane.f32.xlu0 %v2727
      %v2828 = vpop.xlane.xlu0 %2827
      %2829 = vmax.xlane.f32.xlu0 %v2728
      %v2830 = vpop.xlane.xlu0 %2829
      %2831 = vmax.xlane.f32.xlu0 %v2729
      %v2832 = vpop.xlane.xlu0 %2831
      %2833 = vmax.xlane.f32.xlu0 %v2730
      %v2834 = vpop.xlane.xlu0 %2833
      %2835 = vmax.xlane.f32.xlu0 %v2731
      %v2836 = vpop.xlane.xlu0 %2835
      %2837 = vmax.xlane.f32.xlu0 %v2732
      %v2838 = vpop.xlane.xlu0 %2837
      %2839 = vmax.xlane.f32.xlu0 %v2733
      %v2840 = vpop.xlane.xlu0 %2839
      %2841 = vmax.xlane.f32.xlu0 %v2734
      %v2842 = vpop.xlane.xlu0 %2841
      %2843 = vmax.xlane.f32.xlu0 %v2735
      %v2844 = vpop.xlane.xlu0 %2843
      %2845 = vmax.xlane.f32.xlu0 %v2736
      %v2846 = vpop.xlane.xlu0 %2845
      %2847 = vmax.xlane.f32.xlu0 %v2737
      %v2848 = vpop.xlane.xlu0 %2847
      %2849 = vmax.xlane.f32.xlu0 %v2738
      %v2850 = vpop.xlane.xlu0 %2849
      %2851 = vmax.xlane.f32.xlu0 %v2739
      %v2852 = vpop.xlane.xlu0 %2851
      %2853 = vmax.xlane.f32.xlu0 %v2740
      %v2854 = vpop.xlane.xlu0 %2853
      %2855 = vmax.xlane.f32.xlu0 %v2741
      %v2856 = vpop.xlane.xlu0 %2855
      %2857 = vmax.xlane.f32.xlu0 %v2742
      %v2858 = vpop.xlane.xlu0 %2857
      %2859 = vmax.xlane.f32.xlu0 %v2743
      %v2860 = vpop.xlane.xlu0 %2859
      %2861 = vmax.xlane.f32.xlu0 %v2744
      %v2862 = vpop.xlane.xlu0 %2861
      %2863 = vmax.xlane.f32.xlu0 %v2745
      %v2864 = vpop.xlane.xlu0 %2863
      %2865 = vmax.xlane.f32.xlu0 %v2746
      %v2866 = vpop.xlane.xlu0 %2865
      %2867 = vmax.xlane.f32.xlu0 %v2747
      %v2868 = vpop.xlane.xlu0 %2867
      %2869 = vmax.xlane.f32.xlu0 %v2748
      %v2870 = vpop.xlane.xlu0 %2869
      %2871 = vmax.xlane.f32.xlu0 %v2749
      %v2872 = vpop.xlane.xlu0 %2871
      %2873 = vmax.xlane.f32.xlu0 %v2750
      %v2874 = vpop.xlane.xlu0 %2873
      %2875 = vmax.xlane.f32.xlu0 %v2751
      %v2876 = vpop.xlane.xlu0 %2875
      %2877 = vmax.xlane.f32.xlu0 %v2752
      %v2878 = vpop.xlane.xlu0 %2877
      %2879 = vmax.xlane.f32.xlu0 %v2753
      %v2880 = vpop.xlane.xlu0 %2879
      %2881 = vmax.xlane.f32.xlu0 %v2754
      %v2882 = vpop.xlane.xlu0 %2881
      %v2883 = vsub.f32 %v2691, %v2756
      %v2884 = vsub.f32 %v2692, %v2758
      %v2885 = vsub.f32 %v2693, %v2760
      %v2886 = vsub.f32 %v2694, %v2762
      %v2887 = vsub.f32 %v2695, %v2764
      %v2888 = vsub.f32 %v2696, %v2766
      %v2889 = vsub.f32 %v2697, %v2768
      %v2890 = vsub.f32 %v2698, %v2770
      %v2891 = vsub.f32 %v2699, %v2772
      %v2892 = vsub.f32 %v2700, %v2774
      %v2893 = vsub.f32 %v2701, %v2776
      %v2894 = vsub.f32 %v2702, %v2778
      %v2895 = vsub.f32 %v2703, %v2780
      %v2896 = vsub.f32 %v2704, %v2782
      %v2897 = vsub.f32 %v2705, %v2784
      %v2898 = vsub.f32 %v2706, %v2786
      %v2899 = vsub.f32 %v2707, %v2788
      %v2900 = vsub.f32 %v2708, %v2790
      %v2901 = vsub.f32 %v2709, %v2792
      %v2902 = vsub.f32 %v2710, %v2794
      %v2903 = vsub.f32 %v2711, %v2796
      %v2904 = vsub.f32 %v2712, %v2798
      %v2905 = vsub.f32 %v2713, %v2800
      %v2906 = vsub.f32 %v2714, %v2802
      %v2907 = vsub.f32 %v2715, %v2804
      %v2908 = vsub.f32 %v2716, %v2806
      %v2909 = vsub.f32 %v2717, %v2808
      %v2910 = vsub.f32 %v2718, %v2810
      %v2911 = vsub.f32 %v2719, %v2812
      %v2912 = vsub.f32 %v2720, %v2814
      %v2913 = vsub.f32 %v2721, %v2816
      %v2914 = vsub.f32 %v2722, %v2818
      %v2915 = vsub.f32 %v2723, %v2820
      %v2916 = vsub.f32 %v2724, %v2822
      %v2917 = vsub.f32 %v2725, %v2824
      %v2918 = vsub.f32 %v2726, %v2826
      %v2919 = vsub.f32 %v2727, %v2828
      %v2920 = vsub.f32 %v2728, %v2830
      %v2921 = vsub.f32 %v2729, %v2832
      %v2922 = vsub.f32 %v2730, %v2834
      %v2923 = vsub.f32 %v2731, %v2836
      %v2924 = vsub.f32 %v2732, %v2838
      %v2925 = vsub.f32 %v2733, %v2840
      %v2926 = vsub.f32 %v2734, %v2842
      %v2927 = vsub.f32 %v2735, %v2844
      %v2928 = vsub.f32 %v2736, %v2846
      %v2929 = vsub.f32 %v2737, %v2848
      %v2930 = vsub.f32 %v2738, %v2850
      %v2931 = vsub.f32 %v2739, %v2852
      %v2932 = vsub.f32 %v2740, %v2854
      %v2933 = vsub.f32 %v2741, %v2856
      %v2934 = vsub.f32 %v2742, %v2858
      %v2935 = vsub.f32 %v2743, %v2860
      %v2936 = vsub.f32 %v2744, %v2862
      %v2937 = vsub.f32 %v2745, %v2864
      %v2938 = vsub.f32 %v2746, %v2866
      %v2939 = vsub.f32 %v2747, %v2868
      %v2940 = vsub.f32 %v2748, %v2870
      %v2941 = vsub.f32 %v2749, %v2872
      %v2942 = vsub.f32 %v2750, %v2874
      %v2943 = vsub.f32 %v2751, %v2876
      %v2944 = vsub.f32 %v2752, %v2878
      %v2945 = vsub.f32 %v2753, %v2880
      %v2946 = vsub.f32 %v2754, %v2882
      %v2947 = vmul.f32 %v2883, 1.442695
      %v2948 = vpow.pop %v2947
      %v2949 = vmul.f32 %v2884, 1.442695
      %v2950 = vpow.pop %v2949
      %v2951 = vmul.f32 %v2885, 1.442695
      %v2952 = vpow.pop %v2951
      %v2953 = vmul.f32 %v2886, 1.442695
      %v2954 = vpow.pop %v2953
      %v2955 = vmul.f32 %v2887, 1.442695
      %v2956 = vpow.pop %v2955
      %v2957 = vmul.f32 %v2888, 1.442695
      %v2958 = vpow.pop %v2957
      %v2959 = vmul.f32 %v2889, 1.442695
      %v2960 = vpow.pop %v2959
      %v2961 = vmul.f32 %v2890, 1.442695
      %v2962 = vpow.pop %v2961
      %v2963 = vmul.f32 %v2891, 1.442695
      %v2964 = vpow.pop %v2963
      %v2965 = vmul.f32 %v2892, 1.442695
      %v2966 = vpow.pop %v2965
      %v2967 = vmul.f32 %v2893, 1.442695
      %v2968 = vpow.pop %v2967
      %v2969 = vmul.f32 %v2894, 1.442695
      %v2970 = vpow.pop %v2969
      %v2971 = vmul.f32 %v2895, 1.442695
      %v2972 = vpow.pop %v2971
      %v2973 = vmul.f32 %v2896, 1.442695
      %v2974 = vpow.pop %v2973
      %v2975 = vmul.f32 %v2897, 1.442695
      %v2976 = vpow.pop %v2975
      %v2977 = vmul.f32 %v2898, 1.442695
      %v2978 = vpow.pop %v2977
      %v2979 = vmul.f32 %v2899, 1.442695
      %v2980 = vpow.pop %v2979
      %v2981 = vmul.f32 %v2900, 1.442695
      %v2982 = vpow.pop %v2981
      %v2983 = vmul.f32 %v2901, 1.442695
      %v2984 = vpow.pop %v2983
      %v2985 = vmul.f32 %v2902, 1.442695
      %v2986 = vpow.pop %v2985
      %v2987 = vmul.f32 %v2903, 1.442695
      %v2988 = vpow.pop %v2987
      %v2989 = vmul.f32 %v2904, 1.442695
      %v2990 = vpow.pop %v2989
      %v2991 = vmul.f32 %v2905, 1.442695
      %v2992 = vpow.pop %v2991
      %v2993 = vmul.f32 %v2906, 1.442695
      %v2994 = vpow.pop %v2993
      %v2995 = vmul.f32 %v2907, 1.442695
      %v2996 = vpow.pop %v2995
      %v2997 = vmul.f32 %v2908, 1.442695
      %v2998 = vpow.pop %v2997
      %v2999 = vmul.f32 %v2909, 1.442695
      %v3000 = vpow.pop %v2999
      %v3001 = vmul.f32 %v2910, 1.442695
      %v3002 = vpow.pop %v3001
      %v3003 = vmul.f32 %v2911, 1.442695
      %v3004 = vpow.pop %v3003
      %v3005 = vmul.f32 %v2912, 1.442695
      %v3006 = vpow.pop %v3005
      %v3007 = vmul.f32 %v2913, 1.442695
      %v3008 = vpow.pop %v3007
      %v3009 = vmul.f32 %v2914, 1.442695
      %v3010 = vpow.pop %v3009
      %v3011 = vmul.f32 %v2915, 1.442695
      %v3012 = vpow.pop %v3011
      %v3013 = vmul.f32 %v2916, 1.442695
      %v3014 = vpow.pop %v3013
      %v3015 = vmul.f32 %v2917, 1.442695
      %v3016 = vpow.pop %v3015
      %v3017 = vmul.f32 %v2918, 1.442695
      %v3018 = vpow.pop %v3017
      %v3019 = vmul.f32 %v2919, 1.442695
      %v3020 = vpow.pop %v3019
      %v3021 = vmul.f32 %v2920, 1.442695
      %v3022 = vpow.pop %v3021
      %v3023 = vmul.f32 %v2921, 1.442695
      %v3024 = vpow.pop %v3023
      %v3025 = vmul.f32 %v2922, 1.442695
      %v3026 = vpow.pop %v3025
      %v3027 = vmul.f32 %v2923, 1.442695
      %v3028 = vpow.pop %v3027
      %v3029 = vmul.f32 %v2924, 1.442695
      %v3030 = vpow.pop %v3029
      %v3031 = vmul.f32 %v2925, 1.442695
      %v3032 = vpow.pop %v3031
      %v3033 = vmul.f32 %v2926, 1.442695
      %v3034 = vpow.pop %v3033
      %v3035 = vmul.f32 %v2927, 1.442695
      %v3036 = vpow.pop %v3035
      %v3037 = vmul.f32 %v2928, 1.442695
      %v3038 = vpow.pop %v3037
      %v3039 = vmul.f32 %v2929, 1.442695
      %v3040 = vpow.pop %v3039
      %v3041 = vmul.f32 %v2930, 1.442695
      %v3042 = vpow.pop %v3041
      %v3043 = vmul.f32 %v2931, 1.442695
      %v3044 = vpow.pop %v3043
      %v3045 = vmul.f32 %v2932, 1.442695
      %v3046 = vpow.pop %v3045
      %v3047 = vmul.f32 %v2933, 1.442695
      %v3048 = vpow.pop %v3047
      %v3049 = vmul.f32 %v2934, 1.442695
      %v3050 = vpow.pop %v3049
      %v3051 = vmul.f32 %v2935, 1.442695
      %v3052 = vpow.pop %v3051
      %v3053 = vmul.f32 %v2936, 1.442695
      %v3054 = vpow.pop %v3053
      %v3055 = vmul.f32 %v2937, 1.442695
      %v3056 = vpow.pop %v3055
      %v3057 = vmul.f32 %v2938, 1.442695
      %v3058 = vpow.pop %v3057
      %v3059 = vmul.f32 %v2939, 1.442695
      %v3060 = vpow.pop %v3059
      %v3061 = vmul.f32 %v2940, 1.442695
      %v3062 = vpow.pop %v3061
      %v3063 = vmul.f32 %v2941, 1.442695
      %v3064 = vpow.pop %v3063
      %v3065 = vmul.f32 %v2942, 1.442695
      %v3066 = vpow.pop %v3065
      %v3067 = vmul.f32 %v2943, 1.442695
      %v3068 = vpow.pop %v3067
      %v3069 = vmul.f32 %v2944, 1.442695
      %v3070 = vpow.pop %v3069
      %v3071 = vmul.f32 %v2945, 1.442695
      %v3072 = vpow.pop %v3071
      %v3073 = vmul.f32 %v2946, 1.442695
      %v3074 = vpow.pop %v3073
      %3075 = vadd.xlane.f32.xlu0 %v2948
      %v3076 = vpop.xlane.xlu0 %3075
      %3077 = vadd.xlane.f32.xlu0 %v2950
      %v3078 = vpop.xlane.xlu0 %3077
      %3079 = vadd.xlane.f32.xlu0 %v2952
      %v3080 = vpop.xlane.xlu0 %3079
      %3081 = vadd.xlane.f32.xlu0 %v2954
      %v3082 = vpop.xlane.xlu0 %3081
      %3083 = vadd.xlane.f32.xlu0 %v2956
      %v3084 = vpop.xlane.xlu0 %3083
      %3085 = vadd.xlane.f32.xlu0 %v2958
      %v3086 = vpop.xlane.xlu0 %3085
      %3087 = vadd.xlane.f32.xlu0 %v2960
      %v3088 = vpop.xlane.xlu0 %3087
      %3089 = vadd.xlane.f32.xlu0 %v2962
      %v3090 = vpop.xlane.xlu0 %3089
      %3091 = vadd.xlane.f32.xlu0 %v2964
      %v3092 = vpop.xlane.xlu0 %3091
      %3093 = vadd.xlane.f32.xlu0 %v2966
      %v3094 = vpop.xlane.xlu0 %3093
      %3095 = vadd.xlane.f32.xlu0 %v2968
      %v3096 = vpop.xlane.xlu0 %3095
      %3097 = vadd.xlane.f32.xlu0 %v2970
      %v3098 = vpop.xlane.xlu0 %3097
      %3099 = vadd.xlane.f32.xlu0 %v2972
      %v3100 = vpop.xlane.xlu0 %3099
      %3101 = vadd.xlane.f32.xlu0 %v2974
      %v3102 = vpop.xlane.xlu0 %3101
      %3103 = vadd.xlane.f32.xlu0 %v2976
      %v3104 = vpop.xlane.xlu0 %3103
      %3105 = vadd.xlane.f32.xlu0 %v2978
      %v3106 = vpop.xlane.xlu0 %3105
      %3107 = vadd.xlane.f32.xlu0 %v2980
      %v3108 = vpop.xlane.xlu0 %3107
      %3109 = vadd.xlane.f32.xlu0 %v2982
      %v3110 = vpop.xlane.xlu0 %3109
      %3111 = vadd.xlane.f32.xlu0 %v2984
      %v3112 = vpop.xlane.xlu0 %3111
      %3113 = vadd.xlane.f32.xlu0 %v2986
      %v3114 = vpop.xlane.xlu0 %3113
      %3115 = vadd.xlane.f32.xlu0 %v2988
      %v3116 = vpop.xlane.xlu0 %3115
      %3117 = vadd.xlane.f32.xlu0 %v2990
      %v3118 = vpop.xlane.xlu0 %3117
      %3119 = vadd.xlane.f32.xlu0 %v2992
      %v3120 = vpop.xlane.xlu0 %3119
      %3121 = vadd.xlane.f32.xlu0 %v2994
      %v3122 = vpop.xlane.xlu0 %3121
      %3123 = vadd.xlane.f32.xlu0 %v2996
      %v3124 = vpop.xlane.xlu0 %3123
      %3125 = vadd.xlane.f32.xlu0 %v2998
      %v3126 = vpop.xlane.xlu0 %3125
      %3127 = vadd.xlane.f32.xlu0 %v3000
      %v3128 = vpop.xlane.xlu0 %3127
      %3129 = vadd.xlane.f32.xlu0 %v3002
      %v3130 = vpop.xlane.xlu0 %3129
      %3131 = vadd.xlane.f32.xlu0 %v3004
      %v3132 = vpop.xlane.xlu0 %3131
      %3133 = vadd.xlane.f32.xlu0 %v3006
      %v3134 = vpop.xlane.xlu0 %3133
      %3135 = vadd.xlane.f32.xlu0 %v3008
      %v3136 = vpop.xlane.xlu0 %3135
      %3137 = vadd.xlane.f32.xlu0 %v3010
      %v3138 = vpop.xlane.xlu0 %3137
      %3139 = vadd.xlane.f32.xlu0 %v3012
      %v3140 = vpop.xlane.xlu0 %3139
      %3141 = vadd.xlane.f32.xlu0 %v3014
      %v3142 = vpop.xlane.xlu0 %3141
      %3143 = vadd.xlane.f32.xlu0 %v3016
      %v3144 = vpop.xlane.xlu0 %3143
      %3145 = vadd.xlane.f32.xlu0 %v3018
      %v3146 = vpop.xlane.xlu0 %3145
      %3147 = vadd.xlane.f32.xlu0 %v3020
      %v3148 = vpop.xlane.xlu0 %3147
      %3149 = vadd.xlane.f32.xlu0 %v3022
      %v3150 = vpop.xlane.xlu0 %3149
      %3151 = vadd.xlane.f32.xlu0 %v3024
      %v3152 = vpop.xlane.xlu0 %3151
      %3153 = vadd.xlane.f32.xlu0 %v3026
      %v3154 = vpop.xlane.xlu0 %3153
      %3155 = vadd.xlane.f32.xlu0 %v3028
      %v3156 = vpop.xlane.xlu0 %3155
      %3157 = vadd.xlane.f32.xlu0 %v3030
      %v3158 = vpop.xlane.xlu0 %3157
      %3159 = vadd.xlane.f32.xlu0 %v3032
      %v3160 = vpop.xlane.xlu0 %3159
      %3161 = vadd.xlane.f32.xlu0 %v3034
      %v3162 = vpop.xlane.xlu0 %3161
      %3163 = vadd.xlane.f32.xlu0 %v3036
      %v3164 = vpop.xlane.xlu0 %3163
      %3165 = vadd.xlane.f32.xlu0 %v3038
      %v3166 = vpop.xlane.xlu0 %3165
      %3167 = vadd.xlane.f32.xlu0 %v3040
      %v3168 = vpop.xlane.xlu0 %3167
      %3169 = vadd.xlane.f32.xlu0 %v3042
      %v3170 = vpop.xlane.xlu0 %3169
      %3171 = vadd.xlane.f32.xlu0 %v3044
      %v3172 = vpop.xlane.xlu0 %3171
      %3173 = vadd.xlane.f32.xlu0 %v3046
      %v3174 = vpop.xlane.xlu0 %3173
      %3175 = vadd.xlane.f32.xlu0 %v3048
      %v3176 = vpop.xlane.xlu0 %3175
      %3177 = vadd.xlane.f32.xlu0 %v3050
      %v3178 = vpop.xlane.xlu0 %3177
      %3179 = vadd.xlane.f32.xlu0 %v3052
      %v3180 = vpop.xlane.xlu0 %3179
      %3181 = vadd.xlane.f32.xlu0 %v3054
      %v3182 = vpop.xlane.xlu0 %3181
      %3183 = vadd.xlane.f32.xlu0 %v3056
      %v3184 = vpop.xlane.xlu0 %3183
      %3185 = vadd.xlane.f32.xlu0 %v3058
      %v3186 = vpop.xlane.xlu0 %3185
      %3187 = vadd.xlane.f32.xlu0 %v3060
      %v3188 = vpop.xlane.xlu0 %3187
      %3189 = vadd.xlane.f32.xlu0 %v3062
      %v3190 = vpop.xlane.xlu0 %3189
      %3191 = vadd.xlane.f32.xlu0 %v3064
      %v3192 = vpop.xlane.xlu0 %3191
      %3193 = vadd.xlane.f32.xlu0 %v3066
      %v3194 = vpop.xlane.xlu0 %3193
      %3195 = vadd.xlane.f32.xlu0 %v3068
      %v3196 = vpop.xlane.xlu0 %3195
      %3197 = vadd.xlane.f32.xlu0 %v3070
      %v3198 = vpop.xlane.xlu0 %3197
      %3199 = vadd.xlane.f32.xlu0 %v3072
      %v3200 = vpop.xlane.xlu0 %3199
      %3201 = vadd.xlane.f32.xlu0 %v3074
      %v3202 = vpop.xlane.xlu0 %3201
      %v3203 = vld [vmem:[#allocation4] sm:$0xff]
      %v3204 = vld [vmem:[#allocation4 + $0x8] sm:$0xff]
      %v3205 = vld [vmem:[#allocation4 + $0x10] sm:$0xff]
      %v3206 = vld [vmem:[#allocation4 + $0x18] sm:$0xff]
      %v3207 = vld [vmem:[#allocation4 + $0x20] sm:$0xff]
      %v3208 = vld [vmem:[#allocation4 + $0x28] sm:$0xff]
      %v3209 = vld [vmem:[#allocation4 + $0x30] sm:$0xff]
      %v3210 = vld [vmem:[#allocation4 + $0x38] sm:$0xff]
      %v3211 = vld [vmem:[#allocation4 + $0x40] sm:$0xff]
      %v3212 = vld [vmem:[#allocation4 + $0x48] sm:$0xff]
      %v3213 = vld [vmem:[#allocation4 + $0x50] sm:$0xff]
      %v3214 = vld [vmem:[#allocation4 + $0x58] sm:$0xff]
      %v3215 = vld [vmem:[#allocation4 + $0x60] sm:$0xff]
      %v3216 = vld [vmem:[#allocation4 + $0x68] sm:$0xff]
      %v3217 = vld [vmem:[#allocation4 + $0x70] sm:$0xff]
      %v3218 = vld [vmem:[#allocation4 + $0x78] sm:$0xff]
      %v3219 = vld [vmem:[#allocation4 + $0x80] sm:$0xff]
      %v3220 = vld [vmem:[#allocation4 + $0x88] sm:$0xff]
      %v3221 = vld [vmem:[#allocation4 + $0x90] sm:$0xff]
      %v3222 = vld [vmem:[#allocation4 + $0x98] sm:$0xff]
      %v3223 = vld [vmem:[#allocation4 + $0xa0] sm:$0xff]
      %v3224 = vld [vmem:[#allocation4 + $0xa8] sm:$0xff]
      %v3225 = vld [vmem:[#allocation4 + $0xb0] sm:$0xff]
      %v3226 = vld [vmem:[#allocation4 + $0xb8] sm:$0xff]
      %v3227 = vld [vmem:[#allocation4 + $0xc0] sm:$0xff]
      %v3228 = vld [vmem:[#allocation4 + $0xc8] sm:$0xff]
      %v3229 = vld [vmem:[#allocation4 + $0xd0] sm:$0xff]
      %v3230 = vld [vmem:[#allocation4 + $0xd8] sm:$0xff]
      %v3231 = vld [vmem:[#allocation4 + $0xe0] sm:$0xff]
      %v3232 = vld [vmem:[#allocation4 + $0xe8] sm:$0xff]
      %v3233 = vld [vmem:[#allocation4 + $0xf0] sm:$0xff]
      %v3234 = vld [vmem:[#allocation4 + $0xf8] sm:$0xff]
      %v3235 = vld [vmem:[#allocation4 + $0x100] sm:$0xff]
      %v3236 = vld [vmem:[#allocation4 + $0x108] sm:$0xff]
      %v3237 = vld [vmem:[#allocation4 + $0x110] sm:$0xff]
      %v3238 = vld [vmem:[#allocation4 + $0x118] sm:$0xff]
      %v3239 = vld [vmem:[#allocation4 + $0x120] sm:$0xff]
      %v3240 = vld [vmem:[#allocation4 + $0x128] sm:$0xff]
      %v3241 = vld [vmem:[#allocation4 + $0x130] sm:$0xff]
      %v3242 = vld [vmem:[#allocation4 + $0x138] sm:$0xff]
      %v3243 = vld [vmem:[#allocation4 + $0x140] sm:$0xff]
      %v3244 = vld [vmem:[#allocation4 + $0x148] sm:$0xff]
      %v3245 = vld [vmem:[#allocation4 + $0x150] sm:$0xff]
      %v3246 = vld [vmem:[#allocation4 + $0x158] sm:$0xff]
      %v3247 = vld [vmem:[#allocation4 + $0x160] sm:$0xff]
      %v3248 = vld [vmem:[#allocation4 + $0x168] sm:$0xff]
      %v3249 = vld [vmem:[#allocation4 + $0x170] sm:$0xff]
      %v3250 = vld [vmem:[#allocation4 + $0x178] sm:$0xff]
      %v3251 = vld [vmem:[#allocation4 + $0x180] sm:$0xff]
      %v3252 = vld [vmem:[#allocation4 + $0x188] sm:$0xff]
      %v3253 = vld [vmem:[#allocation4 + $0x190] sm:$0xff]
      %v3254 = vld [vmem:[#allocation4 + $0x198] sm:$0xff]
      %v3255 = vld [vmem:[#allocation4 + $0x1a0] sm:$0xff]
      %v3256 = vld [vmem:[#allocation4 + $0x1a8] sm:$0xff]
      %v3257 = vld [vmem:[#allocation4 + $0x1b0] sm:$0xff]
      %v3258 = vld [vmem:[#allocation4 + $0x1b8] sm:$0xff]
      %v3259 = vld [vmem:[#allocation4 + $0x1c0] sm:$0xff]
      %v3260 = vld [vmem:[#allocation4 + $0x1c8] sm:$0xff]
      %v3261 = vld [vmem:[#allocation4 + $0x1d0] sm:$0xff]
      %v3262 = vld [vmem:[#allocation4 + $0x1d8] sm:$0xff]
      %v3263 = vld [vmem:[#allocation4 + $0x1e0] sm:$0xff]
      %v3264 = vld [vmem:[#allocation4 + $0x1e8] sm:$0xff]
      %v3265 = vld [vmem:[#allocation4 + $0x1f0] sm:$0xff]
      %v3266 = vld [vmem:[#allocation4 + $0x1f8] sm:$0xff]
      %3267 = vmatprep.subr.mxu0 0.0
      %3268 = vmatpush1.msra.mxu0 %v3203
      %3269 = vmatprep.subr.mxu0 0.0
      %3270 = vmatpush1.msra.mxu0 %v3204
      %3271 = vmatprep.subr.mxu0 0.0
      %3272 = vmatpush1.msra.mxu0 %v3205
      %3273 = vmatprep.subr.mxu0 0.0
      %3274 = vmatpush1.msra.mxu0 %v3206
      %3275 = vmatprep.subr.mxu0 0.0
      %3276 = vmatpush1.msra.mxu0 %v3207
      %3277 = vmatprep.subr.mxu0 0.0
      %3278 = vmatpush1.msra.mxu0 %v3208
      %3279 = vmatprep.subr.mxu0 0.0
      %3280 = vmatpush1.msra.mxu0 %v3209
      %3281 = vmatprep.subr.mxu0 0.0
      %3282 = vmatpush1.msra.mxu0 %v3210
      %3283 = vmatprep.subr.mxu0 0.0
      %3284 = vmatpush1.msra.mxu0 %v3211
      %3285 = vmatprep.subr.mxu0 0.0
      %3286 = vmatpush1.msra.mxu0 %v3212
      %3287 = vmatprep.subr.mxu0 0.0
      %3288 = vmatpush1.msra.mxu0 %v3213
      %3289 = vmatprep.subr.mxu0 0.0
      %3290 = vmatpush1.msra.mxu0 %v3214
      %3291 = vmatprep.subr.mxu0 0.0
      %3292 = vmatpush1.msra.mxu0 %v3215
      %3293 = vmatprep.subr.mxu0 0.0
      %3294 = vmatpush1.msra.mxu0 %v3216
      %3295 = vmatprep.subr.mxu0 0.0
      %3296 = vmatpush1.msra.mxu0 %v3217
      %3297 = vmatprep.subr.mxu0 0.0
      %3298 = vmatpush1.msra.mxu0 %v3218
      %3299 = vmatprep.subr.mxu0 0.0
      %3300 = vmatpush1.msra.mxu0 0.0
      %3301 = vmatprep.subr.mxu0 0.0
      %3302 = vmatpush1.msra.mxu0 0.0
      %3303 = vmatprep.subr.mxu0 0.0
      %3304 = vmatpush1.msra.mxu0 0.0
      %3305 = vmatprep.subr.mxu0 0.0
      %3306 = vmatpush1.msra.mxu0 0.0
      %3307 = vmatprep.subr.mxu0 0.0
      %3308 = vmatpush1.msra.mxu0 0.0
      %3309 = vmatprep.subr.mxu0 0.0
      %3310 = vmatpush1.msra.mxu0 0.0
      %3311 = vmatprep.subr.mxu0 0.0
      %3312 = vmatpush1.msra.mxu0 0.0
      %3313 = vmatprep.subr.mxu0 0.0
      %3314 = vmatpush1.msra.mxu0 0.0
      %3315 = vmatprep.subr.mxu0 0.0
      %3316 = vmatpush1.msra.mxu0 0.0
      %3317 = vmatprep.subr.mxu0 0.0
      %3318 = vmatpush1.msra.mxu0 0.0
      %3319 = vmatprep.subr.mxu0 0.0
      %3320 = vmatpush1.msra.mxu0 0.0
      %3321 = vmatprep.subr.mxu0 0.0
      %3322 = vmatpush1.msra.mxu0 0.0
      %3323 = vmatprep.subr.mxu0 0.0
      %3324 = vmatpush1.msra.mxu0 0.0
      %3325 = vmatprep.subr.mxu0 0.0
      %3326 = vmatpush1.msra.mxu0 0.0
      %3327 = vmatprep.subr.mxu0 0.0
      %3328 = vmatpush1.msra.mxu0 0.0
      %3329 = vmatprep.subr.mxu0 0.0
      %3330 = vmatpush1.msra.mxu0 0.0
      %3331 = vmatprep.mubr.f32.mxu0 0.0
      %3332 = vmatmul.mubr.f32.gmra.mrb[0].mxu0 %v2948
      %v3333 = vpop.f32.mrb[0].mxu0
      %v3334 = vadd.f32 0.0, %v3333
      %v3335 = vpop.f32.mrb[0].mxu0
      %3336 = vmatprep.mubr.f32.mxu0 0.0
      %3337 = vmatmul.mubr.f32.gmra.mrb[0].mxu0 %v2950
      %v3338 = vpop.f32.mrb[0].mxu0
      %v3339 = vadd.f32 0.0, %v3338
      %v3340 = vpop.f32.mrb[0].mxu0
      %3341 = vmatprep.mubr.f32.mxu0 0.0
      %3342 = vmatmul.mubr.f32.gmra.mrb[0].mxu0 %v2952
      %v3343 = vpop.f32.mrb[0].mxu0
      %v3344 = vadd.f32 0.0, %v3343
      %v3345 = vpop.f32.mrb[0].mxu0
      %3346 = vmatprep.mubr.f32.mxu0 0.0
      %3347 = vmatmul.mubr.f32.gmra.mrb[0].mxu0 %v2954
      %v3348 = vpop.f32.mrb[0].mxu0
      %v3349 = vadd.f32 0.0, %v3348
      %v3350 = vpop.f32.mrb[0].mxu0
      %3351 = vmatprep.mubr.f32.mxu0 0.0
      %3352 = vmatmul.mubr.f32.gmra.mrb[0].mxu0 %v2956
      %v3353 = vpop.f32.mrb[0].mxu0
      %v3354 = vadd.f32 0.0, %v3353
      %v3355 = vpop.f32.mrb[0].mxu0
      %3356 = vmatprep.mubr.f32.mxu0 0.0
      %3357 = vmatmul.mubr.f32.gmra.mrb[0].mxu0 %v2958
      %v3358 = vpop.f32.mrb[0].mxu0
      %v3359 = vadd.f32 0.0, %v3358
      %v3360 = vpop.f32.mrb[0].mxu0
      %3361 = vmatprep.mubr.f32.mxu0 0.0
      %3362 = vmatmul.mubr.f32.gmra.mrb[0].mxu0 %v2960
      %v3363 = vpop.f32.mrb[0].mxu0
      %v3364 = vadd.f32 0.0, %v3363
      %v3365 = vpop.f32.mrb[0].mxu0
      %3366 = vmatprep.mubr.f32.mxu0 0.0
      %3367 = vmatmul.mubr.f32.gmra.mrb[0].mxu0 %v2962
      %v3368 = vpop.f32.mrb[0].mxu0
      %v3369 = vadd.f32 0.0, %v3368
      %v3370 = vpop.f32.mrb[0].mxu0
      %3371 = vmatprep.mubr.f32.mxu0 0.0
      %3372 = vmatmul.mubr.f32.gmra.mrb[0].mxu0 %v2964
      %v3373 = vpop.f32.mrb[0].mxu0
      %v3374 = vadd.f32 0.0, %v3373
      %v3375 = vpop.f32.mrb[0].mxu0
      %3376 = vmatprep.mubr.f32.mxu0 0.0
      %3377 = vmatmul.mubr.f32.gmra.mrb[0].mxu0 %v2966
      %v3378 = vpop.f32.mrb[0].mxu0
      %v3379 = vadd.f32 0.0, %v3378
      %v3380 = vpop.f32.mrb[0].mxu0
      %3381 = vmatprep.mubr.f32.mxu0 0.0
      %3382 = vmatmul.mubr.f32.gmra.mrb[0].mxu0 %v2968
      %v3383 = vpop.f32.mrb[0].mxu0
      %v3384 = vadd.f32 0.0, %v3383
      %v3385 = vpop.f32.mrb[0].mxu0
      %3386 = vmatprep.mubr.f32.mxu0 0.0
      %3387 = vmatmul.mubr.f32.gmra.mrb[0].mxu0 %v2970
      %v3388 = vpop.f32.mrb[0].mxu0
      %v3389 = vadd.f32 0.0, %v3388
      %v3390 = vpop.f32.mrb[0].mxu0
      %3391 = vmatprep.mubr.f32.mxu0 0.0
      %3392 = vmatmul.mubr.f32.gmra.mrb[0].mxu0 %v2972
      %v3393 = vpop.f32.mrb[0].mxu0
      %v3394 = vadd.f32 0.0, %v3393
      %v3395 = vpop.f32.mrb[0].mxu0
      %3396 = vmatprep.mubr.f32.mxu0 0.0
      %3397 = vmatmul.mubr.f32.gmra.mrb[0].mxu0 %v2974
      %v3398 = vpop.f32.mrb[0].mxu0
      %v3399 = vadd.f32 0.0, %v3398
      %v3400 = vpop.f32.mrb[0].mxu0
      %3401 = vmatprep.mubr.f32.mxu0 0.0
      %3402 = vmatmul.mubr.f32.gmra.mrb[0].mxu0 %v2976
      %v3403 = vpop.f32.mrb[0].mxu0
      %v3404 = vadd.f32 0.0, %v3403
      %v3405 = vpop.f32.mrb[0].mxu0
      %3406 = vmatprep.mubr.f32.mxu0 0.0
      %3407 = vmatmul.mubr.f32.gmra.mrb[0].mxu0 %v2978
      %v3408 = vpop.f32.mrb[0].mxu0
      %v3409 = vadd.f32 0.0, %v3408
      %v3410 = vpop.f32.mrb[0].mxu0
      %3411 = vdwg.mxu0
      %3412 = vmatprep.subr.mxu0 0.0
      %3413 = vmatpush1.msra.mxu0 %v3219
      %3414 = vmatprep.subr.mxu0 0.0
      %3415 = vmatpush1.msra.mxu0 %v3220
      %3416 = vmatprep.subr.mxu0 0.0
      %3417 = vmatpush1.msra.mxu0 %v3221
      %3418 = vmatprep.subr.mxu0 0.0
      %3419 = vmatpush1.msra.mxu0 %v3222
      %3420 = vmatprep.subr.mxu0 0.0
      %3421 = vmatpush1.msra.mxu0 %v3223
      %3422 = vmatprep.subr.mxu0 0.0
      %3423 = vmatpush1.msra.mxu0 %v3224
      %3424 = vmatprep.subr.mxu0 0.0
      %3425 = vmatpush1.msra.mxu0 %v3225
      %3426 = vmatprep.subr.mxu0 0.0
      %3427 = vmatpush1.msra.mxu0 %v3226
      %3428 = vmatprep.subr.mxu0 0.0
      %3429 = vmatpush1.msra.mxu0 %v3227
      %3430 = vmatprep.subr.mxu0 0.0
      %3431 = vmatpush1.msra.mxu0 %v3228
      %3432 = vmatprep.subr.mxu0 0.0
      %3433 = vmatpush1.msra.mxu0 %v3229
      %3434 = vmatprep.subr.mxu0 0.0
      %3435 = vmatpush1.msra.mxu0 %v3230
      %3436 = vmatprep.subr.mxu0 0.0
      %3437 = vmatpush1.msra.mxu0 %v3231
      %3438 = vmatprep.subr.mxu0 0.0
      %3439 = vmatpush1.msra.mxu0 %v3232
      %3440 = vmatprep.subr.mxu0 0.0
      %3441 = vmatpush1.msra.mxu0 %v3233
      %3442 = vmatprep.subr.mxu0 0.0
      %3443 = vmatpush1.msra.mxu0 %v3234
      %3444 = vmatprep.subr.mxu0 0.0
      %3445 = vmatpush1.msra.mxu0 0.0
      %3446 = vmatprep.subr.mxu0 0.0
      %3447 = vmatpush1.msra.mxu0 0.0
      %3448 = vmatprep.subr.mxu0 0.0
      %3449 = vmatpush1.msra.mxu0 0.0
      %3450 = vmatprep.subr.mxu0 0.0
      %3451 = vmatpush1.msra.mxu0 0.0
      %3452 = vmatprep.subr.mxu0 0.0
      %3453 = vmatpush1.msra.mxu0 0.0
      %3454 = vmatprep.subr.mxu0 0.0
      %3455 = vmatpush1.msra.mxu0 0.0
      %3456 = vmatprep.subr.mxu0 0.0
      %3457 = vmatpush1.msra.mxu0 0.0
      %3458 = vmatprep.subr.mxu0 0.0
      %3459 = vmatpush1.msra.mxu0 0.0
      %3460 = vmatprep.subr.mxu0 0.0
      %3461 = vmatpush1.msra.mxu0 0.0
      %3462 = vmatprep.subr.mxu0 0.0
      %3463 = vmatpush1.msra.mxu0 0.0
      %3464 = vmatprep.subr.mxu0 0.0
      %3465 = vmatpush1.msra.mxu0 0.0
      %3466 = vmatprep.subr.mxu0 0.0
      %3467 = vmatpush1.msra.mxu0 0.0
      %3468 = vmatprep.subr.mxu0 0.0
      %3469 = vmatpush1.msra.mxu0 0.0
      %3470 = vmatprep.subr.mxu0 0.0
      %3471 = vmatpush1.msra.mxu0 0.0
      %3472 = vmatprep.subr.mxu0 0.0
      %3473 = vmatpush1.msra.mxu0 0.0
      %3474 = vmatprep.subr.mxu0 0.0
      %3475 = vmatpush1.msra.mxu0 0.0
      %3476 = vmatprep.mubr.f32.mxu0 0.0
      %3477 = vmatmul.mubr.f32.gmra.mrb[0].mxu0 %v2980
      %v3478 = vpop.f32.mrb[0].mxu0
      %v3479 = vadd.f32 0.0, %v3478
      %v3480 = vpop.f32.mrb[0].mxu0
      %3481 = vmatprep.mubr.f32.mxu0 0.0
      %3482 = vmatmul.mubr.f32.gmra.mrb[0].mxu0 %v2982
      %v3483 = vpop.f32.mrb[0].mxu0
      %v3484 = vadd.f32 0.0, %v3483
      %v3485 = vpop.f32.mrb[0].mxu0
      %3486 = vmatprep.mubr.f32.mxu0 0.0
      %3487 = vmatmul.mubr.f32.gmra.mrb[0].mxu0 %v2984
      %v3488 = vpop.f32.mrb[0].mxu0
      %v3489 = vadd.f32 0.0, %v3488
      %v3490 = vpop.f32.mrb[0].mxu0
      %3491 = vmatprep.mubr.f32.mxu0 0.0
      %3492 = vmatmul.mubr.f32.gmra.mrb[0].mxu0 %v2986
      %v3493 = vpop.f32.mrb[0].mxu0
      %v3494 = vadd.f32 0.0, %v3493
      %v3495 = vpop.f32.mrb[0].mxu0
      %3496 = vmatprep.mubr.f32.mxu0 0.0
      %3497 = vmatmul.mubr.f32.gmra.mrb[0].mxu0 %v2988
      %v3498 = vpop.f32.mrb[0].mxu0
      %v3499 = vadd.f32 0.0, %v3498
      %v3500 = vpop.f32.mrb[0].mxu0
      %3501 = vmatprep.mubr.f32.mxu0 0.0
      %3502 = vmatmul.mubr.f32.gmra.mrb[0].mxu0 %v2990
      %v3503 = vpop.f32.mrb[0].mxu0
      %v3504 = vadd.f32 0.0, %v3503
      %v3505 = vpop.f32.mrb[0].mxu0
      %3506 = vmatprep.mubr.f32.mxu0 0.0
      %3507 = vmatmul.mubr.f32.gmra.mrb[0].mxu0 %v2992
      %v3508 = vpop.f32.mrb[0].mxu0
      %v3509 = vadd.f32 0.0, %v3508
      %v3510 = vpop.f32.mrb[0].mxu0
      %3511 = vmatprep.mubr.f32.mxu0 0.0
      %3512 = vmatmul.mubr.f32.gmra.mrb[0].mxu0 %v2994
      %v3513 = vpop.f32.mrb[0].mxu0
      %v3514 = vadd.f32 0.0, %v3513
      %v3515 = vpop.f32.mrb[0].mxu0
      %3516 = vmatprep.mubr.f32.mxu0 0.0
      %3517 = vmatmul.mubr.f32.gmra.mrb[0].mxu0 %v2996
      %v3518 = vpop.f32.mrb[0].mxu0
      %v3519 = vadd.f32 0.0, %v3518
      %v3520 = vpop.f32.mrb[0].mxu0
      %3521 = vmatprep.mubr.f32.mxu0 0.0
      %3522 = vmatmul.mubr.f32.gmra.mrb[0].mxu0 %v2998
      %v3523 = vpop.f32.mrb[0].mxu0
      %v3524 = vadd.f32 0.0, %v3523
      %v3525 = vpop.f32.mrb[0].mxu0
      %3526 = vmatprep.mubr.f32.mxu0 0.0
      %3527 = vmatmul.mubr.f32.gmra.mrb[0].mxu0 %v3000
      %v3528 = vpop.f32.mrb[0].mxu0
      %v3529 = vadd.f32 0.0, %v3528
      %v3530 = vpop.f32.mrb[0].mxu0
      %3531 = vmatprep.mubr.f32.mxu0 0.0
      %3532 = vmatmul.mubr.f32.gmra.mrb[0].mxu0 %v3002
      %v3533 = vpop.f32.mrb[0].mxu0
      %v3534 = vadd.f32 0.0, %v3533
      %v3535 = vpop.f32.mrb[0].mxu0
      %3536 = vmatprep.mubr.f32.mxu0 0.0
      %3537 = vmatmul.mubr.f32.gmra.mrb[0].mxu0 %v3004
      %v3538 = vpop.f32.mrb[0].mxu0
      %v3539 = vadd.f32 0.0, %v3538
      %v3540 = vpop.f32.mrb[0].mxu0
      %3541 = vmatprep.mubr.f32.mxu0 0.0
      %3542 = vmatmul.mubr.f32.gmra.mrb[0].mxu0 %v3006
      %v3543 = vpop.f32.mrb[0].mxu0
      %v3544 = vadd.f32 0.0, %v3543
      %v3545 = vpop.f32.mrb[0].mxu0
      %3546 = vmatprep.mubr.f32.mxu0 0.0
      %3547 = vmatmul.mubr.f32.gmra.mrb[0].mxu0 %v3008
      %v3548 = vpop.f32.mrb[0].mxu0
      %v3549 = vadd.f32 0.0, %v3548
      %v3550 = vpop.f32.mrb[0].mxu0
      %3551 = vmatprep.mubr.f32.mxu0 0.0
      %3552 = vmatmul.mubr.f32.gmra.mrb[0].mxu0 %v3010
      %v3553 = vpop.f32.mrb[0].mxu0
      %v3554 = vadd.f32 0.0, %v3553
      %v3555 = vpop.f32.mrb[0].mxu0
      %3556 = vdwg.mxu0
      %3557 = vmatprep.subr.mxu0 0.0
      %3558 = vmatpush1.msra.mxu0 %v3235
      %3559 = vmatprep.subr.mxu0 0.0
      %3560 = vmatpush1.msra.mxu0 %v3236
      %3561 = vmatprep.subr.mxu0 0.0
      %3562 = vmatpush1.msra.mxu0 %v3237
      %3563 = vmatprep.subr.mxu0 0.0
      %3564 = vmatpush1.msra.mxu0 %v3238
      %3565 = vmatprep.subr.mxu0 0.0
      %3566 = vmatpush1.msra.mxu0 %v3239
      %3567 = vmatprep.subr.mxu0 0.0
      %3568 = vmatpush1.msra.mxu0 %v3240
      %3569 = vmatprep.subr.mxu0 0.0
      %3570 = vmatpush1.msra.mxu0 %v3241
      %3571 = vmatprep.subr.mxu0 0.0
      %3572 = vmatpush1.msra.mxu0 %v3242
      %3573 = vmatprep.subr.mxu0 0.0
      %3574 = vmatpush1.msra.mxu0 %v3243
      %3575 = vmatprep.subr.mxu0 0.0
      %3576 = vmatpush1.msra.mxu0 %v3244
      %3577 = vmatprep.subr.mxu0 0.0
      %3578 = vmatpush1.msra.mxu0 %v3245
      %3579 = vmatprep.subr.mxu0 0.0
      %3580 = vmatpush1.msra.mxu0 %v3246
      %3581 = vmatprep.subr.mxu0 0.0
      %3582 = vmatpush1.msra.mxu0 %v3247
      %3583 = vmatprep.subr.mxu0 0.0
      %3584 = vmatpush1.msra.mxu0 %v3248
      %3585 = vmatprep.subr.mxu0 0.0
      %3586 = vmatpush1.msra.mxu0 %v3249
      %3587 = vmatprep.subr.mxu0 0.0
      %3588 = vmatpush1.msra.mxu0 %v3250
      %3589 = vmatprep.subr.mxu0 0.0
      %3590 = vmatpush1.msra.mxu0 0.0
      %3591 = vmatprep.subr.mxu0 0.0
      %3592 = vmatpush1.msra.mxu0 0.0
      %3593 = vmatprep.subr.mxu0 0.0
      %3594 = vmatpush1.msra.mxu0 0.0
      %3595 = vmatprep.subr.mxu0 0.0
      %3596 = vmatpush1.msra.mxu0 0.0
      %3597 = vmatprep.subr.mxu0 0.0
      %3598 = vmatpush1.msra.mxu0 0.0
      %3599 = vmatprep.subr.mxu0 0.0
      %3600 = vmatpush1.msra.mxu0 0.0
      %3601 = vmatprep.subr.mxu0 0.0
      %3602 = vmatpush1.msra.mxu0 0.0
      %3603 = vmatprep.subr.mxu0 0.0
      %3604 = vmatpush1.msra.mxu0 0.0
      %3605 = vmatprep.subr.mxu0 0.0
      %3606 = vmatpush1.msra.mxu0 0.0
      %3607 = vmatprep.subr.mxu0 0.0
      %3608 = vmatpush1.msra.mxu0 0.0
      %3609 = vmatprep.subr.mxu0 0.0
      %3610 = vmatpush1.msra.mxu0 0.0
      %3611 = vmatprep.subr.mxu0 0.0
      %3612 = vmatpush1.msra.mxu0 0.0
      %3613 = vmatprep.subr.mxu0 0.0
      %3614 = vmatpush1.msra.mxu0 0.0
      %3615 = vmatprep.subr.mxu0 0.0
      %3616 = vmatpush1.msra.mxu0 0.0
      %3617 = vmatprep.subr.mxu0 0.0
      %3618 = vmatpush1.msra.mxu0 0.0
      %3619 = vmatprep.subr.mxu0 0.0
      %3620 = vmatpush1.msra.mxu0 0.0
      %3621 = vmatprep.mubr.f32.mxu0 0.0
      %3622 = vmatmul.mubr.f32.gmra.mrb[0].mxu0 %v3012
      %v3623 = vpop.f32.mrb[0].mxu0
      %v3624 = vadd.f32 0.0, %v3623
      %v3625 = vpop.f32.mrb[0].mxu0
      %3626 = vmatprep.mubr.f32.mxu0 0.0
      %3627 = vmatmul.mubr.f32.gmra.mrb[0].mxu0 %v3014
      %v3628 = vpop.f32.mrb[0].mxu0
      %v3629 = vadd.f32 0.0, %v3628
      %v3630 = vpop.f32.mrb[0].mxu0
      %3631 = vmatprep.mubr.f32.mxu0 0.0
      %3632 = vmatmul.mubr.f32.gmra.mrb[0].mxu0 %v3016
      %v3633 = vpop.f32.mrb[0].mxu0
      %v3634 = vadd.f32 0.0, %v3633
      %v3635 = vpop.f32.mrb[0].mxu0
      %3636 = vmatprep.mubr.f32.mxu0 0.0
      %3637 = vmatmul.mubr.f32.gmra.mrb[0].mxu0 %v3018
      %v3638 = vpop.f32.mrb[0].mxu0
      %v3639 = vadd.f32 0.0, %v3638
      %v3640 = vpop.f32.mrb[0].mxu0
      %3641 = vmatprep.mubr.f32.mxu0 0.0
      %3642 = vmatmul.mubr.f32.gmra.mrb[0].mxu0 %v3020
      %v3643 = vpop.f32.mrb[0].mxu0
      %v3644 = vadd.f32 0.0, %v3643
      %v3645 = vpop.f32.mrb[0].mxu0
      %3646 = vmatprep.mubr.f32.mxu0 0.0
      %3647 = vmatmul.mubr.f32.gmra.mrb[0].mxu0 %v3022
      %v3648 = vpop.f32.mrb[0].mxu0
      %v3649 = vadd.f32 0.0, %v3648
      %v3650 = vpop.f32.mrb[0].mxu0
      %3651 = vmatprep.mubr.f32.mxu0 0.0
      %3652 = vmatmul.mubr.f32.gmra.mrb[0].mxu0 %v3024
      %v3653 = vpop.f32.mrb[0].mxu0
      %v3654 = vadd.f32 0.0, %v3653
      %v3655 = vpop.f32.mrb[0].mxu0
      %3656 = vmatprep.mubr.f32.mxu0 0.0
      %3657 = vmatmul.mubr.f32.gmra.mrb[0].mxu0 %v3026
      %v3658 = vpop.f32.mrb[0].mxu0
      %v3659 = vadd.f32 0.0, %v3658
      %v3660 = vpop.f32.mrb[0].mxu0
      %3661 = vmatprep.mubr.f32.mxu0 0.0
      %3662 = vmatmul.mubr.f32.gmra.mrb[0].mxu0 %v3028
      %v3663 = vpop.f32.mrb[0].mxu0
      %v3664 = vadd.f32 0.0, %v3663
      %v3665 = vpop.f32.mrb[0].mxu0
      %3666 = vmatprep.mubr.f32.mxu0 0.0
      %3667 = vmatmul.mubr.f32.gmra.mrb[0].mxu0 %v3030
      %v3668 = vpop.f32.mrb[0].mxu0
      %v3669 = vadd.f32 0.0, %v3668
      %v3670 = vpop.f32.mrb[0].mxu0
      %3671 = vmatprep.mubr.f32.mxu0 0.0
      %3672 = vmatmul.mubr.f32.gmra.mrb[0].mxu0 %v3032
      %v3673 = vpop.f32.mrb[0].mxu0
      %v3674 = vadd.f32 0.0, %v3673
      %v3675 = vpop.f32.mrb[0].mxu0
      %3676 = vmatprep.mubr.f32.mxu0 0.0
      %3677 = vmatmul.mubr.f32.gmra.mrb[0].mxu0 %v3034
      %v3678 = vpop.f32.mrb[0].mxu0
      %v3679 = vadd.f32 0.0, %v3678
      %v3680 = vpop.f32.mrb[0].mxu0
      %3681 = vmatprep.mubr.f32.mxu0 0.0
      %3682 = vmatmul.mubr.f32.gmra.mrb[0].mxu0 %v3036
      %v3683 = vpop.f32.mrb[0].mxu0
      %v3684 = vadd.f32 0.0, %v3683
      %v3685 = vpop.f32.mrb[0].mxu0
      %3686 = vmatprep.mubr.f32.mxu0 0.0
      %3687 = vmatmul.mubr.f32.gmra.mrb[0].mxu0 %v3038
      %v3688 = vpop.f32.mrb[0].mxu0
      %v3689 = vadd.f32 0.0, %v3688
      %v3690 = vpop.f32.mrb[0].mxu0
      %3691 = vmatprep.mubr.f32.mxu0 0.0
      %3692 = vmatmul.mubr.f32.gmra.mrb[0].mxu0 %v3040
      %v3693 = vpop.f32.mrb[0].mxu0
      %v3694 = vadd.f32 0.0, %v3693
      %v3695 = vpop.f32.mrb[0].mxu0
      %3696 = vmatprep.mubr.f32.mxu0 0.0
      %3697 = vmatmul.mubr.f32.gmra.mrb[0].mxu0 %v3042
      %v3698 = vpop.f32.mrb[0].mxu0
      %v3699 = vadd.f32 0.0, %v3698
      %v3700 = vpop.f32.mrb[0].mxu0
      %3701 = vdwg.mxu0
      %3702 = vmatprep.subr.mxu0 0.0
      %3703 = vmatpush1.msra.mxu0 %v3251
      %3704 = vmatprep.subr.mxu0 0.0
      %3705 = vmatpush1.msra.mxu0 %v3252
      %3706 = vmatprep.subr.mxu0 0.0
      %3707 = vmatpush1.msra.mxu0 %v3253
      %3708 = vmatprep.subr.mxu0 0.0
      %3709 = vmatpush1.msra.mxu0 %v3254
      %3710 = vmatprep.subr.mxu0 0.0
      %3711 = vmatpush1.msra.mxu0 %v3255
      %3712 = vmatprep.subr.mxu0 0.0
      %3713 = vmatpush1.msra.mxu0 %v3256
      %3714 = vmatprep.subr.mxu0 0.0
      %3715 = vmatpush1.msra.mxu0 %v3257
      %3716 = vmatprep.subr.mxu0 0.0
      %3717 = vmatpush1.msra.mxu0 %v3258
      %3718 = vmatprep.subr.mxu0 0.0
      %3719 = vmatpush1.msra.mxu0 %v3259
      %3720 = vmatprep.subr.mxu0 0.0
      %3721 = vmatpush1.msra.mxu0 %v3260
      %3722 = vmatprep.subr.mxu0 0.0
      %3723 = vmatpush1.msra.mxu0 %v3261
      %3724 = vmatprep.subr.mxu0 0.0
      %3725 = vmatpush1.msra.mxu0 %v3262
      %3726 = vmatprep.subr.mxu0 0.0
      %3727 = vmatpush1.msra.mxu0 %v3263
      %3728 = vmatprep.subr.mxu0 0.0
      %3729 = vmatpush1.msra.mxu0 %v3264
      %3730 = vmatprep.subr.mxu0 0.0
      %3731 = vmatpush1.msra.mxu0 %v3265
      %3732 = vmatprep.subr.mxu0 0.0
      %3733 = vmatpush1.msra.mxu0 %v3266
      %3734 = vmatprep.subr.mxu0 0.0
      %3735 = vmatpush1.msra.mxu0 0.0
      %3736 = vmatprep.subr.mxu0 0.0
      %3737 = vmatpush1.msra.mxu0 0.0
      %3738 = vmatprep.subr.mxu0 0.0
      %3739 = vmatpush1.msra.mxu0 0.0
      %3740 = vmatprep.subr.mxu0 0.0
      %3741 = vmatpush1.msra.mxu0 0.0
      %3742 = vmatprep.subr.mxu0 0.0
      %3743 = vmatpush1.msra.mxu0 0.0
      %3744 = vmatprep.subr.mxu0 0.0
      %3745 = vmatpush1.msra.mxu0 0.0
      %3746 = vmatprep.subr.mxu0 0.0
      %3747 = vmatpush1.msra.mxu0 0.0
      %3748 = vmatprep.subr.mxu0 0.0
      %3749 = vmatpush1.msra.mxu0 0.0
      %3750 = vmatprep.subr.mxu0 0.0
      %3751 = vmatpush1.msra.mxu0 0.0
      %3752 = vmatprep.subr.mxu0 0.0
      %3753 = vmatpush1.msra.mxu0 0.0
      %3754 = vmatprep.subr.mxu0 0.0
      %3755 = vmatpush1.msra.mxu0 0.0
      %3756 = vmatprep.subr.mxu0 0.0
      %3757 = vmatpush1.msra.mxu0 0.0
      %3758 = vmatprep.subr.mxu0 0.0
      %3759 = vmatpush1.msra.mxu0 0.0
      %3760 = vmatprep.subr.mxu0 0.0
      %3761 = vmatpush1.msra.mxu0 0.0
      %3762 = vmatprep.subr.mxu0 0.0
      %3763 = vmatpush1.msra.mxu0 0.0
      %3764 = vmatprep.subr.mxu0 0.0
      %3765 = vmatpush1.msra.mxu0 0.0
      %3766 = vmatprep.mubr.f32.mxu0 0.0
      %3767 = vmatmul.mubr.f32.gmra.mrb[0].mxu0 %v3044
      %v3768 = vpop.f32.mrb[0].mxu0
      %v3769 = vadd.f32 0.0, %v3768
      %v3770 = vpop.f32.mrb[0].mxu0
      %3771 = vmatprep.mubr.f32.mxu0 0.0
      %3772 = vmatmul.mubr.f32.gmra.mrb[0].mxu0 %v3046
      %v3773 = vpop.f32.mrb[0].mxu0
      %v3774 = vadd.f32 0.0, %v3773
      %v3775 = vpop.f32.mrb[0].mxu0
      %3776 = vmatprep.mubr.f32.mxu0 0.0
      %3777 = vmatmul.mubr.f32.gmra.mrb[0].mxu0 %v3048
      %v3778 = vpop.f32.mrb[0].mxu0
      %v3779 = vadd.f32 0.0, %v3778
      %v3780 = vpop.f32.mrb[0].mxu0
      %3781 = vmatprep.mubr.f32.mxu0 0.0
      %3782 = vmatmul.mubr.f32.gmra.mrb[0].mxu0 %v3050
      %v3783 = vpop.f32.mrb[0].mxu0
      %v3784 = vadd.f32 0.0, %v3783
      %v3785 = vpop.f32.mrb[0].mxu0
      %3786 = vmatprep.mubr.f32.mxu0 0.0
      %3787 = vmatmul.mubr.f32.gmra.mrb[0].mxu0 %v3052
      %v3788 = vpop.f32.mrb[0].mxu0
      %v3789 = vadd.f32 0.0, %v3788
      %v3790 = vpop.f32.mrb[0].mxu0
      %3791 = vmatprep.mubr.f32.mxu0 0.0
      %3792 = vmatmul.mubr.f32.gmra.mrb[0].mxu0 %v3054
      %v3793 = vpop.f32.mrb[0].mxu0
      %v3794 = vadd.f32 0.0, %v3793
      %v3795 = vpop.f32.mrb[0].mxu0
      %3796 = vmatprep.mubr.f32.mxu0 0.0
      %3797 = vmatmul.mubr.f32.gmra.mrb[0].mxu0 %v3056
      %v3798 = vpop.f32.mrb[0].mxu0
      %v3799 = vadd.f32 0.0, %v3798
      %v3800 = vpop.f32.mrb[0].mxu0
      %3801 = vmatprep.mubr.f32.mxu0 0.0
      %3802 = vmatmul.mubr.f32.gmra.mrb[0].mxu0 %v3058
      %v3803 = vpop.f32.mrb[0].mxu0
      %v3804 = vadd.f32 0.0, %v3803
      %v3805 = vpop.f32.mrb[0].mxu0
      %3806 = vmatprep.mubr.f32.mxu0 0.0
      %3807 = vmatmul.mubr.f32.gmra.mrb[0].mxu0 %v3060
      %v3808 = vpop.f32.mrb[0].mxu0
      %v3809 = vadd.f32 0.0, %v3808
      %v3810 = vpop.f32.mrb[0].mxu0
      %3811 = vmatprep.mubr.f32.mxu0 0.0
      %3812 = vmatmul.mubr.f32.gmra.mrb[0].mxu0 %v3062
      %v3813 = vpop.f32.mrb[0].mxu0
      %v3814 = vadd.f32 0.0, %v3813
      %v3815 = vpop.f32.mrb[0].mxu0
      %3816 = vmatprep.mubr.f32.mxu0 0.0
      %3817 = vmatmul.mubr.f32.gmra.mrb[0].mxu0 %v3064
      %v3818 = vpop.f32.mrb[0].mxu0
      %v3819 = vadd.f32 0.0, %v3818
      %v3820 = vpop.f32.mrb[0].mxu0
      %3821 = vmatprep.mubr.f32.mxu0 0.0
      %3822 = vmatmul.mubr.f32.gmra.mrb[0].mxu0 %v3066
      %v3823 = vpop.f32.mrb[0].mxu0
      %v3824 = vadd.f32 0.0, %v3823
      %v3825 = vpop.f32.mrb[0].mxu0
      %3826 = vmatprep.mubr.f32.mxu0 0.0
      %3827 = vmatmul.mubr.f32.gmra.mrb[0].mxu0 %v3068
      %v3828 = vpop.f32.mrb[0].mxu0
      %v3829 = vadd.f32 0.0, %v3828
      %v3830 = vpop.f32.mrb[0].mxu0
      %3831 = vmatprep.mubr.f32.mxu0 0.0
      %3832 = vmatmul.mubr.f32.gmra.mrb[0].mxu0 %v3070
      %v3833 = vpop.f32.mrb[0].mxu0
      %v3834 = vadd.f32 0.0, %v3833
      %v3835 = vpop.f32.mrb[0].mxu0
      %3836 = vmatprep.mubr.f32.mxu0 0.0
      %3837 = vmatmul.mubr.f32.gmra.mrb[0].mxu0 %v3072
      %v3838 = vpop.f32.mrb[0].mxu0
      %v3839 = vadd.f32 0.0, %v3838
      %v3840 = vpop.f32.mrb[0].mxu0
      %3841 = vmatprep.mubr.f32.mxu0 0.0
      %3842 = vmatmul.mubr.f32.gmra.mrb[0].mxu0 %v3074
      %v3843 = vpop.f32.mrb[0].mxu0
      %v3844 = vadd.f32 0.0, %v3843
      %v3845 = vpop.f32.mrb[0].mxu0
      %3846 = vdwg.mxu0
      %v3847 = vrcp.pop %v3076
      %v3848 = vrcp.pop %v3078
      %v3849 = vrcp.pop %v3080
      %v3850 = vrcp.pop %v3082
      %v3851 = vrcp.pop %v3084
      %v3852 = vrcp.pop %v3086
      %v3853 = vrcp.pop %v3088
      %v3854 = vrcp.pop %v3090
      %v3855 = vrcp.pop %v3092
      %v3856 = vrcp.pop %v3094
      %v3857 = vrcp.pop %v3096
      %v3858 = vrcp.pop %v3098
      %v3859 = vrcp.pop %v3100
      %v3860 = vrcp.pop %v3102
      %v3861 = vrcp.pop %v3104
      %v3862 = vrcp.pop %v3106
      %v3863 = vrcp.pop %v3108
      %v3864 = vrcp.pop %v3110
      %v3865 = vrcp.pop %v3112
      %v3866 = vrcp.pop %v3114
      %v3867 = vrcp.pop %v3116
      %v3868 = vrcp.pop %v3118
      %v3869 = vrcp.pop %v3120
      %v3870 = vrcp.pop %v3122
      %v3871 = vrcp.pop %v3124
      %v3872 = vrcp.pop %v3126
      %v3873 = vrcp.pop %v3128
      %v3874 = vrcp.pop %v3130
      %v3875 = vrcp.pop %v3132
      %v3876 = vrcp.pop %v3134
      %v3877 = vrcp.pop %v3136
      %v3878 = vrcp.pop %v3138
      %v3879 = vrcp.pop %v3140
      %v3880 = vrcp.pop %v3142
      %v3881 = vrcp.pop %v3144
      %v3882 = vrcp.pop %v3146
      %v3883 = vrcp.pop %v3148
      %v3884 = vrcp.pop %v3150
      %v3885 = vrcp.pop %v3152
      %v3886 = vrcp.pop %v3154
      %v3887 = vrcp.pop %v3156
      %v3888 = vrcp.pop %v3158
      %v3889 = vrcp.pop %v3160
      %v3890 = vrcp.pop %v3162
      %v3891 = vrcp.pop %v3164
      %v3892 = vrcp.pop %v3166
      %v3893 = vrcp.pop %v3168
      %v3894 = vrcp.pop %v3170
      %v3895 = vrcp.pop %v3172
      %v3896 = vrcp.pop %v3174
      %v3897 = vrcp.pop %v3176
      %v3898 = vrcp.pop %v3178
      %v3899 = vrcp.pop %v3180
      %v3900 = vrcp.pop %v3182
      %v3901 = vrcp.pop %v3184
      %v3902 = vrcp.pop %v3186
      %v3903 = vrcp.pop %v3188
      %v3904 = vrcp.pop %v3190
      %v3905 = vrcp.pop %v3192
      %v3906 = vrcp.pop %v3194
      %v3907 = vrcp.pop %v3196
      %v3908 = vrcp.pop %v3198
      %v3909 = vrcp.pop %v3200
      %v3910 = vrcp.pop %v3202
      %v3911 = vmul.f32 %v3334, %v3847
      %v3912 = vmul.f32 %v3339, %v3848
      %v3913 = vmul.f32 %v3344, %v3849
      %v3914 = vmul.f32 %v3349, %v3850
      %v3915 = vmul.f32 %v3354, %v3851
      %v3916 = vmul.f32 %v3359, %v3852
      %v3917 = vmul.f32 %v3364, %v3853
      %v3918 = vmul.f32 %v3369, %v3854
      %v3919 = vmul.f32 %v3374, %v3855
      %v3920 = vmul.f32 %v3379, %v3856
      %v3921 = vmul.f32 %v3384, %v3857
      %v3922 = vmul.f32 %v3389, %v3858
      %v3923 = vmul.f32 %v3394, %v3859
      %v3924 = vmul.f32 %v3399, %v3860
      %v3925 = vmul.f32 %v3404, %v3861
      %v3926 = vmul.f32 %v3409, %v3862
      %v3927 = vmul.f32 %v3479, %v3863
      %v3928 = vmul.f32 %v3484, %v3864
      %v3929 = vmul.f32 %v3489, %v3865
      %v3930 = vmul.f32 %v3494, %v3866
      %v3931 = vmul.f32 %v3499, %v3867
      %v3932 = vmul.f32 %v3504, %v3868
      %v3933 = vmul.f32 %v3509, %v3869
      %v3934 = vmul.f32 %v3514, %v3870
      %v3935 = vmul.f32 %v3519, %v3871
      %v3936 = vmul.f32 %v3524, %v3872
      %v3937 = vmul.f32 %v3529, %v3873
      %v3938 = vmul.f32 %v3534, %v3874
      %v3939 = vmul.f32 %v3539, %v3875
      %v3940 = vmul.f32 %v3544, %v3876
      %v3941 = vmul.f32 %v3549, %v3877
      %v3942 = vmul.f32 %v3554, %v3878
      %v3943 = vmul.f32 %v3624, %v3879
      %v3944 = vmul.f32 %v3629, %v3880
      %v3945 = vmul.f32 %v3634, %v3881
      %v3946 = vmul.f32 %v3639, %v3882
      %v3947 = vmul.f32 %v3644, %v3883
      %v3948 = vmul.f32 %v3649, %v3884
      %v3949 = vmul.f32 %v3654, %v3885
      %v3950 = vmul.f32 %v3659, %v3886
      %v3951 = vmul.f32 %v3664, %v3887
      %v3952 = vmul.f32 %v3669, %v3888
      %v3953 = vmul.f32 %v3674, %v3889
      %v3954 = vmul.f32 %v3679, %v3890
      %v3955 = vmul.f32 %v3684, %v3891
      %v3956 = vmul.f32 %v3689, %v3892
      %v3957 = vmul.f32 %v3694, %v3893
      %v3958 = vmul.f32 %v3699, %v3894
      %v3959 = vmul.f32 %v3769, %v3895
      %v3960 = vmul.f32 %v3774, %v3896
      %v3961 = vmul.f32 %v3779, %v3897
      %v3962 = vmul.f32 %v3784, %v3898
      %v3963 = vmul.f32 %v3789, %v3899
      %v3964 = vmul.f32 %v3794, %v3900
      %v3965 = vmul.f32 %v3799, %v3901
      %v3966 = vmul.f32 %v3804, %v3902
      %v3967 = vmul.f32 %v3809, %v3903
      %v3968 = vmul.f32 %v3814, %v3904
      %v3969 = vmul.f32 %v3819, %v3905
      %v3970 = vmul.f32 %v3824, %v3906
      %v3971 = vmul.f32 %v3829, %v3907
      %v3972 = vmul.f32 %v3834, %v3908
      %v3973 = vmul.f32 %v3839, %v3909
      %v3974 = vmul.f32 %v3844, %v3910
      %3975 = vst.msk [vmem:[#allocation5] sm:$0xff] %vm1721, %v3911
      %3976 = vst.msk [vmem:[#allocation5 + $0x8] sm:$0xff] %vm1721, %v3912
      %3977 = vst.msk [vmem:[#allocation5 + $0x10] sm:$0xff] %vm1721, %v3913
      %3978 = vst.msk [vmem:[#allocation5 + $0x18] sm:$0xff] %vm1721, %v3914
      %3979 = vst.msk [vmem:[#allocation5 + $0x20] sm:$0xff] %vm1721, %v3915
      %3980 = vst.msk [vmem:[#allocation5 + $0x28] sm:$0xff] %vm1721, %v3916
      %3981 = vst.msk [vmem:[#allocation5 + $0x30] sm:$0xff] %vm1721, %v3917
      %3982 = vst.msk [vmem:[#allocation5 + $0x38] sm:$0xff] %vm1721, %v3918
      %3983 = vst.msk [vmem:[#allocation5 + $0x40] sm:$0xff] %vm1721, %v3919
      %3984 = vst.msk [vmem:[#allocation5 + $0x48] sm:$0xff] %vm1721, %v3920
      %3985 = vst.msk [vmem:[#allocation5 + $0x50] sm:$0xff] %vm1721, %v3921
      %3986 = vst.msk [vmem:[#allocation5 + $0x58] sm:$0xff] %vm1721, %v3922
      %3987 = vst.msk [vmem:[#allocation5 + $0x60] sm:$0xff] %vm1721, %v3923
      %3988 = vst.msk [vmem:[#allocation5 + $0x68] sm:$0xff] %vm1721, %v3924
      %3989 = vst.msk [vmem:[#allocation5 + $0x70] sm:$0xff] %vm1721, %v3925
      %3990 = vst.msk [vmem:[#allocation5 + $0x78] sm:$0xff] %vm1721, %v3926
      %4007 = vrot.lane.b32.xlu0 %v3927, 8
      %v4008 = vpop.permute.xlu0 %4007
      %4009 = vrot.lane.b32.xlu0 %v3928, 8
      %v4010 = vpop.permute.xlu0 %4009
      %4011 = vrot.lane.b32.xlu0 %v3929, 8
      %v4012 = vpop.permute.xlu0 %4011
      %4013 = vrot.lane.b32.xlu0 %v3930, 8
      %v4014 = vpop.permute.xlu0 %4013
      %4015 = vrot.lane.b32.xlu0 %v3931, 8
      %v4016 = vpop.permute.xlu0 %4015
      %4017 = vrot.lane.b32.xlu0 %v3932, 8
      %v4018 = vpop.permute.xlu0 %4017
      %4019 = vrot.lane.b32.xlu0 %v3933, 8
      %v4020 = vpop.permute.xlu0 %4019
      %4021 = vrot.lane.b32.xlu0 %v3934, 8
      %v4022 = vpop.permute.xlu0 %4021
      %4023 = vrot.lane.b32.xlu0 %v3935, 8
      %v4024 = vpop.permute.xlu0 %4023
      %4025 = vrot.lane.b32.xlu0 %v3936, 8
      %v4026 = vpop.permute.xlu0 %4025
      %4027 = vrot.lane.b32.xlu0 %v3937, 8
      %v4028 = vpop.permute.xlu0 %4027
      %4029 = vrot.lane.b32.xlu0 %v3938, 8
      %v4030 = vpop.permute.xlu0 %4029
      %4031 = vrot.lane.b32.xlu0 %v3939, 8
      %v4032 = vpop.permute.xlu0 %4031
      %4033 = vrot.lane.b32.xlu0 %v3940, 8
      %v4034 = vpop.permute.xlu0 %4033
      %4035 = vrot.lane.b32.xlu0 %v3941, 8
      %v4036 = vpop.permute.xlu0 %4035
      %4037 = vrot.lane.b32.xlu0 %v3942, 8
      %v4038 = vpop.permute.xlu0 %4037
      %vm4055 = vcmask 130112
      %4056 = vst.msk [vmem:[#allocation5] sm:$0xff] %vm4055, %v4008
      %4057 = vst.msk [vmem:[#allocation5 + $0x8] sm:$0xff] %vm4055, %v4010
      %4058 = vst.msk [vmem:[#allocation5 + $0x10] sm:$0xff] %vm4055, %v4012
      %4059 = vst.msk [vmem:[#allocation5 + $0x18] sm:$0xff] %vm4055, %v4014
      %4060 = vst.msk [vmem:[#allocation5 + $0x20] sm:$0xff] %vm4055, %v4016
      %4061 = vst.msk [vmem:[#allocation5 + $0x28] sm:$0xff] %vm4055, %v4018
      %4062 = vst.msk [vmem:[#allocation5 + $0x30] sm:$0xff] %vm4055, %v4020
      %4063 = vst.msk [vmem:[#allocation5 + $0x38] sm:$0xff] %vm4055, %v4022
      %4064 = vst.msk [vmem:[#allocation5 + $0x40] sm:$0xff] %vm4055, %v4024
      %4065 = vst.msk [vmem:[#allocation5 + $0x48] sm:$0xff] %vm4055, %v4026
      %4066 = vst.msk [vmem:[#allocation5 + $0x50] sm:$0xff] %vm4055, %v4028
      %4067 = vst.msk [vmem:[#allocation5 + $0x58] sm:$0xff] %vm4055, %v4030
      %4068 = vst.msk [vmem:[#allocation5 + $0x60] sm:$0xff] %vm4055, %v4032
      %4069 = vst.msk [vmem:[#allocation5 + $0x68] sm:$0xff] %vm4055, %v4034
      %4070 = vst.msk [vmem:[#allocation5 + $0x70] sm:$0xff] %vm4055, %v4036
      %4071 = vst.msk [vmem:[#allocation5 + $0x78] sm:$0xff] %vm4055, %v4038
      %4088 = vrot.lane.b32.xlu0 %v3943, 16
      %v4089 = vpop.permute.xlu0 %4088
      %4090 = vrot.lane.b32.xlu0 %v3944, 16
      %v4091 = vpop.permute.xlu0 %4090
      %4092 = vrot.lane.b32.xlu0 %v3945, 16
      %v4093 = vpop.permute.xlu0 %4092
      %4094 = vrot.lane.b32.xlu0 %v3946, 16
      %v4095 = vpop.permute.xlu0 %4094
      %4096 = vrot.lane.b32.xlu0 %v3947, 16
      %v4097 = vpop.permute.xlu0 %4096
      %4098 = vrot.lane.b32.xlu0 %v3948, 16
      %v4099 = vpop.permute.xlu0 %4098
      %4100 = vrot.lane.b32.xlu0 %v3949, 16
      %v4101 = vpop.permute.xlu0 %4100
      %4102 = vrot.lane.b32.xlu0 %v3950, 16
      %v4103 = vpop.permute.xlu0 %4102
      %4104 = vrot.lane.b32.xlu0 %v3951, 16
      %v4105 = vpop.permute.xlu0 %4104
      %4106 = vrot.lane.b32.xlu0 %v3952, 16
      %v4107 = vpop.permute.xlu0 %4106
      %4108 = vrot.lane.b32.xlu0 %v3953, 16
      %v4109 = vpop.permute.xlu0 %4108
      %4110 = vrot.lane.b32.xlu0 %v3954, 16
      %v4111 = vpop.permute.xlu0 %4110
      %4112 = vrot.lane.b32.xlu0 %v3955, 16
      %v4113 = vpop.permute.xlu0 %4112
      %4114 = vrot.lane.b32.xlu0 %v3956, 16
      %v4115 = vpop.permute.xlu0 %4114
      %4116 = vrot.lane.b32.xlu0 %v3957, 16
      %v4117 = vpop.permute.xlu0 %4116
      %4118 = vrot.lane.b32.xlu0 %v3958, 16
      %v4119 = vpop.permute.xlu0 %4118
      %vm4136 = vcmask 195712
      %4137 = vst.msk [vmem:[#allocation5] sm:$0xff] %vm4136, %v4089
      %4138 = vst.msk [vmem:[#allocation5 + $0x8] sm:$0xff] %vm4136, %v4091
      %4139 = vst.msk [vmem:[#allocation5 + $0x10] sm:$0xff] %vm4136, %v4093
      %4140 = vst.msk [vmem:[#allocation5 + $0x18] sm:$0xff] %vm4136, %v4095
      %4141 = vst.msk [vmem:[#allocation5 + $0x20] sm:$0xff] %vm4136, %v4097
      %4142 = vst.msk [vmem:[#allocation5 + $0x28] sm:$0xff] %vm4136, %v4099
      %4143 = vst.msk [vmem:[#allocation5 + $0x30] sm:$0xff] %vm4136, %v4101
      %4144 = vst.msk [vmem:[#allocation5 + $0x38] sm:$0xff] %vm4136, %v4103
      %4145 = vst.msk [vmem:[#allocation5 + $0x40] sm:$0xff] %vm4136, %v4105
      %4146 = vst.msk [vmem:[#allocation5 + $0x48] sm:$0xff] %vm4136, %v4107
      %4147 = vst.msk [vmem:[#allocation5 + $0x50] sm:$0xff] %vm4136, %v4109
      %4148 = vst.msk [vmem:[#allocation5 + $0x58] sm:$0xff] %vm4136, %v4111
      %4149 = vst.msk [vmem:[#allocation5 + $0x60] sm:$0xff] %vm4136, %v4113
      %4150 = vst.msk [vmem:[#allocation5 + $0x68] sm:$0xff] %vm4136, %v4115
      %4151 = vst.msk [vmem:[#allocation5 + $0x70] sm:$0xff] %vm4136, %v4117
      %4152 = vst.msk [vmem:[#allocation5 + $0x78] sm:$0xff] %vm4136, %v4119
      %4169 = vrot.lane.b32.xlu0 %v3959, 24
      %v4170 = vpop.permute.xlu0 %4169
      %4171 = vrot.lane.b32.xlu0 %v3960, 24
      %v4172 = vpop.permute.xlu0 %4171
      %4173 = vrot.lane.b32.xlu0 %v3961, 24
      %v4174 = vpop.permute.xlu0 %4173
      %4175 = vrot.lane.b32.xlu0 %v3962, 24
      %v4176 = vpop.permute.xlu0 %4175
      %4177 = vrot.lane.b32.xlu0 %v3963, 24
      %v4178 = vpop.permute.xlu0 %4177
      %4179 = vrot.lane.b32.xlu0 %v3964, 24
      %v4180 = vpop.permute.xlu0 %4179
      %4181 = vrot.lane.b32.xlu0 %v3965, 24
      %v4182 = vpop.permute.xlu0 %4181
      %4183 = vrot.lane.b32.xlu0 %v3966, 24
      %v4184 = vpop.permute.xlu0 %4183
      %4185 = vrot.lane.b32.xlu0 %v3967, 24
      %v4186 = vpop.permute.xlu0 %4185
      %4187 = vrot.lane.b32.xlu0 %v3968, 24
      %v4188 = vpop.permute.xlu0 %4187
      %4189 = vrot.lane.b32.xlu0 %v3969, 24
      %v4190 = vpop.permute.xlu0 %4189
      %4191 = vrot.lane.b32.xlu0 %v3970, 24
      %v4192 = vpop.permute.xlu0 %4191
      %4193 = vrot.lane.b32.xlu0 %v3971, 24
      %v4194 = vpop.permute.xlu0 %4193
      %4195 = vrot.lane.b32.xlu0 %v3972, 24
      %v4196 = vpop.permute.xlu0 %4195
      %4197 = vrot.lane.b32.xlu0 %v3973, 24
      %v4198 = vpop.permute.xlu0 %4197
      %4199 = vrot.lane.b32.xlu0 %v3974, 24
      %v4200 = vpop.permute.xlu0 %4199
      %vm4217 = vcmask 261312
      %4218 = vst.msk [vmem:[#allocation5] sm:$0xff] %vm4217, %v4170
      %4219 = vst.msk [vmem:[#allocation5 + $0x8] sm:$0xff] %vm4217, %v4172
      %4220 = vst.msk [vmem:[#allocation5 + $0x10] sm:$0xff] %vm4217, %v4174
      %4221 = vst.msk [vmem:[#allocation5 + $0x18] sm:$0xff] %vm4217, %v4176
      %4222 = vst.msk [vmem:[#allocation5 + $0x20] sm:$0xff] %vm4217, %v4178
      %4223 = vst.msk [vmem:[#allocation5 + $0x28] sm:$0xff] %vm4217, %v4180
      %4224 = vst.msk [vmem:[#allocation5 + $0x30] sm:$0xff] %vm4217, %v4182
      %4225 = vst.msk [vmem:[#allocation5 + $0x38] sm:$0xff] %vm4217, %v4184
      %4226 = vst.msk [vmem:[#allocation5 + $0x40] sm:$0xff] %vm4217, %v4186
      %4227 = vst.msk [vmem:[#allocation5 + $0x48] sm:$0xff] %vm4217, %v4188
      %4228 = vst.msk [vmem:[#allocation5 + $0x50] sm:$0xff] %vm4217, %v4190
      %4229 = vst.msk [vmem:[#allocation5 + $0x58] sm:$0xff] %vm4217, %v4192
      %4230 = vst.msk [vmem:[#allocation5 + $0x60] sm:$0xff] %vm4217, %v4194
      %4231 = vst.msk [vmem:[#allocation5 + $0x68] sm:$0xff] %vm4217, %v4196
      %4232 = vst.msk [vmem:[#allocation5 + $0x70] sm:$0xff] %vm4217, %v4198
      %4233 = vst.msk [vmem:[#allocation5 + $0x78] sm:$0xff] %vm4217, %v4200
      %v4234 = vld [vmem:[#allocation5] sm:$0xff]
      %v4235 = vld [vmem:[#allocation5 + $0x8] sm:$0xff]
      %v4236 = vld [vmem:[#allocation5 + $0x10] sm:$0xff]
      %v4237 = vld [vmem:[#allocation5 + $0x18] sm:$0xff]
      %v4238 = vld [vmem:[#allocation5 + $0x20] sm:$0xff]
      %v4239 = vld [vmem:[#allocation5 + $0x28] sm:$0xff]
      %v4240 = vld [vmem:[#allocation5 + $0x30] sm:$0xff]
      %v4241 = vld [vmem:[#allocation5 + $0x38] sm:$0xff]
      %v4242 = vld [vmem:[#allocation5 + $0x40] sm:$0xff]
      %v4243 = vld [vmem:[#allocation5 + $0x48] sm:$0xff]
      %v4244 = vld [vmem:[#allocation5 + $0x50] sm:$0xff]
      %v4245 = vld [vmem:[#allocation5 + $0x58] sm:$0xff]
      %v4246 = vld [vmem:[#allocation5 + $0x60] sm:$0xff]
      %v4247 = vld [vmem:[#allocation5 + $0x68] sm:$0xff]
      %v4248 = vld [vmem:[#allocation5 + $0x70] sm:$0xff]
      %v4249 = vld [vmem:[#allocation5 + $0x78] sm:$0xff]
      %v4250 = vld [vmem:[%s7] sm:$0xff]
      %v4251 = vld [vmem:[%s7 + $0x8] sm:$0xff]
      %v4252 = vld [vmem:[%s7 + $0x10] sm:$0xff]
      %v4253 = vld [vmem:[%s7 + $0x18] sm:$0xff]
      %v4254 = vld [vmem:[%s8] sm:$0x1]
      %v4256 = vlaneseq
      %v4257 = vshrl.u32 %v4256, 7
      %v4258 = vsub.s32 0, %v4257
      %v4259 = vrot.slane %v4254, %v4258
      %vm4261 = vcmask 261120
      %v4263 = vsel %vm4261, %v4234, 0
      %v4266 = vsel %vm4261, %v4235, 0
      %v4269 = vsel %vm4261, %v4236, 0
      %v4272 = vsel %vm4261, %v4237, 0
      %v4275 = vsel %vm4261, %v4238, 0
      %v4278 = vsel %vm4261, %v4239, 0
      %v4281 = vsel %vm4261, %v4240, 0
      %v4284 = vsel %vm4261, %v4241, 0
      %v4287 = vsel %vm4261, %v4242, 0
      %v4290 = vsel %vm4261, %v4243, 0
      %v4293 = vsel %vm4261, %v4244, 0
      %v4296 = vsel %vm4261, %v4245, 0
      %v4299 = vsel %vm4261, %v4246, 0
      %v4302 = vsel %vm4261, %v4247, 0
      %v4305 = vsel %vm4261, %v4248, 0
      %v4308 = vsel %vm4261, %v4249, 0
      %4310 = vmatprep.subr.mxu0 0.0
      %4311 = vmatpush1.msra.mxu0 %v4250
      %4312 = vmatprep.subr.mxu0 0.0
      %4313 = vmatpush1.msra.mxu0 %v4251
      %4314 = vmatprep.subr.mxu0 0.0
      %4315 = vmatpush1.msra.mxu0 %v4252
      %4316 = vmatprep.subr.mxu0 0.0
      %4317 = vmatpush1.msra.mxu0 %v4253
      %4318 = vmatprep.subr.mxu0 0.0
      %4319 = vmatpush1.msra.mxu0 0.0
      %4320 = vmatprep.subr.mxu0 0.0
      %4321 = vmatpush1.msra.mxu0 0.0
      %4322 = vmatprep.subr.mxu0 0.0
      %4323 = vmatpush1.msra.mxu0 0.0
      %4324 = vmatprep.subr.mxu0 0.0
      %4325 = vmatpush1.msra.mxu0 0.0
      %4326 = vmatprep.subr.mxu0 0.0
      %4327 = vmatpush1.msra.mxu0 0.0
      %4328 = vmatprep.subr.mxu0 0.0
      %4329 = vmatpush1.msra.mxu0 0.0
      %4330 = vmatprep.subr.mxu0 0.0
      %4331 = vmatpush1.msra.mxu0 0.0
      %4332 = vmatprep.subr.mxu0 0.0
      %4333 = vmatpush1.msra.mxu0 0.0
      %4334 = vmatprep.subr.mxu0 0.0
      %4335 = vmatpush1.msra.mxu0 0.0
      %4336 = vmatprep.subr.mxu0 0.0
      %4337 = vmatpush1.msra.mxu0 0.0
      %4338 = vmatprep.subr.mxu0 0.0
      %4339 = vmatpush1.msra.mxu0 0.0
      %4340 = vmatprep.subr.mxu0 0.0
      %4341 = vmatpush1.msra.mxu0 0.0
      %4342 = vmatprep.subr.mxu0 0.0
      %4343 = vmatpush1.msra.mxu0 0.0
      %4344 = vmatprep.subr.mxu0 0.0
      %4345 = vmatpush1.msra.mxu0 0.0
      %4346 = vmatprep.subr.mxu0 0.0
      %4347 = vmatpush1.msra.mxu0 0.0
      %4348 = vmatprep.subr.mxu0 0.0
      %4349 = vmatpush1.msra.mxu0 0.0
      %4350 = vmatprep.subr.mxu0 0.0
      %4351 = vmatpush1.msra.mxu0 0.0
      %4352 = vmatprep.subr.mxu0 0.0
      %4353 = vmatpush1.msra.mxu0 0.0
      %4354 = vmatprep.subr.mxu0 0.0
      %4355 = vmatpush1.msra.mxu0 0.0
      %4356 = vmatprep.subr.mxu0 0.0
      %4357 = vmatpush1.msra.mxu0 0.0
      %4358 = vmatprep.subr.mxu0 0.0
      %4359 = vmatpush1.msra.mxu0 0.0
      %4360 = vmatprep.subr.mxu0 0.0
      %4361 = vmatpush1.msra.mxu0 0.0
      %4362 = vmatprep.subr.mxu0 0.0
      %4363 = vmatpush1.msra.mxu0 0.0
      %4364 = vmatprep.subr.mxu0 0.0
      %4365 = vmatpush1.msra.mxu0 0.0
      %4366 = vmatprep.subr.mxu0 0.0
      %4367 = vmatpush1.msra.mxu0 0.0
      %4368 = vmatprep.subr.mxu0 0.0
      %4369 = vmatpush1.msra.mxu0 0.0
      %4370 = vmatprep.subr.mxu0 0.0
      %4371 = vmatpush1.msra.mxu0 0.0
      %4372 = vmatprep.subr.mxu0 0.0
      %4373 = vmatpush1.msra.mxu0 0.0
      %4374 = vmatprep.mubr.f32.mxu0 0.0
      %4375 = vmatmul.mubr.f32.gmra.mrb[0].mxu0 %v4263
      %v4376 = vpop.f32.mrb[0].mxu0
      %v4377 = vadd.f32 %v4259, %v4376
      %v4378 = vpop.f32.mrb[0].mxu0
      %4379 = vmatprep.mubr.f32.mxu0 0.0
      %4380 = vmatmul.mubr.f32.gmra.mrb[0].mxu0 %v4266
      %v4381 = vpop.f32.mrb[0].mxu0
      %v4382 = vadd.f32 %v4259, %v4381
      %v4383 = vpop.f32.mrb[0].mxu0
      %4384 = vmatprep.mubr.f32.mxu0 0.0
      %4385 = vmatmul.mubr.f32.gmra.mrb[0].mxu0 %v4269
      %v4386 = vpop.f32.mrb[0].mxu0
      %v4387 = vadd.f32 %v4259, %v4386
      %v4388 = vpop.f32.mrb[0].mxu0
      %4389 = vmatprep.mubr.f32.mxu0 0.0
      %4390 = vmatmul.mubr.f32.gmra.mrb[0].mxu0 %v4272
      %v4391 = vpop.f32.mrb[0].mxu0
      %v4392 = vadd.f32 %v4259, %v4391
      %v4393 = vpop.f32.mrb[0].mxu0
      %4394 = vmatprep.mubr.f32.mxu0 0.0
      %4395 = vmatmul.mubr.f32.gmra.mrb[0].mxu0 %v4275
      %v4396 = vpop.f32.mrb[0].mxu0
      %v4397 = vadd.f32 %v4259, %v4396
      %v4398 = vpop.f32.mrb[0].mxu0
      %4399 = vmatprep.mubr.f32.mxu0 0.0
      %4400 = vmatmul.mubr.f32.gmra.mrb[0].mxu0 %v4278
      %v4401 = vpop.f32.mrb[0].mxu0
      %v4402 = vadd.f32 %v4259, %v4401
      %v4403 = vpop.f32.mrb[0].mxu0
      %4404 = vmatprep.mubr.f32.mxu0 0.0
      %4405 = vmatmul.mubr.f32.gmra.mrb[0].mxu0 %v4281
      %v4406 = vpop.f32.mrb[0].mxu0
      %v4407 = vadd.f32 %v4259, %v4406
      %v4408 = vpop.f32.mrb[0].mxu0
      %4409 = vmatprep.mubr.f32.mxu0 0.0
      %4410 = vmatmul.mubr.f32.gmra.mrb[0].mxu0 %v4284
      %v4411 = vpop.f32.mrb[0].mxu0
      %v4412 = vadd.f32 %v4259, %v4411
      %v4413 = vpop.f32.mrb[0].mxu0
      %4414 = vmatprep.mubr.f32.mxu0 0.0
      %4415 = vmatmul.mubr.f32.gmra.mrb[0].mxu0 %v4287
      %v4416 = vpop.f32.mrb[0].mxu0
      %v4417 = vadd.f32 %v4259, %v4416
      %v4418 = vpop.f32.mrb[0].mxu0
      %4419 = vmatprep.mubr.f32.mxu0 0.0
      %4420 = vmatmul.mubr.f32.gmra.mrb[0].mxu0 %v4290
      %v4421 = vpop.f32.mrb[0].mxu0
      %v4422 = vadd.f32 %v4259, %v4421
      %v4423 = vpop.f32.mrb[0].mxu0
      %4424 = vmatprep.mubr.f32.mxu0 0.0
      %4425 = vmatmul.mubr.f32.gmra.mrb[0].mxu0 %v4293
      %v4426 = vpop.f32.mrb[0].mxu0
      %v4427 = vadd.f32 %v4259, %v4426
      %v4428 = vpop.f32.mrb[0].mxu0
      %4429 = vmatprep.mubr.f32.mxu0 0.0
      %4430 = vmatmul.mubr.f32.gmra.mrb[0].mxu0 %v4296
      %v4431 = vpop.f32.mrb[0].mxu0
      %v4432 = vadd.f32 %v4259, %v4431
      %v4433 = vpop.f32.mrb[0].mxu0
      %4434 = vmatprep.mubr.f32.mxu0 0.0
      %4435 = vmatmul.mubr.f32.gmra.mrb[0].mxu0 %v4299
      %v4436 = vpop.f32.mrb[0].mxu0
      %v4437 = vadd.f32 %v4259, %v4436
      %v4438 = vpop.f32.mrb[0].mxu0
      %4439 = vmatprep.mubr.f32.mxu0 0.0
      %4440 = vmatmul.mubr.f32.gmra.mrb[0].mxu0 %v4302
      %v4441 = vpop.f32.mrb[0].mxu0
      %v4442 = vadd.f32 %v4259, %v4441
      %v4443 = vpop.f32.mrb[0].mxu0
      %4444 = vmatprep.mubr.f32.mxu0 0.0
      %4445 = vmatmul.mubr.f32.gmra.mrb[0].mxu0 %v4305
      %v4446 = vpop.f32.mrb[0].mxu0
      %v4447 = vadd.f32 %v4259, %v4446
      %v4448 = vpop.f32.mrb[0].mxu0
      %4449 = vmatprep.mubr.f32.mxu0 0.0
      %4450 = vmatmul.mubr.f32.gmra.mrb[0].mxu0 %v4308
      %v4451 = vpop.f32.mrb[0].mxu0
      %v4452 = vadd.f32 %v4259, %v4451
      %v4453 = vpop.f32.mrb[0].mxu0
      %4454 = vdwg.mxu0
      %4455 = vst.msk [vmem:[%s354] sm:$0xff] %vm4261, %v4377
      %4456 = vst.msk [vmem:[%s354 + $0x8] sm:$0xff] %vm4261, %v4382
      %4457 = vst.msk [vmem:[%s354 + $0x10] sm:$0xff] %vm4261, %v4387
      %4458 = vst.msk [vmem:[%s354 + $0x18] sm:$0xff] %vm4261, %v4392
      %4459 = vst.msk [vmem:[%s354 + $0x20] sm:$0xff] %vm4261, %v4397
      %4460 = vst.msk [vmem:[%s354 + $0x28] sm:$0xff] %vm4261, %v4402
      %4461 = vst.msk [vmem:[%s354 + $0x30] sm:$0xff] %vm4261, %v4407
      %4462 = vst.msk [vmem:[%s354 + $0x38] sm:$0xff] %vm4261, %v4412
      %4463 = vst.msk [vmem:[%s354 + $0x40] sm:$0xff] %vm4261, %v4417
      %4464 = vst.msk [vmem:[%s354 + $0x48] sm:$0xff] %vm4261, %v4422
      %4465 = vst.msk [vmem:[%s354 + $0x50] sm:$0xff] %vm4261, %v4427
      %4466 = vst.msk [vmem:[%s354 + $0x58] sm:$0xff] %vm4261, %v4432
      %4467 = vst.msk [vmem:[%s354 + $0x60] sm:$0xff] %vm4261, %v4437
      %4468 = vst.msk [vmem:[%s354 + $0x68] sm:$0xff] %vm4261, %v4442
      %4469 = vst.msk [vmem:[%s354 + $0x70] sm:$0xff] %vm4261, %v4447
      %4470 = vst.msk [vmem:[%s354 + $0x78] sm:$0xff] %vm4261, %v4452
      %s4471 = smul.u32 16, %s25
      %p4472 = scmp.lt.s32.totalorder %s24, 1
      %s4473 = scalar_select %p4472, %s24, 1
      %p4474 = scmp.lt.s32.totalorder %s4471, 15
      %s4475 = scalar_select %p4474, %s4471, 15
      %s4476 = smul.addr %s4473, 16
      %s4477 = sadd.s32 %s4475, %s4476
      %s4478 = smul.addr %s4477, 8
      %s4479 = scalar_lea.vmem %s9, %s4478
      // Predicated region
      $region61: #{tpu_custom_call.1} parent=55 // pred_check
        %p4480 = pneg %p246
      $region62: #{tpu_custom_call.1} parent=55 // pred_check_branch
        %4482 = sbr.rel (%p4480) target = $region64
      $region63: #{tpu_custom_call.1} parent=55 // pred_region
        %s4483 = smul.u32 16, %s25
      $region64: #{tpu_custom_call.1} parent=55 // pred_fallthru
        _
    $region56: #{tpu_custom_call.1} parent=5 // pred_fallthru
      _
    %p4484 = scmp.le.s32.totalorder 2, %s15
    // Predicated region
    $region65: #{tpu_custom_call.1} parent=5 // pred_check
      %p4485 = pneg %p4484
    $region66: #{tpu_custom_call.1} parent=5 // pred_check_branch
      %4487 = sbr.rel (%p4485) target = $region68
    $region67: #{tpu_custom_call.1} parent=5 // pred_region
      %s4488 = ssub.s32 %s15, 2
      // Predicated region
      $region69: #{tpu_custom_call.1} parent=67 // pred_check
        %p4489 = pneg %p252
      $region70: #{tpu_custom_call.1} parent=67 // pred_check_branch
        %4491 = sbr.rel (%p4489) target = $region72
      $region71: #{tpu_custom_call.1} parent=67 // pred_region
        %s4492 = smul.u32 16, %s27
        %p4493 = scmp.lt.s32.totalorder %s26, 1
        %s4494 = scalar_select %p4493, %s26, 1
        %p4495 = scmp.lt.s32.totalorder %s4492, 15
        %s4496 = scalar_select %p4495, %s4492, 15
        %s4497 = smul.addr %s4494, 16
        %s4498 = sadd.s32 %s4496, %s4497
        %s4499 = smul.addr %s4498, 8
        %s4500 = scalar_lea.vmem %s9, %s4499
      $region72: #{tpu_custom_call.1} parent=67 // pred_fallthru
        _
    $region68: #{tpu_custom_call.1} parent=5 // pred_fallthru
      _
  $region6: #{tpu_custom_call.1} parent=0 // loop_footer
    %s19 = sadd.s32 1, %s15
  $region7: #{tpu_custom_call.1} parent=0 // loop_footer_branch
    %14 = sbr.rel target = $region3
  $region8: #{tpu_custom_call.1} parent=0 // loop_exit
    _

</llo_original>
